<compile_context>
chip_gen: v7x
topology: tpu7x:2x2x1
jax: 0.10.0
libtpu: 0.0.40
codegen_flags: <defaults>
</compile_context>

<pallas_src>
import functools
import math

import jax
import jax.numpy as jnp
from jax.experimental import pallas as pl
from jax.experimental.pallas import tpu as pltpu

# ---------------- small synthetic "BERT" config ----------------
VOCAB = 50
TYPE_VOCAB = 2
MAX_POS = 16
HIDDEN = 32
N_HEADS = 4
HEAD_DIM = HIDDEN // N_HEADS
INTERMEDIATE = 64
N_LAYERS = 2
LN_EPS = 1e-12
DROPOUT = 0.1                 # eval-mode forward -> dropout is identity
MXU_DTYPE = jnp.bfloat16      # matmul operand dtype (f32 accumulation)


# ---------------- in-kernel helpers (value math, stays in VMEM/vregs) ----------------
def _ln(x, g, b):
    mu = jnp.mean(x, axis=-1, keepdims=True)
    d = x - mu
    var = jnp.mean(d * d, axis=-1, keepdims=True)
    return d * jax.lax.rsqrt(var + LN_EPS) * g + b


def _dot(a, w):
    # one f32->bf16 cast per activation operand, f32 accumulation on the MXU
    return jnp.dot(a.astype(MXU_DTYPE), w.astype(MXU_DTYPE),
                   preferred_element_type=jnp.float32)


def _masked_mean(x_flat, m_flat, batch, seq):
    # x_flat: (Bb*S, H), m_flat: (Bb*S, 1)  ->  (Bb, H)
    num = jnp.sum((x_flat * m_flat).reshape(batch, seq, HIDDEN), axis=1)
    den = jnp.sum(m_flat.reshape(batch, seq), axis=-1, keepdims=True)
    return num / jnp.maximum(den, 1.0)


# ---------------- the fused kernel (one batch-block per grid step) ----------------
def _simcse_kernel(e_ref, mflat_ref,
                   emb_g_ref, emb_b_ref,
                   wqkv_ref, bqkv_ref, wo_ref, bo_ref, ln1g_ref, ln1b_ref,
                   wi_ref, bi_ref, wo2_ref, bo2_ref, ln2g_ref, ln2b_ref,
                   pw_ref, pb_ref,
                   out_ref, *, pooling, batch, seq):
    # `batch` here is the per-block batch (batch_block); rows = batch*seq.
    h = _ln(e_ref[...], emb_g_ref[...], emb_b_ref[...])          # (Bb*S, H) f32
    mflat = mflat_ref[...]                                        # (Bb*S, 1) f32

    # additive key mask, hoisted once per block: (Bb*nh, 1, S)
    neg = (1.0 - mflat.reshape(batch, seq)) * -10000.0            # (Bb, S)
    mask_bias = jnp.broadcast_to(
        neg[:, None, None, :], (batch, N_HEADS, 1, seq)
    ).reshape(batch * N_HEADS, 1, seq)

    first_h = None
    for l in range(N_LAYERS):                                     # static unroll
        # ---- self-attention: one fused QKV matmul, all heads batched ----
        # 1/sqrt(head_dim) is pre-folded into the Q columns of wqkv / bqkv.
        qkv = _dot(h, wqkv_ref[l]) + bqkv_ref[l]                  # (Bb*S, 3H) f32
        qkv = qkv.reshape(batch, seq, 3 * N_HEADS, HEAD_DIM)
        qkv = jnp.swapaxes(qkv, 1, 2).astype(MXU_DTYPE)           # (Bb, 3*nh, S, dh) bf16 (single cast)
        q = qkv[:, :N_HEADS].reshape(batch * N_HEADS, seq, HEAD_DIM)
        k = qkv[:, N_HEADS:2 * N_HEADS].reshape(batch * N_HEADS, seq, HEAD_DIM)
        v = qkv[:, 2 * N_HEADS:].reshape(batch * N_HEADS, seq, HEAD_DIM)

        s = jnp.einsum("bqd,bkd->bqk", q, k,
                       preferred_element_type=jnp.float32)        # (Bb*nh, S, S) f32
        s = s + mask_bias
        s = s - jnp.max(s, axis=-1, keepdims=True)
        p = jnp.exp(s)
        p = p * pl.reciprocal(jnp.sum(p, axis=-1, keepdims=True), approx=True)
        ctx = jnp.einsum("bqk,bkd->bqd", p.astype(MXU_DTYPE), v,
                         preferred_element_type=jnp.float32)      # (Bb*nh, S, dh) f32
        ctx = ctx.reshape(batch, N_HEADS, seq, HEAD_DIM)
        ctx = jnp.swapaxes(ctx, 1, 2).reshape(batch * seq, HIDDEN)

        attn_out = _dot(ctx, wo_ref[l]) + bo_ref[l]
        h = _ln(attn_out + h, ln1g_ref[l], ln1b_ref[l])

        # ---- feed-forward (tanh-approx GELU, numerically ~= BERT's erf GELU) ----
        inter = jax.nn.gelu(_dot(h, wi_ref[l]) + bi_ref[l], approximate=True)
        ffn = _dot(inter, wo2_ref[l]) + bo2_ref[l]
        h = _ln(ffn + h, ln2g_ref[l], ln2b_ref[l])

        if pooling == "first-last-avg" and l == 0:
            first_h = h                                           # == hidden_states[1]

    # pooling: the (Bb, S, H) view is only formed here, for the branch taken.
    if pooling == "cls":
        pooled = h.reshape(batch, seq, HIDDEN)[:, 0, :]
    elif pooling == "pooler":
        cls = h.reshape(batch, seq, HIDDEN)[:, 0, :]
        pooled = jnp.tanh(_dot(cls, pw_ref[...]) + pb_ref[...])
    elif pooling == "last-avg":
        pooled = _masked_mean(h, mflat, batch, seq)
    elif pooling == "first-last-avg":
        pooled = _masked_mean((first_h + h) * 0.5, mflat, batch, seq)
    else:
        raise ValueError(f"unknown pooling: {pooling}")

    out_ref[...] = pooled.reshape(1, batch, HIDDEN)


# ---------------- params ----------------
def init_params(key):
    def nrm(k, shape, scale=0.02):
        return scale * jax.random.normal(k, shape, dtype=jnp.float32)

    keys = iter(jax.random.split(key, 64))
    L, H, I = N_LAYERS, HIDDEN, INTERMEDIATE
    attn_scale = 1.0 / math.sqrt(HEAD_DIM)

    # [Wq | Wk | Wv] fused; fold the attention scale into the Q projection
    # (weight AND bias) so the kernel never multiplies the score tensor.
    wqkv = nrm(next(keys), (L, H, 3 * H))
    wqkv = wqkv.at[:, :, :H].multiply(attn_scale)
    bqkv = jnp.zeros((L, 1, 3 * H), jnp.float32)
    bqkv = bqkv.at[:, :, :H].multiply(attn_scale)

    return {
        "word_emb": nrm(next(keys), (VOCAB, H)),
        "pos_emb": nrm(next(keys), (MAX_POS, H)),
        "tok_emb": nrm(next(keys), (TYPE_VOCAB, H)),
        "emb_ln_g": jnp.ones((1, H), jnp.float32),
        "emb_ln_b": jnp.zeros((1, H), jnp.float32),
        # matmul weights stored in the MXU operand dtype (bf16); biases/LN stay f32.
        # (note: bf16 storage is a persistent quantization; keep f32 masters if
        #  bit-parity with a torch f32 model is required.)
        "wqkv": wqkv.astype(MXU_DTYPE),
        "bqkv": bqkv,
        "wo": nrm(next(keys), (L, H, H)).astype(MXU_DTYPE),
        "bo": jnp.zeros((L, 1, H), jnp.float32),
        "ln1_g": jnp.ones((L, 1, H), jnp.float32),
        "ln1_b": jnp.zeros((L, 1, H), jnp.float32),
        "wi": nrm(next(keys), (L, H, I)).astype(MXU_DTYPE),
        "bi": jnp.zeros((L, 1, I), jnp.float32),
        "wo2": nrm(next(keys), (L, I, H)).astype(MXU_DTYPE),
        "bo2": jnp.zeros((L, 1, H), jnp.float32),
        "ln2_g": jnp.ones((L, 1, H), jnp.float32),
        "ln2_b": jnp.zeros((L, 1, H), jnp.float32),
        "pool_w": nrm(next(keys), (H, H)).astype(MXU_DTYPE),
        "pool_b": jnp.zeros((1, H), jnp.float32),
    }


def _full_vmem_spec(arr):
    nd = arr.ndim
    return pl.BlockSpec(arr.shape, lambda i, _nd=nd: (0,) * _nd)


# ---------------- forward (thin wrapper; one pallas_call) ----------------
@functools.partial(jax.jit, static_argnames=("pooling", "batch_block"))
def simcse_forward(params, input_ids, attention_mask, token_type_ids, pooling,
                   batch_block=None):
    b, s = input_ids.shape
    if batch_block is None:
        # split the batch into (up to) two independent blocks -> both TCs on v7x
        batch_block = b // 2 if (b % 2 == 0 and b >= 2) else b
    assert b % batch_block == 0
    n_blocks = b // batch_block

    # Embedding-table gathers stay in XLA (data-dependent gather; cheap, one op each).
    # TODO(synk): at BERT-base scale, move the gather in-kernel via scalar-prefetched
    #             ids + manual DMA row gather to avoid the HBM round-trip of `e`.
    e = (jnp.take(params["word_emb"], input_ids, axis=0)
         + jnp.take(params["tok_emb"], token_type_ids, axis=0)
         + params["pos_emb"][None, :s, :]).reshape(b * s, HIDDEN)
    mflat = attention_mask.astype(jnp.float32).reshape(b * s, 1)

    kernel = functools.partial(_simcse_kernel, pooling=pooling,
                               batch=batch_block, seq=s)

    weight_names = ("emb_ln_g", "emb_ln_b",
                    "wqkv", "bqkv", "wo", "bo", "ln1_g", "ln1_b",
                    "wi", "bi", "wo2", "bo2", "ln2_g", "ln2_b",
                    "pool_w", "pool_b")
    weights = [params[n] for n in weight_names]

    out = pl.pallas_call(
        kernel,
        out_shape=jax.ShapeDtypeStruct((n_blocks, batch_block, HIDDEN), jnp.float32),
        grid=(n_blocks,),
        in_specs=[pl.BlockSpec((batch_block * s, HIDDEN), lambda i: (i, 0)),   # e
                  pl.BlockSpec((batch_block * s, 1), lambda i: (i, 0))]        # mask
                 + [_full_vmem_spec(w) for w in weights],
        out_specs=pl.BlockSpec((1, batch_block, HIDDEN), lambda i: (i, 0, 0)),
        compiler_params=pltpu.CompilerParams(
            dimension_semantics=("parallel",),
            vmem_limit_bytes=32 * 1024 * 1024),
    )(e, mflat, *weights)

    return out.reshape(b, HIDDEN)


if __name__ == "__main__":
    key = jax.random.PRNGKey(0)
    pkey, ikey = jax.random.split(key)
    params = init_params(pkey)

    B, S = 2, 8
    input_ids = jax.random.randint(ikey, (B, S), 0, VOCAB, dtype=jnp.int32)
    attention_mask = jnp.array([[1, 1, 1, 1, 1, 1, 1, 1],
                                [1, 1, 1, 1, 1, 1, 0, 0]], dtype=jnp.int32)
    token_type_ids = jnp.zeros((B, S), dtype=jnp.int32)

    for pooling in ("cls", "pooler", "last-avg", "first-last-avg"):
        out = simcse_forward(params, input_ids, attention_mask, token_type_ids,
                             pooling=pooling)
        out = jax.block_until_ready(out)
        assert out.shape == (B, HIDDEN), (pooling, out.shape)
        assert bool(jnp.all(jnp.isfinite(out))), pooling

    print("KERNEL_OK")
</pallas_src>

<mosaic_0001>
module attributes {stable_mosaic.version = 11 : i64} {
  func.func @_simcse_kernel(%arg0: i32, %arg1: memref<8x32xf32, #tpu.memory_space<vmem>>, %arg2: memref<8x1xf32, #tpu.memory_space<vmem>>, %arg3: memref<1x32xf32, #tpu.memory_space<vmem>>, %arg4: memref<1x32xf32, #tpu.memory_space<vmem>>, %arg5: memref<2x32x96xbf16, #tpu.memory_space<vmem>>, %arg6: memref<2x1x96xf32, #tpu.memory_space<vmem>>, %arg7: memref<2x32x32xbf16, #tpu.memory_space<vmem>>, %arg8: memref<2x1x32xf32, #tpu.memory_space<vmem>>, %arg9: memref<2x1x32xf32, #tpu.memory_space<vmem>>, %arg10: memref<2x1x32xf32, #tpu.memory_space<vmem>>, %arg11: memref<2x32x64xbf16, #tpu.memory_space<vmem>>, %arg12: memref<2x1x64xf32, #tpu.memory_space<vmem>>, %arg13: memref<2x64x32xbf16, #tpu.memory_space<vmem>>, %arg14: memref<2x1x32xf32, #tpu.memory_space<vmem>>, %arg15: memref<2x1x32xf32, #tpu.memory_space<vmem>>, %arg16: memref<2x1x32xf32, #tpu.memory_space<vmem>>, %arg17: memref<32x32xbf16, #tpu.memory_space<vmem>>, %arg18: memref<1x32xf32, #tpu.memory_space<vmem>>, %arg19: memref<1x1x32xf32, #tpu.memory_space<vmem>>) attributes {dimension_semantics = [#tpu.dimension_semantics<parallel>], iteration_bounds = array<i64: 2>, scalar_prefetch = 0 : i64, scratch_operands = 0 : i64, tpu.core_type = #tpu.core_type<tc>, window_params = [{transform_indices = @transform_0, window_bounds = array<i64: 8, 32>}, {transform_indices = @transform_1, window_bounds = array<i64: 8, 1>}, {pipeline_mode = #tpu.pipeline_mode<synchronous>, transform_indices = @transform_2, window_bounds = array<i64: 1, 32>}, {pipeline_mode = #tpu.pipeline_mode<synchronous>, transform_indices = @transform_3, window_bounds = array<i64: 1, 32>}, {pipeline_mode = #tpu.pipeline_mode<synchronous>, transform_indices = @transform_4, window_bounds = array<i64: 2, 32, 96>}, {pipeline_mode = #tpu.pipeline_mode<synchronous>, transform_indices = @transform_5, window_bounds = array<i64: 2, 1, 96>}, {pipeline_mode = #tpu.pipeline_mode<synchronous>, transform_indices = @transform_6, window_bounds = array<i64: 2, 32, 32>}, {pipeline_mode = #tpu.pipeline_mode<synchronous>, transform_indices = @transform_7, window_bounds = array<i64: 2, 1, 32>}, {pipeline_mode = #tpu.pipeline_mode<synchronous>, transform_indices = @transform_8, window_bounds = array<i64: 2, 1, 32>}, {pipeline_mode = #tpu.pipeline_mode<synchronous>, transform_indices = @transform_9, window_bounds = array<i64: 2, 1, 32>}, {pipeline_mode = #tpu.pipeline_mode<synchronous>, transform_indices = @transform_10, window_bounds = array<i64: 2, 32, 64>}, {pipeline_mode = #tpu.pipeline_mode<synchronous>, transform_indices = @transform_11, window_bounds = array<i64: 2, 1, 64>}, {pipeline_mode = #tpu.pipeline_mode<synchronous>, transform_indices = @transform_12, window_bounds = array<i64: 2, 64, 32>}, {pipeline_mode = #tpu.pipeline_mode<synchronous>, transform_indices = @transform_13, window_bounds = array<i64: 2, 1, 32>}, {pipeline_mode = #tpu.pipeline_mode<synchronous>, transform_indices = @transform_14, window_bounds = array<i64: 2, 1, 32>}, {pipeline_mode = #tpu.pipeline_mode<synchronous>, transform_indices = @transform_15, window_bounds = array<i64: 2, 1, 32>}, {pipeline_mode = #tpu.pipeline_mode<synchronous>, transform_indices = @transform_16, window_bounds = array<i64: 32, 32>}, {pipeline_mode = #tpu.pipeline_mode<synchronous>, transform_indices = @transform_17, window_bounds = array<i64: 1, 32>}, {transform_indices = @transform_18, window_bounds = array<i64: 1, 1, 32>}]} {
    %c0 = arith.constant 0 : index
    %c0_0 = arith.constant 0 : index
    %0 = vector.load %arg1[%c0, %c0_0] : memref<8x32xf32, #tpu.memory_space<vmem>>, vector<8x32xf32>
    %c0_1 = arith.constant 0 : index
    %c0_2 = arith.constant 0 : index
    %1 = vector.load %arg3[%c0_1, %c0_2] : memref<1x32xf32, #tpu.memory_space<vmem>>, vector<1x32xf32>
    %c0_3 = arith.constant 0 : index
    %c0_4 = arith.constant 0 : index
    %2 = vector.load %arg4[%c0_3, %c0_4] : memref<1x32xf32, #tpu.memory_space<vmem>>, vector<1x32xf32>
    %cst = arith.constant dense<0.000000e+00> : vector<8xf32>
    %3 = vector.multi_reduction <add>, %0, %cst [1] : vector<8x32xf32> to vector<8xf32>
    %4 = vector.shape_cast %3 : vector<8xf32> to vector<8x1xf32>
    %cst_5 = arith.constant 3.200000e+01 : f32
    %5 = vector.broadcast %cst_5 : f32 to vector<8x1xf32>
    %6 = arith.divf %4, %5 : vector<8x1xf32>
    %7 = vector.broadcast %6 : vector<8x1xf32> to vector<8x32xf32>
    %8 = arith.subf %0, %7 : vector<8x32xf32>
    %9 = arith.mulf %8, %8 : vector<8x32xf32>
    %cst_6 = arith.constant dense<0.000000e+00> : vector<8xf32>
    %10 = vector.multi_reduction <add>, %9, %cst_6 [1] : vector<8x32xf32> to vector<8xf32>
    %11 = vector.shape_cast %10 : vector<8xf32> to vector<8x1xf32>
    %cst_7 = arith.constant 3.200000e+01 : f32
    %12 = vector.broadcast %cst_7 : f32 to vector<8x1xf32>
    %13 = arith.divf %11, %12 : vector<8x1xf32>
    %cst_8 = arith.constant 9.99999996E-13 : f32
    %14 = vector.broadcast %cst_8 : f32 to vector<8x1xf32>
    %15 = arith.addf %13, %14 : vector<8x1xf32>
    %16 = math.rsqrt %15 : vector<8x1xf32>
    %17 = vector.broadcast %16 : vector<8x1xf32> to vector<8x32xf32>
    %18 = arith.mulf %8, %17 : vector<8x32xf32>
    %19 = vector.broadcast %1 : vector<1x32xf32> to vector<8x32xf32>
    %20 = arith.mulf %18, %19 : vector<8x32xf32>
    %21 = vector.broadcast %2 : vector<1x32xf32> to vector<8x32xf32>
    %22 = arith.addf %20, %21 : vector<8x32xf32>
    %c0_9 = arith.constant 0 : index
    %c0_10 = arith.constant 0 : index
    %23 = vector.load %arg2[%c0_9, %c0_10] : memref<8x1xf32, #tpu.memory_space<vmem>>, vector<8x1xf32>
    %24 = vector.shape_cast %23 : vector<8x1xf32> to vector<1x8xf32>
    %cst_11 = arith.constant 1.000000e+00 : f32
    %25 = vector.broadcast %cst_11 : f32 to vector<1x8xf32>
    %26 = arith.subf %25, %24 : vector<1x8xf32>
    %cst_12 = arith.constant -1.000000e+04 : f32
    %27 = vector.broadcast %cst_12 : f32 to vector<1x8xf32>
    %28 = arith.mulf %26, %27 : vector<1x8xf32>
    %29 = vector.shape_cast %28 : vector<1x8xf32> to vector<1x1x1x8xf32>
    %30 = vector.shape_cast %29 : vector<1x1x1x8xf32> to vector<1x1x1x8xf32>
    %31 = vector.broadcast %30 : vector<1x1x1x8xf32> to vector<1x4x1x8xf32>
    %32 = vector.shape_cast %31 : vector<1x4x1x8xf32> to vector<4x1x8xf32>
    %c0_13 = arith.constant 0 : index
    %c0_14 = arith.constant 0 : index
    %c0_15 = arith.constant 0 : index
    %33 = vector.load %arg5[%c0_13, %c0_14, %c0_15] : memref<2x32x96xbf16, #tpu.memory_space<vmem>>, vector<1x32x96xbf16>
    %34 = vector.shape_cast %33 : vector<1x32x96xbf16> to vector<32x96xbf16>
    %35 = arith.truncf %22 : vector<8x32xf32> to vector<8x32xbf16>
    %cst_16 = arith.constant dense<0.000000e+00> : vector<8x96xf32>
    %36 = tpu.matmul %35, %34, %cst_16 {dimension_numbers = #tpu.dot_dimension_numbers<[1], [0], [0], [1], [0, 0, 1, 1], [], []>} : vector<8x32xbf16>, vector<32x96xbf16>, vector<8x96xf32> -> vector<8x96xf32>
    %c0_17 = arith.constant 0 : index
    %c0_18 = arith.constant 0 : index
    %c0_19 = arith.constant 0 : index
    %37 = vector.load %arg6[%c0_17, %c0_18, %c0_19] : memref<2x1x96xf32, #tpu.memory_space<vmem>>, vector<1x1x96xf32>
    %38 = vector.shape_cast %37 : vector<1x1x96xf32> to vector<1x96xf32>
    %39 = vector.broadcast %38 : vector<1x96xf32> to vector<8x96xf32>
    %40 = arith.addf %36, %39 : vector<8x96xf32>
    %41 = vector.shape_cast %40 : vector<8x96xf32> to vector<1x8x12x8xf32>
    %42 = tpu.transpose %41, [0, 2, 1, 3] : vector<1x8x12x8xf32> -> vector<1x12x8x8xf32>
    %43 = arith.truncf %42 : vector<1x12x8x8xf32> to vector<1x12x8x8xbf16>
    %44 = vector.extract_strided_slice %43 {offsets = [0, 0, 0, 0], sizes = [1, 4, 8, 8], strides = [1, 1, 1, 1]} : vector<1x12x8x8xbf16> to vector<1x4x8x8xbf16>
    %45 = vector.shape_cast %44 : vector<1x4x8x8xbf16> to vector<4x8x8xbf16>
    %46 = vector.extract_strided_slice %43 {offsets = [0, 4, 0, 0], sizes = [1, 4, 8, 8], strides = [1, 1, 1, 1]} : vector<1x12x8x8xbf16> to vector<1x4x8x8xbf16>
    %47 = vector.shape_cast %46 : vector<1x4x8x8xbf16> to vector<4x8x8xbf16>
    %48 = vector.extract_strided_slice %43 {offsets = [0, 8, 0, 0], sizes = [1, 4, 8, 8], strides = [1, 1, 1, 1]} : vector<1x12x8x8xbf16> to vector<1x4x8x8xbf16>
    %49 = vector.shape_cast %48 : vector<1x4x8x8xbf16> to vector<4x8x8xbf16>
    "tpu.trace_start"() <{level = 10 : i32, message = "bqd,bkd->bqk"}> : () -> ()
    %cst_20 = arith.constant dense<0.000000e+00> : vector<4x8x8xf32>
    %50 = tpu.matmul %45, %47, %cst_20 {dimension_numbers = #tpu.dot_dimension_numbers<[2], [2], [1], [1], [0, 0, 0, 1, 1, 1], [0], [0]>} : vector<4x8x8xbf16>, vector<4x8x8xbf16>, vector<4x8x8xf32> -> vector<4x8x8xf32>
    "tpu.trace_stop"() : () -> ()
    %51 = vector.broadcast %32 : vector<4x1x8xf32> to vector<4x8x8xf32>
    %52 = arith.addf %50, %51 : vector<4x8x8xf32>
    %cst_21 = arith.constant dense<0xFF800000> : vector<4x8xf32>
    %53 = vector.multi_reduction <maximumf>, %52, %cst_21 [2] : vector<4x8x8xf32> to vector<4x8xf32>
    %54 = vector.shape_cast %53 : vector<4x8xf32> to vector<4x8x1xf32>
    %55 = vector.broadcast %54 : vector<4x8x1xf32> to vector<4x8x8xf32>
    %56 = arith.subf %52, %55 : vector<4x8x8xf32>
    %57 = math.exp %56 : vector<4x8x8xf32>
    %cst_22 = arith.constant dense<0.000000e+00> : vector<4x8xf32>
    %58 = vector.multi_reduction <add>, %57, %cst_22 [2] : vector<4x8x8xf32> to vector<4x8xf32>
    %59 = vector.shape_cast %58 : vector<4x8xf32> to vector<4x8x1xf32>
    %60 = tpu.reciprocal %59 {approx = true} : vector<4x8x1xf32> -> vector<4x8x1xf32>
    %61 = vector.broadcast %60 : vector<4x8x1xf32> to vector<4x8x8xf32>
    %62 = arith.mulf %57, %61 : vector<4x8x8xf32>
    %63 = arith.truncf %62 : vector<4x8x8xf32> to vector<4x8x8xbf16>
    "tpu.trace_start"() <{level = 10 : i32, message = "bqk,bkd->bqd"}> : () -> ()
    %cst_23 = arith.constant dense<0.000000e+00> : vector<4x8x8xf32>
    %64 = tpu.matmul %63, %49, %cst_23 {dimension_numbers = #tpu.dot_dimension_numbers<[2], [1], [1], [2], [0, 0, 0, 1, 1, 2], [0], [0]>} : vector<4x8x8xbf16>, vector<4x8x8xbf16>, vector<4x8x8xf32> -> vector<4x8x8xf32>
    "tpu.trace_stop"() : () -> ()
    %65 = vector.shape_cast %64 : vector<4x8x8xf32> to vector<1x4x8x8xf32>
    %66 = tpu.transpose %65, [0, 2, 1, 3] : vector<1x4x8x8xf32> -> vector<1x8x4x8xf32>
    %67 = vector.shape_cast %66 : vector<1x8x4x8xf32> to vector<8x32xf32>
    %c0_24 = arith.constant 0 : index
    %c0_25 = arith.constant 0 : index
    %c0_26 = arith.constant 0 : index
    %68 = vector.load %arg7[%c0_24, %c0_25, %c0_26] : memref<2x32x32xbf16, #tpu.memory_space<vmem>>, vector<1x32x32xbf16>
    %69 = vector.shape_cast %68 : vector<1x32x32xbf16> to vector<32x32xbf16>
    %70 = arith.truncf %67 : vector<8x32xf32> to vector<8x32xbf16>
    %cst_27 = arith.constant dense<0.000000e+00> : vector<8x32xf32>
    %71 = tpu.matmul %70, %69, %cst_27 {dimension_numbers = #tpu.dot_dimension_numbers<[1], [0], [0], [1], [0, 0, 1, 1], [], []>} : vector<8x32xbf16>, vector<32x32xbf16>, vector<8x32xf32> -> vector<8x32xf32>
    %c0_28 = arith.constant 0 : index
    %c0_29 = arith.constant 0 : index
    %c0_30 = arith.constant 0 : index
    %72 = vector.load %arg8[%c0_28, %c0_29, %c0_30] : memref<2x1x32xf32, #tpu.memory_space<vmem>>, vector<1x1x32xf32>
    %73 = vector.shape_cast %72 : vector<1x1x32xf32> to vector<1x32xf32>
    %74 = vector.broadcast %73 : vector<1x32xf32> to vector<8x32xf32>
    %75 = arith.addf %71, %74 : vector<8x32xf32>
    %76 = arith.addf %75, %22 : vector<8x32xf32>
    %c0_31 = arith.constant 0 : index
    %c0_32 = arith.constant 0 : index
    %c0_33 = arith.constant 0 : index
    %77 = vector.load %arg9[%c0_31, %c0_32, %c0_33] : memref<2x1x32xf32, #tpu.memory_space<vmem>>, vector<1x1x32xf32>
    %78 = vector.shape_cast %77 : vector<1x1x32xf32> to vector<1x32xf32>
    %c0_34 = arith.constant 0 : index
    %c0_35 = arith.constant 0 : index
    %c0_36 = arith.constant 0 : index
    %79 = vector.load %arg10[%c0_34, %c0_35, %c0_36] : memref<2x1x32xf32, #tpu.memory_space<vmem>>, vector<1x1x32xf32>
    %80 = vector.shape_cast %79 : vector<1x1x32xf32> to vector<1x32xf32>
    %cst_37 = arith.constant dense<0.000000e+00> : vector<8xf32>
    %81 = vector.multi_reduction <add>, %76, %cst_37 [1] : vector<8x32xf32> to vector<8xf32>
    %82 = vector.shape_cast %81 : vector<8xf32> to vector<8x1xf32>
    %cst_38 = arith.constant 3.200000e+01 : f32
    %83 = vector.broadcast %cst_38 : f32 to vector<8x1xf32>
    %84 = arith.divf %82, %83 : vector<8x1xf32>
    %85 = vector.broadcast %84 : vector<8x1xf32> to vector<8x32xf32>
    %86 = arith.subf %76, %85 : vector<8x32xf32>
    %87 = arith.mulf %86, %86 : vector<8x32xf32>
    %cst_39 = arith.constant dense<0.000000e+00> : vector<8xf32>
    %88 = vector.multi_reduction <add>, %87, %cst_39 [1] : vector<8x32xf32> to vector<8xf32>
    %89 = vector.shape_cast %88 : vector<8xf32> to vector<8x1xf32>
    %cst_40 = arith.constant 3.200000e+01 : f32
    %90 = vector.broadcast %cst_40 : f32 to vector<8x1xf32>
    %91 = arith.divf %89, %90 : vector<8x1xf32>
    %cst_41 = arith.constant 9.99999996E-13 : f32
    %92 = vector.broadcast %cst_41 : f32 to vector<8x1xf32>
    %93 = arith.addf %91, %92 : vector<8x1xf32>
    %94 = math.rsqrt %93 : vector<8x1xf32>
    %95 = vector.broadcast %94 : vector<8x1xf32> to vector<8x32xf32>
    %96 = arith.mulf %86, %95 : vector<8x32xf32>
    %97 = vector.broadcast %78 : vector<1x32xf32> to vector<8x32xf32>
    %98 = arith.mulf %96, %97 : vector<8x32xf32>
    %99 = vector.broadcast %80 : vector<1x32xf32> to vector<8x32xf32>
    %100 = arith.addf %98, %99 : vector<8x32xf32>
    %c0_42 = arith.constant 0 : index
    %c0_43 = arith.constant 0 : index
    %c0_44 = arith.constant 0 : index
    %101 = vector.load %arg11[%c0_42, %c0_43, %c0_44] : memref<2x32x64xbf16, #tpu.memory_space<vmem>>, vector<1x32x64xbf16>
    %102 = vector.shape_cast %101 : vector<1x32x64xbf16> to vector<32x64xbf16>
    %103 = arith.truncf %100 : vector<8x32xf32> to vector<8x32xbf16>
    %cst_45 = arith.constant dense<0.000000e+00> : vector<8x64xf32>
    %104 = tpu.matmul %103, %102, %cst_45 {dimension_numbers = #tpu.dot_dimension_numbers<[1], [0], [0], [1], [0, 0, 1, 1], [], []>} : vector<8x32xbf16>, vector<32x64xbf16>, vector<8x64xf32> -> vector<8x64xf32>
    %c0_46 = arith.constant 0 : index
    %c0_47 = arith.constant 0 : index
    %c0_48 = arith.constant 0 : index
    %105 = vector.load %arg12[%c0_46, %c0_47, %c0_48] : memref<2x1x64xf32, #tpu.memory_space<vmem>>, vector<1x1x64xf32>
    %106 = vector.shape_cast %105 : vector<1x1x64xf32> to vector<1x64xf32>
    %107 = vector.broadcast %106 : vector<1x64xf32> to vector<8x64xf32>
    %108 = arith.addf %104, %107 : vector<8x64xf32>
    %109 = arith.mulf %108, %108 : vector<8x64xf32>
    %110 = arith.mulf %108, %109 : vector<8x64xf32>
    %cst_49 = arith.constant 4.471500e-02 : f32
    %111 = vector.broadcast %cst_49 : f32 to vector<8x64xf32>
    %112 = arith.mulf %111, %110 : vector<8x64xf32>
    %113 = arith.addf %108, %112 : vector<8x64xf32>
    %cst_50 = arith.constant 0.797884583 : f32
    %114 = vector.broadcast %cst_50 : f32 to vector<8x64xf32>
    %115 = arith.mulf %114, %113 : vector<8x64xf32>
    %116 = math.tanh %115 : vector<8x64xf32>
    %cst_51 = arith.constant 1.000000e+00 : f32
    %117 = vector.broadcast %cst_51 : f32 to vector<8x64xf32>
    %118 = arith.addf %117, %116 : vector<8x64xf32>
    %cst_52 = arith.constant 5.000000e-01 : f32
    %119 = vector.broadcast %cst_52 : f32 to vector<8x64xf32>
    %120 = arith.mulf %119, %118 : vector<8x64xf32>
    %121 = arith.mulf %108, %120 : vector<8x64xf32>
    %c0_53 = arith.constant 0 : index
    %c0_54 = arith.constant 0 : index
    %c0_55 = arith.constant 0 : index
    %122 = vector.load %arg13[%c0_53, %c0_54, %c0_55] : memref<2x64x32xbf16, #tpu.memory_space<vmem>>, vector<1x64x32xbf16>
    %123 = vector.shape_cast %122 : vector<1x64x32xbf16> to vector<64x32xbf16>
    %124 = arith.truncf %121 : vector<8x64xf32> to vector<8x64xbf16>
    %cst_56 = arith.constant dense<0.000000e+00> : vector<8x32xf32>
    %125 = tpu.matmul %124, %123, %cst_56 {dimension_numbers = #tpu.dot_dimension_numbers<[1], [0], [0], [1], [0, 0, 1, 1], [], []>} : vector<8x64xbf16>, vector<64x32xbf16>, vector<8x32xf32> -> vector<8x32xf32>
    %c0_57 = arith.constant 0 : index
    %c0_58 = arith.constant 0 : index
    %c0_59 = arith.constant 0 : index
    %126 = vector.load %arg14[%c0_57, %c0_58, %c0_59] : memref<2x1x32xf32, #tpu.memory_space<vmem>>, vector<1x1x32xf32>
    %127 = vector.shape_cast %126 : vector<1x1x32xf32> to vector<1x32xf32>
    %128 = vector.broadcast %127 : vector<1x32xf32> to vector<8x32xf32>
    %129 = arith.addf %125, %128 : vector<8x32xf32>
    %130 = arith.addf %129, %100 : vector<8x32xf32>
    %c0_60 = arith.constant 0 : index
    %c0_61 = arith.constant 0 : index
    %c0_62 = arith.constant 0 : index
    %131 = vector.load %arg15[%c0_60, %c0_61, %c0_62] : memref<2x1x32xf32, #tpu.memory_space<vmem>>, vector<1x1x32xf32>
    %132 = vector.shape_cast %131 : vector<1x1x32xf32> to vector<1x32xf32>
    %c0_63 = arith.constant 0 : index
    %c0_64 = arith.constant 0 : index
    %c0_65 = arith.constant 0 : index
    %133 = vector.load %arg16[%c0_63, %c0_64, %c0_65] : memref<2x1x32xf32, #tpu.memory_space<vmem>>, vector<1x1x32xf32>
    %134 = vector.shape_cast %133 : vector<1x1x32xf32> to vector<1x32xf32>
    %cst_66 = arith.constant dense<0.000000e+00> : vector<8xf32>
    %135 = vector.multi_reduction <add>, %130, %cst_66 [1] : vector<8x32xf32> to vector<8xf32>
    %136 = vector.shape_cast %135 : vector<8xf32> to vector<8x1xf32>
    %cst_67 = arith.constant 3.200000e+01 : f32
    %137 = vector.broadcast %cst_67 : f32 to vector<8x1xf32>
    %138 = arith.divf %136, %137 : vector<8x1xf32>
    %139 = vector.broadcast %138 : vector<8x1xf32> to vector<8x32xf32>
    %140 = arith.subf %130, %139 : vector<8x32xf32>
    %141 = arith.mulf %140, %140 : vector<8x32xf32>
    %cst_68 = arith.constant dense<0.000000e+00> : vector<8xf32>
    %142 = vector.multi_reduction <add>, %141, %cst_68 [1] : vector<8x32xf32> to vector<8xf32>
    %143 = vector.shape_cast %142 : vector<8xf32> to vector<8x1xf32>
    %cst_69 = arith.constant 3.200000e+01 : f32
    %144 = vector.broadcast %cst_69 : f32 to vector<8x1xf32>
    %145 = arith.divf %143, %144 : vector<8x1xf32>
    %cst_70 = arith.constant 9.99999996E-13 : f32
    %146 = vector.broadcast %cst_70 : f32 to vector<8x1xf32>
    %147 = arith.addf %145, %146 : vector<8x1xf32>
    %148 = math.rsqrt %147 : vector<8x1xf32>
    %149 = vector.broadcast %148 : vector<8x1xf32> to vector<8x32xf32>
    %150 = arith.mulf %140, %149 : vector<8x32xf32>
    %151 = vector.broadcast %132 : vector<1x32xf32> to vector<8x32xf32>
    %152 = arith.mulf %150, %151 : vector<8x32xf32>
    %153 = vector.broadcast %134 : vector<1x32xf32> to vector<8x32xf32>
    %154 = arith.addf %152, %153 : vector<8x32xf32>
    %c1 = arith.constant 1 : index
    %c0_71 = arith.constant 0 : index
    %c0_72 = arith.constant 0 : index
    %155 = vector.load %arg5[%c1, %c0_71, %c0_72] : memref<2x32x96xbf16, #tpu.memory_space<vmem>>, vector<1x32x96xbf16>
    %156 = vector.shape_cast %155 : vector<1x32x96xbf16> to vector<32x96xbf16>
    %157 = arith.truncf %154 : vector<8x32xf32> to vector<8x32xbf16>
    %cst_73 = arith.constant dense<0.000000e+00> : vector<8x96xf32>
    %158 = tpu.matmul %157, %156, %cst_73 {dimension_numbers = #tpu.dot_dimension_numbers<[1], [0], [0], [1], [0, 0, 1, 1], [], []>} : vector<8x32xbf16>, vector<32x96xbf16>, vector<8x96xf32> -> vector<8x96xf32>
    %c1_74 = arith.constant 1 : index
    %c0_75 = arith.constant 0 : index
    %c0_76 = arith.constant 0 : index
    %159 = vector.load %arg6[%c1_74, %c0_75, %c0_76] : memref<2x1x96xf32, #tpu.memory_space<vmem>>, vector<1x1x96xf32>
    %160 = vector.shape_cast %159 : vector<1x1x96xf32> to vector<1x96xf32>
    %161 = vector.broadcast %160 : vector<1x96xf32> to vector<8x96xf32>
    %162 = arith.addf %158, %161 : vector<8x96xf32>
    %163 = vector.shape_cast %162 : vector<8x96xf32> to vector<1x8x12x8xf32>
    %164 = tpu.transpose %163, [0, 2, 1, 3] : vector<1x8x12x8xf32> -> vector<1x12x8x8xf32>
    %165 = arith.truncf %164 : vector<1x12x8x8xf32> to vector<1x12x8x8xbf16>
    %166 = vector.extract_strided_slice %165 {offsets = [0, 0, 0, 0], sizes = [1, 4, 8, 8], strides = [1, 1, 1, 1]} : vector<1x12x8x8xbf16> to vector<1x4x8x8xbf16>
    %167 = vector.shape_cast %166 : vector<1x4x8x8xbf16> to vector<4x8x8xbf16>
    %168 = vector.extract_strided_slice %165 {offsets = [0, 4, 0, 0], sizes = [1, 4, 8, 8], strides = [1, 1, 1, 1]} : vector<1x12x8x8xbf16> to vector<1x4x8x8xbf16>
    %169 = vector.shape_cast %168 : vector<1x4x8x8xbf16> to vector<4x8x8xbf16>
    %170 = vector.extract_strided_slice %165 {offsets = [0, 8, 0, 0], sizes = [1, 4, 8, 8], strides = [1, 1, 1, 1]} : vector<1x12x8x8xbf16> to vector<1x4x8x8xbf16>
    %171 = vector.shape_cast %170 : vector<1x4x8x8xbf16> to vector<4x8x8xbf16>
    "tpu.trace_start"() <{level = 10 : i32, message = "bqd,bkd->bqk"}> : () -> ()
    %cst_77 = arith.constant dense<0.000000e+00> : vector<4x8x8xf32>
    %172 = tpu.matmul %167, %169, %cst_77 {dimension_numbers = #tpu.dot_dimension_numbers<[2], [2], [1], [1], [0, 0, 0, 1, 1, 1], [0], [0]>} : vector<4x8x8xbf16>, vector<4x8x8xbf16>, vector<4x8x8xf32> -> vector<4x8x8xf32>
    "tpu.trace_stop"() : () -> ()
    %173 = vector.broadcast %32 : vector<4x1x8xf32> to vector<4x8x8xf32>
    %174 = arith.addf %172, %173 : vector<4x8x8xf32>
    %cst_78 = arith.constant dense<0xFF800000> : vector<4x8xf32>
    %175 = vector.multi_reduction <maximumf>, %174, %cst_78 [2] : vector<4x8x8xf32> to vector<4x8xf32>
    %176 = vector.shape_cast %175 : vector<4x8xf32> to vector<4x8x1xf32>
    %177 = vector.broadcast %176 : vector<4x8x1xf32> to vector<4x8x8xf32>
    %178 = arith.subf %174, %177 : vector<4x8x8xf32>
    %179 = math.exp %178 : vector<4x8x8xf32>
    %cst_79 = arith.constant dense<0.000000e+00> : vector<4x8xf32>
    %180 = vector.multi_reduction <add>, %179, %cst_79 [2] : vector<4x8x8xf32> to vector<4x8xf32>
    %181 = vector.shape_cast %180 : vector<4x8xf32> to vector<4x8x1xf32>
    %182 = tpu.reciprocal %181 {approx = true} : vector<4x8x1xf32> -> vector<4x8x1xf32>
    %183 = vector.broadcast %182 : vector<4x8x1xf32> to vector<4x8x8xf32>
    %184 = arith.mulf %179, %183 : vector<4x8x8xf32>
    %185 = arith.truncf %184 : vector<4x8x8xf32> to vector<4x8x8xbf16>
    "tpu.trace_start"() <{level = 10 : i32, message = "bqk,bkd->bqd"}> : () -> ()
    %cst_80 = arith.constant dense<0.000000e+00> : vector<4x8x8xf32>
    %186 = tpu.matmul %185, %171, %cst_80 {dimension_numbers = #tpu.dot_dimension_numbers<[2], [1], [1], [2], [0, 0, 0, 1, 1, 2], [0], [0]>} : vector<4x8x8xbf16>, vector<4x8x8xbf16>, vector<4x8x8xf32> -> vector<4x8x8xf32>
    "tpu.trace_stop"() : () -> ()
    %187 = vector.shape_cast %186 : vector<4x8x8xf32> to vector<1x4x8x8xf32>
    %188 = tpu.transpose %187, [0, 2, 1, 3] : vector<1x4x8x8xf32> -> vector<1x8x4x8xf32>
    %189 = vector.shape_cast %188 : vector<1x8x4x8xf32> to vector<8x32xf32>
    %c1_81 = arith.constant 1 : index
    %c0_82 = arith.constant 0 : index
    %c0_83 = arith.constant 0 : index
    %190 = vector.load %arg7[%c1_81, %c0_82, %c0_83] : memref<2x32x32xbf16, #tpu.memory_space<vmem>>, vector<1x32x32xbf16>
    %191 = vector.shape_cast %190 : vector<1x32x32xbf16> to vector<32x32xbf16>
    %192 = arith.truncf %189 : vector<8x32xf32> to vector<8x32xbf16>
    %cst_84 = arith.constant dense<0.000000e+00> : vector<8x32xf32>
    %193 = tpu.matmul %192, %191, %cst_84 {dimension_numbers = #tpu.dot_dimension_numbers<[1], [0], [0], [1], [0, 0, 1, 1], [], []>} : vector<8x32xbf16>, vector<32x32xbf16>, vector<8x32xf32> -> vector<8x32xf32>
    %c1_85 = arith.constant 1 : index
    %c0_86 = arith.constant 0 : index
    %c0_87 = arith.constant 0 : index
    %194 = vector.load %arg8[%c1_85, %c0_86, %c0_87] : memref<2x1x32xf32, #tpu.memory_space<vmem>>, vector<1x1x32xf32>
    %195 = vector.shape_cast %194 : vector<1x1x32xf32> to vector<1x32xf32>
    %196 = vector.broadcast %195 : vector<1x32xf32> to vector<8x32xf32>
    %197 = arith.addf %193, %196 : vector<8x32xf32>
    %198 = arith.addf %197, %154 : vector<8x32xf32>
    %c1_88 = arith.constant 1 : index
    %c0_89 = arith.constant 0 : index
    %c0_90 = arith.constant 0 : index
    %199 = vector.load %arg9[%c1_88, %c0_89, %c0_90] : memref<2x1x32xf32, #tpu.memory_space<vmem>>, vector<1x1x32xf32>
    %200 = vector.shape_cast %199 : vector<1x1x32xf32> to vector<1x32xf32>
    %c1_91 = arith.constant 1 : index
    %c0_92 = arith.constant 0 : index
    %c0_93 = arith.constant 0 : index
    %201 = vector.load %arg10[%c1_91, %c0_92, %c0_93] : memref<2x1x32xf32, #tpu.memory_space<vmem>>, vector<1x1x32xf32>
    %202 = vector.shape_cast %201 : vector<1x1x32xf32> to vector<1x32xf32>
    %cst_94 = arith.constant dense<0.000000e+00> : vector<8xf32>
    %203 = vector.multi_reduction <add>, %198, %cst_94 [1] : vector<8x32xf32> to vector<8xf32>
    %204 = vector.shape_cast %203 : vector<8xf32> to vector<8x1xf32>
    %cst_95 = arith.constant 3.200000e+01 : f32
    %205 = vector.broadcast %cst_95 : f32 to vector<8x1xf32>
    %206 = arith.divf %204, %205 : vector<8x1xf32>
    %207 = vector.broadcast %206 : vector<8x1xf32> to vector<8x32xf32>
    %208 = arith.subf %198, %207 : vector<8x32xf32>
    %209 = arith.mulf %208, %208 : vector<8x32xf32>
    %cst_96 = arith.constant dense<0.000000e+00> : vector<8xf32>
    %210 = vector.multi_reduction <add>, %209, %cst_96 [1] : vector<8x32xf32> to vector<8xf32>
    %211 = vector.shape_cast %210 : vector<8xf32> to vector<8x1xf32>
    %cst_97 = arith.constant 3.200000e+01 : f32
    %212 = vector.broadcast %cst_97 : f32 to vector<8x1xf32>
    %213 = arith.divf %211, %212 : vector<8x1xf32>
    %cst_98 = arith.constant 9.99999996E-13 : f32
    %214 = vector.broadcast %cst_98 : f32 to vector<8x1xf32>
    %215 = arith.addf %213, %214 : vector<8x1xf32>
    %216 = math.rsqrt %215 : vector<8x1xf32>
    %217 = vector.broadcast %216 : vector<8x1xf32> to vector<8x32xf32>
    %218 = arith.mulf %208, %217 : vector<8x32xf32>
    %219 = vector.broadcast %200 : vector<1x32xf32> to vector<8x32xf32>
    %220 = arith.mulf %218, %219 : vector<8x32xf32>
    %221 = vector.broadcast %202 : vector<1x32xf32> to vector<8x32xf32>
    %222 = arith.addf %220, %221 : vector<8x32xf32>
    %c1_99 = arith.constant 1 : index
    %c0_100 = arith.constant 0 : index
    %c0_101 = arith.constant 0 : index
    %223 = vector.load %arg11[%c1_99, %c0_100, %c0_101] : memref<2x32x64xbf16, #tpu.memory_space<vmem>>, vector<1x32x64xbf16>
    %224 = vector.shape_cast %223 : vector<1x32x64xbf16> to vector<32x64xbf16>
    %225 = arith.truncf %222 : vector<8x32xf32> to vector<8x32xbf16>
    %cst_102 = arith.constant dense<0.000000e+00> : vector<8x64xf32>
    %226 = tpu.matmul %225, %224, %cst_102 {dimension_numbers = #tpu.dot_dimension_numbers<[1], [0], [0], [1], [0, 0, 1, 1], [], []>} : vector<8x32xbf16>, vector<32x64xbf16>, vector<8x64xf32> -> vector<8x64xf32>
    %c1_103 = arith.constant 1 : index
    %c0_104 = arith.constant 0 : index
    %c0_105 = arith.constant 0 : index
    %227 = vector.load %arg12[%c1_103, %c0_104, %c0_105] : memref<2x1x64xf32, #tpu.memory_space<vmem>>, vector<1x1x64xf32>
    %228 = vector.shape_cast %227 : vector<1x1x64xf32> to vector<1x64xf32>
    %229 = vector.broadcast %228 : vector<1x64xf32> to vector<8x64xf32>
    %230 = arith.addf %226, %229 : vector<8x64xf32>
    %231 = arith.mulf %230, %230 : vector<8x64xf32>
    %232 = arith.mulf %230, %231 : vector<8x64xf32>
    %cst_106 = arith.constant 4.471500e-02 : f32
    %233 = vector.broadcast %cst_106 : f32 to vector<8x64xf32>
    %234 = arith.mulf %233, %232 : vector<8x64xf32>
    %235 = arith.addf %230, %234 : vector<8x64xf32>
    %cst_107 = arith.constant 0.797884583 : f32
    %236 = vector.broadcast %cst_107 : f32 to vector<8x64xf32>
    %237 = arith.mulf %236, %235 : vector<8x64xf32>
    %238 = math.tanh %237 : vector<8x64xf32>
    %cst_108 = arith.constant 1.000000e+00 : f32
    %239 = vector.broadcast %cst_108 : f32 to vector<8x64xf32>
    %240 = arith.addf %239, %238 : vector<8x64xf32>
    %cst_109 = arith.constant 5.000000e-01 : f32
    %241 = vector.broadcast %cst_109 : f32 to vector<8x64xf32>
    %242 = arith.mulf %241, %240 : vector<8x64xf32>
    %243 = arith.mulf %230, %242 : vector<8x64xf32>
    %c1_110 = arith.constant 1 : index
    %c0_111 = arith.constant 0 : index
    %c0_112 = arith.constant 0 : index
    %244 = vector.load %arg13[%c1_110, %c0_111, %c0_112] : memref<2x64x32xbf16, #tpu.memory_space<vmem>>, vector<1x64x32xbf16>
    %245 = vector.shape_cast %244 : vector<1x64x32xbf16> to vector<64x32xbf16>
    %246 = arith.truncf %243 : vector<8x64xf32> to vector<8x64xbf16>
    %cst_113 = arith.constant dense<0.000000e+00> : vector<8x32xf32>
    %247 = tpu.matmul %246, %245, %cst_113 {dimension_numbers = #tpu.dot_dimension_numbers<[1], [0], [0], [1], [0, 0, 1, 1], [], []>} : vector<8x64xbf16>, vector<64x32xbf16>, vector<8x32xf32> -> vector<8x32xf32>
    %c1_114 = arith.constant 1 : index
    %c0_115 = arith.constant 0 : index
    %c0_116 = arith.constant 0 : index
    %248 = vector.load %arg14[%c1_114, %c0_115, %c0_116] : memref<2x1x32xf32, #tpu.memory_space<vmem>>, vector<1x1x32xf32>
    %249 = vector.shape_cast %248 : vector<1x1x32xf32> to vector<1x32xf32>
    %250 = vector.broadcast %249 : vector<1x32xf32> to vector<8x32xf32>
    %251 = arith.addf %247, %250 : vector<8x32xf32>
    %252 = arith.addf %251, %222 : vector<8x32xf32>
    %c1_117 = arith.constant 1 : index
    %c0_118 = arith.constant 0 : index
    %c0_119 = arith.constant 0 : index
    %253 = vector.load %arg15[%c1_117, %c0_118, %c0_119] : memref<2x1x32xf32, #tpu.memory_space<vmem>>, vector<1x1x32xf32>
    %254 = vector.shape_cast %253 : vector<1x1x32xf32> to vector<1x32xf32>
    %c1_120 = arith.constant 1 : index
    %c0_121 = arith.constant 0 : index
    %c0_122 = arith.constant 0 : index
    %255 = vector.load %arg16[%c1_120, %c0_121, %c0_122] : memref<2x1x32xf32, #tpu.memory_space<vmem>>, vector<1x1x32xf32>
    %256 = vector.shape_cast %255 : vector<1x1x32xf32> to vector<1x32xf32>
    %cst_123 = arith.constant dense<0.000000e+00> : vector<8xf32>
    %257 = vector.multi_reduction <add>, %252, %cst_123 [1] : vector<8x32xf32> to vector<8xf32>
    %258 = vector.shape_cast %257 : vector<8xf32> to vector<8x1xf32>
    %cst_124 = arith.constant 3.200000e+01 : f32
    %259 = vector.broadcast %cst_124 : f32 to vector<8x1xf32>
    %260 = arith.divf %258, %259 : vector<8x1xf32>
    %261 = vector.broadcast %260 : vector<8x1xf32> to vector<8x32xf32>
    %262 = arith.subf %252, %261 : vector<8x32xf32>
    %263 = arith.mulf %262, %262 : vector<8x32xf32>
    %cst_125 = arith.constant dense<0.000000e+00> : vector<8xf32>
    %264 = vector.multi_reduction <add>, %263, %cst_125 [1] : vector<8x32xf32> to vector<8xf32>
    %265 = vector.shape_cast %264 : vector<8xf32> to vector<8x1xf32>
    %cst_126 = arith.constant 3.200000e+01 : f32
    %266 = vector.broadcast %cst_126 : f32 to vector<8x1xf32>
    %267 = arith.divf %265, %266 : vector<8x1xf32>
    %cst_127 = arith.constant 9.99999996E-13 : f32
    %268 = vector.broadcast %cst_127 : f32 to vector<8x1xf32>
    %269 = arith.addf %267, %268 : vector<8x1xf32>
    %270 = math.rsqrt %269 : vector<8x1xf32>
    %271 = vector.broadcast %270 : vector<8x1xf32> to vector<8x32xf32>
    %272 = arith.mulf %262, %271 : vector<8x32xf32>
    %273 = vector.broadcast %254 : vector<1x32xf32> to vector<8x32xf32>
    %274 = arith.mulf %272, %273 : vector<8x32xf32>
    %275 = vector.broadcast %256 : vector<1x32xf32> to vector<8x32xf32>
    %276 = arith.addf %274, %275 : vector<8x32xf32>
    %277 = vector.shape_cast %276 : vector<8x32xf32> to vector<1x8x32xf32>
    %278 = vector.extract_strided_slice %277 {offsets = [0, 0, 0], sizes = [1, 1, 32], strides = [1, 1, 1]} : vector<1x8x32xf32> to vector<1x1x32xf32>
    %279 = vector.shape_cast %278 : vector<1x1x32xf32> to vector<1x32xf32>
    %280 = vector.shape_cast %279 : vector<1x32xf32> to vector<1x1x32xf32>
    %c0_128 = arith.constant 0 : index
    %c0_129 = arith.constant 0 : index
    %c0_130 = arith.constant 0 : index
    %281 = vector.load %arg19[%c0_128, %c0_129, %c0_130] : memref<1x1x32xf32, #tpu.memory_space<vmem>>, vector<1x1x32xf32>
    tpu.vector_store %arg19[%c0_128, %c0_129, %c0_130], %280 {strides = array<i32>} : memref<1x1x32xf32, #tpu.memory_space<vmem>>, vector<1x1x32xf32>,
    return
  }
  func.func @transform_0(%arg0: i32) -> (i32, i32) {
    %c0_i32 = arith.constant 0 : i32
    %c0_i32_0 = arith.constant 0 : i32
    return %arg0, %c0_i32 : i32, i32
  }
  func.func @transform_1(%arg0: i32) -> (i32, i32) {
    %c0_i32 = arith.constant 0 : i32
    %c0_i32_0 = arith.constant 0 : i32
    return %arg0, %c0_i32 : i32, i32
  }
  func.func @transform_2(%arg0: i32) -> (i32, i32) {
    %c0_i32 = arith.constant 0 : i32
    %c0_i32_0 = arith.constant 0 : i32
    %c0_i32_1 = arith.constant 0 : i32
    return %c0_i32, %c0_i32_0 : i32, i32
  }
  func.func @transform_3(%arg0: i32) -> (i32, i32) {
    %c0_i32 = arith.constant 0 : i32
    %c0_i32_0 = arith.constant 0 : i32
    %c0_i32_1 = arith.constant 0 : i32
    return %c0_i32, %c0_i32_0 : i32, i32
  }
  func.func @transform_4(%arg0: i32) -> (i32, i32, i32) {
    %c0_i32 = arith.constant 0 : i32
    %c0_i32_0 = arith.constant 0 : i32
    %c0_i32_1 = arith.constant 0 : i32
    %c0_i32_2 = arith.constant 0 : i32
    return %c0_i32, %c0_i32_0, %c0_i32_1 : i32, i32, i32
  }
  func.func @transform_5(%arg0: i32) -> (i32, i32, i32) {
    %c0_i32 = arith.constant 0 : i32
    %c0_i32_0 = arith.constant 0 : i32
    %c0_i32_1 = arith.constant 0 : i32
    %c0_i32_2 = arith.constant 0 : i32
    return %c0_i32, %c0_i32_0, %c0_i32_1 : i32, i32, i32
  }
  func.func @transform_6(%arg0: i32) -> (i32, i32, i32) {
    %c0_i32 = arith.constant 0 : i32
    %c0_i32_0 = arith.constant 0 : i32
    %c0_i32_1 = arith.constant 0 : i32
    %c0_i32_2 = arith.constant 0 : i32
    return %c0_i32, %c0_i32_0, %c0_i32_1 : i32, i32, i32
  }
  func.func @transform_7(%arg0: i32) -> (i32, i32, i32) {
    %c0_i32 = arith.constant 0 : i32
    %c0_i32_0 = arith.constant 0 : i32
    %c0_i32_1 = arith.constant 0 : i32
    %c0_i32_2 = arith.constant 0 : i32
    return %c0_i32, %c0_i32_0, %c0_i32_1 : i32, i32, i32
  }
  func.func @transform_8(%arg0: i32) -> (i32, i32, i32) {
    %c0_i32 = arith.constant 0 : i32
    %c0_i32_0 = arith.constant 0 : i32
    %c0_i32_1 = arith.constant 0 : i32
    %c0_i32_2 = arith.constant 0 : i32
    return %c0_i32, %c0_i32_0, %c0_i32_1 : i32, i32, i32
  }
  func.func @transform_9(%arg0: i32) -> (i32, i32, i32) {
    %c0_i32 = arith.constant 0 : i32
    %c0_i32_0 = arith.constant 0 : i32
    %c0_i32_1 = arith.constant 0 : i32
    %c0_i32_2 = arith.constant 0 : i32
    return %c0_i32, %c0_i32_0, %c0_i32_1 : i32, i32, i32
  }
  func.func @transform_10(%arg0: i32) -> (i32, i32, i32) {
    %c0_i32 = arith.constant 0 : i32
    %c0_i32_0 = arith.constant 0 : i32
    %c0_i32_1 = arith.constant 0 : i32
    %c0_i32_2 = arith.constant 0 : i32
    return %c0_i32, %c0_i32_0, %c0_i32_1 : i32, i32, i32
  }
  func.func @transform_11(%arg0: i32) -> (i32, i32, i32) {
    %c0_i32 = arith.constant 0 : i32
    %c0_i32_0 = arith.constant 0 : i32
    %c0_i32_1 = arith.constant 0 : i32
    %c0_i32_2 = arith.constant 0 : i32
    return %c0_i32, %c0_i32_0, %c0_i32_1 : i32, i32, i32
  }
  func.func @transform_12(%arg0: i32) -> (i32, i32, i32) {
    %c0_i32 = arith.constant 0 : i32
    %c0_i32_0 = arith.constant 0 : i32
    %c0_i32_1 = arith.constant 0 : i32
    %c0_i32_2 = arith.constant 0 : i32
    return %c0_i32, %c0_i32_0, %c0_i32_1 : i32, i32, i32
  }
  func.func @transform_13(%arg0: i32) -> (i32, i32, i32) {
    %c0_i32 = arith.constant 0 : i32
    %c0_i32_0 = arith.constant 0 : i32
    %c0_i32_1 = arith.constant 0 : i32
    %c0_i32_2 = arith.constant 0 : i32
    return %c0_i32, %c0_i32_0, %c0_i32_1 : i32, i32, i32
  }
  func.func @transform_14(%arg0: i32) -> (i32, i32, i32) {
    %c0_i32 = arith.constant 0 : i32
    %c0_i32_0 = arith.constant 0 : i32
    %c0_i32_1 = arith.constant 0 : i32
    %c0_i32_2 = arith.constant 0 : i32
    return %c0_i32, %c0_i32_0, %c0_i32_1 : i32, i32, i32
  }
  func.func @transform_15(%arg0: i32) -> (i32, i32, i32) {
    %c0_i32 = arith.constant 0 : i32
    %c0_i32_0 = arith.constant 0 : i32
    %c0_i32_1 = arith.constant 0 : i32
    %c0_i32_2 = arith.constant 0 : i32
    return %c0_i32, %c0_i32_0, %c0_i32_1 : i32, i32, i32
  }
  func.func @transform_16(%arg0: i32) -> (i32, i32) {
    %c0_i32 = arith.constant 0 : i32
    %c0_i32_0 = arith.constant 0 : i32
    %c0_i32_1 = arith.constant 0 : i32
    return %c0_i32, %c0_i32_0 : i32, i32
  }
  func.func @transform_17(%arg0: i32) -> (i32, i32) {
    %c0_i32 = arith.constant 0 : i32
    %c0_i32_0 = arith.constant 0 : i32
    %c0_i32_1 = arith.constant 0 : i32
    return %c0_i32, %c0_i32_0 : i32, i32
  }
  func.func @transform_18(%arg0: i32) -> (i32, i32, i32) {
    %c0_i32 = arith.constant 0 : i32
    %c0_i32_0 = arith.constant 0 : i32
    %c0_i32_1 = arith.constant 0 : i32
    return %arg0, %c0_i32, %c0_i32_0 : i32, i32, i32
  }
}

</mosaic_0001>

<llo_original>
// kernel: simcse_forward.1
$region0: #{simcse_forward.1}
  #allocation0 [shape = 'u32[]', space=smem, size = 0x4, offset = 0x4, fixed_abs, tag = 'smem constant byte address 0x4 - core index']
  #allocation1 [shape = 'u32[144,128]{1,0:T(1,128)}', space=vmem, size = 0x12000, scoped, tag = 'internal scratch']
  %s0 = inlined_call_operand.vmem [shape: f32[16,32], index: 0, kind: input, shape index: {}]
  %s1 = inlined_call_operand.vmem [shape: f32[16,1], index: 1, kind: input, shape index: {}]
  %s2 = inlined_call_operand.vmem [shape: f32[1,32], index: 2, kind: input, shape index: {}]
  %s3 = inlined_call_operand.vmem [shape: f32[1,32], index: 3, kind: input, shape index: {}]
  %s4 = inlined_call_operand.vmem [shape: bf16[2,32,96], index: 4, kind: input, shape index: {}]
  %s5 = inlined_call_operand.vmem [shape: f32[2,1,96], index: 5, kind: input, shape index: {}]
  %s6 = inlined_call_operand.vmem [shape: bf16[2,32,32], index: 6, kind: input, shape index: {}]
  %s7 = inlined_call_operand.vmem [shape: f32[2,1,32], index: 7, kind: input, shape index: {}]
  %s8 = inlined_call_operand.vmem [shape: f32[2,1,32], index: 8, kind: input, shape index: {}]
  %s9 = inlined_call_operand.vmem [shape: f32[2,1,32], index: 9, kind: input, shape index: {}]
  %s10 = inlined_call_operand.vmem [shape: bf16[2,32,64], index: 10, kind: input, shape index: {}]
  %s11 = inlined_call_operand.vmem [shape: f32[2,1,64], index: 11, kind: input, shape index: {}]
  %s12 = inlined_call_operand.vmem [shape: bf16[2,64,32], index: 12, kind: input, shape index: {}]
  %s13 = inlined_call_operand.vmem [shape: f32[2,1,32], index: 13, kind: input, shape index: {}]
  %s14 = inlined_call_operand.vmem [shape: f32[2,1,32], index: 14, kind: input, shape index: {}]
  %s15 = inlined_call_operand.vmem [shape: f32[2,1,32], index: 15, kind: input, shape index: {}]
  %s16 = inlined_call_operand.vmem [shape: bf16[32,32], index: 16, kind: input, shape index: {}]
  %s17 = inlined_call_operand.vmem [shape: f32[1,32], index: 17, kind: input, shape index: {}]
  %s18 = inlined_call_operand.hbm [shape: f32[2,1,32], index: 18, kind: output, shape index: {}]
  %s19 = sld [smem:[#allocation0]]
  $region105: #{simcse_forward.1} parent=0
    _
  %s21 = ssub.s32 1, %s19
  %s22 = scalar_select 0, %s21, %s19
  $region1: #{simcse_forward.1} parent=0
    #allocation2 [shape = 'u8[1024]{0}', space=vmem, size = 0x400, scoped, tag = 'output window, operand 0']
    #allocation3 [shape = 's32[2]{0}', space=sflag, size = 0x8, scoped, tag = 'scoped memory for simcse_forward.1']
    %23 = vsyncpa [#allocation3], 0
    %s24 = scalar_lea.sflag [#allocation3], 1
    %25 = vsyncpa %s24, 0
    loop: start=0, step=1, limit=4
    $region2: #{simcse_forward.1} parent=1 // loop_pre_header
      _
    $region3: #{simcse_forward.1} parent=1 // loop_header
      %s27 = sphi 0, %s31
      %p28 = scmp.ge.s32.totalorder %s27, 4
      %s37 = sphi 0, %s39
      %s40 = sphi 0, %s37
      %s41 = sphi 0, %s40
      %s57 = sphi 0, %s41
      %s63 = sphi 0, %s65
      %s66 = sphi 0, %s63
      %s67 = sphi 0, %s66
      %s83 = sphi 0, %s67
      %s87 = sphi 0, %s87
      %s89 = sphi 0, %s87
      %s90 = sphi 0, %s89
      %s104 = sphi 0, %s90
      %s108 = sphi 0, %s108
      %s110 = sphi 0, %s108
      %s111 = sphi 0, %s110
      %s125 = sphi 0, %s111
      %s129 = sphi 0, %s129
      %s131 = sphi 0, %s129
      %s132 = sphi 0, %s131
      %s146 = sphi 0, %s132
      %s150 = sphi 0, %s150
      %s152 = sphi 0, %s150
      %s153 = sphi 0, %s152
      %s167 = sphi 0, %s153
      %s171 = sphi 0, %s171
      %s173 = sphi 0, %s171
      %s174 = sphi 0, %s173
      %s188 = sphi 0, %s174
      %s192 = sphi 0, %s192
      %s194 = sphi 0, %s192
      %s195 = sphi 0, %s194
      %s209 = sphi 0, %s195
      %s213 = sphi 0, %s213
      %s215 = sphi 0, %s213
      %s216 = sphi 0, %s215
      %s230 = sphi 0, %s216
      %s234 = sphi 0, %s234
      %s236 = sphi 0, %s234
      %s237 = sphi 0, %s236
      %s251 = sphi 0, %s237
      %s255 = sphi 0, %s255
      %s257 = sphi 0, %s255
      %s258 = sphi 0, %s257
      %s272 = sphi 0, %s258
      %s276 = sphi 0, %s276
      %s278 = sphi 0, %s276
      %s279 = sphi 0, %s278
      %s293 = sphi 0, %s279
      %s297 = sphi 0, %s297
      %s299 = sphi 0, %s297
      %s300 = sphi 0, %s299
      %s314 = sphi 0, %s300
      %s318 = sphi 0, %s318
      %s320 = sphi 0, %s318
      %s321 = sphi 0, %s320
      %s335 = sphi 0, %s321
      %s339 = sphi 0, %s339
      %s341 = sphi 0, %s339
      %s342 = sphi 0, %s341
      %s356 = sphi 0, %s342
      %s360 = sphi 0, %s360
      %s362 = sphi 0, %s360
      %s363 = sphi 0, %s362
      %s377 = sphi 0, %s363
      %s381 = sphi 0, %s381
      %s383 = sphi 0, %s381
      %s384 = sphi 0, %s383
      %s398 = sphi 0, %s384
      %s402 = sphi 0, %s402
      %s404 = sphi 0, %s402
      %s405 = sphi 0, %s404
      %s419 = sphi 0, %s405
      %s425 = sphi 0, %s427
      %s428 = sphi 0, %s425
      %s429 = sphi 0, %s428
      %s445 = sphi 0, %s429
    $region4: #{simcse_forward.1} parent=1 // loop_header_branch
      %30 = sbr.rel (%p28) target = $region8
    $region5: #{simcse_forward.1} parent=1 // loop_body
      %s32 = ssub.s32 %s27, 1
      %s33 = ssub.s32 %s27, 2
      %s34 = sadd.s32 %s27, 1
      %s35 = ssub.s32 %s27, %s34
      %p36 = scmp.eq.s32.totalorder %s35, 0
      %s38 = sadd.s32 %s37, 1
      %s39 = scalar_select %p36, %s37, %s38
      %p42 = pneg %p36
      %p43 = scmp.eq.s32.totalorder %s27, 1
      %p44 = por %p42, %p43
      %p45 = scmp.ne.s32.totalorder %s37, %s40
      %p46 = scmp.eq.s32.totalorder %s27, 0
      %p47 = por %p45, %p46
      %p48 = scmp.ne.s32.totalorder %s37, %s40
      %p49 = scmp.eq.s32.totalorder %s32, 1
      %p50 = por %p48, %p49
      %p51 = scmp.ne.s32.totalorder %s40, %s41
      %p52 = scmp.eq.s32.totalorder %s32, 0
      %p53 = por %p51, %p52
      %p54 = scmp.ne.s32.totalorder %s40, %s41
      %p55 = scmp.eq.s32.totalorder %s33, 1
      %p56 = por %p54, %p55
      %p58 = scmp.ne.s32.totalorder %s41, %s57
      %p59 = scmp.eq.s32.totalorder %s33, 0
      %p60 = por %p58, %p59
      %s61 = ssub.s32 %s27, %s34
      %p62 = scmp.eq.s32.totalorder %s61, 0
      %s64 = sadd.s32 %s63, 1
      %s65 = scalar_select %p62, %s63, %s64
      %p68 = pneg %p62
      %p69 = scmp.eq.s32.totalorder %s27, 1
      %p70 = por %p68, %p69
      %p71 = scmp.ne.s32.totalorder %s63, %s66
      %p72 = scmp.eq.s32.totalorder %s27, 0
      %p73 = por %p71, %p72
      %p74 = scmp.ne.s32.totalorder %s63, %s66
      %p75 = scmp.eq.s32.totalorder %s32, 1
      %p76 = por %p74, %p75
      %p77 = scmp.ne.s32.totalorder %s66, %s67
      %p78 = scmp.eq.s32.totalorder %s32, 0
      %p79 = por %p77, %p78
      %p80 = scmp.ne.s32.totalorder %s66, %s67
      %p81 = scmp.eq.s32.totalorder %s33, 1
      %p82 = por %p80, %p81
      %p84 = scmp.ne.s32.totalorder %s67, %s83
      %p85 = scmp.eq.s32.totalorder %s33, 0
      %p86 = por %p84, %p85
      %s88 = sadd.s32 %s87, 1
      %p91 = scmp.eq.s32.totalorder %s27, 1
      %p92 = scmp.ne.s32.totalorder %s87, %s89
      %p93 = scmp.eq.s32.totalorder %s27, 0
      %p94 = por %p92, %p93
      %p95 = scmp.ne.s32.totalorder %s87, %s89
      %p96 = scmp.eq.s32.totalorder %s32, 1
      %p97 = por %p95, %p96
      %p98 = scmp.ne.s32.totalorder %s89, %s90
      %p99 = scmp.eq.s32.totalorder %s32, 0
      %p100 = por %p98, %p99
      %p101 = scmp.ne.s32.totalorder %s89, %s90
      %p102 = scmp.eq.s32.totalorder %s33, 1
      %p103 = por %p101, %p102
      %p105 = scmp.ne.s32.totalorder %s90, %s104
      %p106 = scmp.eq.s32.totalorder %s33, 0
      %p107 = por %p105, %p106
      %s109 = sadd.s32 %s108, 1
      %p112 = scmp.eq.s32.totalorder %s27, 1
      %p113 = scmp.ne.s32.totalorder %s108, %s110
      %p114 = scmp.eq.s32.totalorder %s27, 0
      %p115 = por %p113, %p114
      %p116 = scmp.ne.s32.totalorder %s108, %s110
      %p117 = scmp.eq.s32.totalorder %s32, 1
      %p118 = por %p116, %p117
      %p119 = scmp.ne.s32.totalorder %s110, %s111
      %p120 = scmp.eq.s32.totalorder %s32, 0
      %p121 = por %p119, %p120
      %p122 = scmp.ne.s32.totalorder %s110, %s111
      %p123 = scmp.eq.s32.totalorder %s33, 1
      %p124 = por %p122, %p123
      %p126 = scmp.ne.s32.totalorder %s111, %s125
      %p127 = scmp.eq.s32.totalorder %s33, 0
      %p128 = por %p126, %p127
      %s130 = sadd.s32 %s129, 1
      %p133 = scmp.eq.s32.totalorder %s27, 1
      %p134 = scmp.ne.s32.totalorder %s129, %s131
      %p135 = scmp.eq.s32.totalorder %s27, 0
      %p136 = por %p134, %p135
      %p137 = scmp.ne.s32.totalorder %s129, %s131
      %p138 = scmp.eq.s32.totalorder %s32, 1
      %p139 = por %p137, %p138
      %p140 = scmp.ne.s32.totalorder %s131, %s132
      %p141 = scmp.eq.s32.totalorder %s32, 0
      %p142 = por %p140, %p141
      %p143 = scmp.ne.s32.totalorder %s131, %s132
      %p144 = scmp.eq.s32.totalorder %s33, 1
      %p145 = por %p143, %p144
      %p147 = scmp.ne.s32.totalorder %s132, %s146
      %p148 = scmp.eq.s32.totalorder %s33, 0
      %p149 = por %p147, %p148
      %s151 = sadd.s32 %s150, 1
      %p154 = scmp.eq.s32.totalorder %s27, 1
      %p155 = scmp.ne.s32.totalorder %s150, %s152
      %p156 = scmp.eq.s32.totalorder %s27, 0
      %p157 = por %p155, %p156
      %p158 = scmp.ne.s32.totalorder %s150, %s152
      %p159 = scmp.eq.s32.totalorder %s32, 1
      %p160 = por %p158, %p159
      %p161 = scmp.ne.s32.totalorder %s152, %s153
      %p162 = scmp.eq.s32.totalorder %s32, 0
      %p163 = por %p161, %p162
      %p164 = scmp.ne.s32.totalorder %s152, %s153
      %p165 = scmp.eq.s32.totalorder %s33, 1
      %p166 = por %p164, %p165
      %p168 = scmp.ne.s32.totalorder %s153, %s167
      %p169 = scmp.eq.s32.totalorder %s33, 0
      %p170 = por %p168, %p169
      %s172 = sadd.s32 %s171, 1
      %p175 = scmp.eq.s32.totalorder %s27, 1
      %p176 = scmp.ne.s32.totalorder %s171, %s173
      %p177 = scmp.eq.s32.totalorder %s27, 0
      %p178 = por %p176, %p177
      %p179 = scmp.ne.s32.totalorder %s171, %s173
      %p180 = scmp.eq.s32.totalorder %s32, 1
      %p181 = por %p179, %p180
      %p182 = scmp.ne.s32.totalorder %s173, %s174
      %p183 = scmp.eq.s32.totalorder %s32, 0
      %p184 = por %p182, %p183
      %p185 = scmp.ne.s32.totalorder %s173, %s174
      %p186 = scmp.eq.s32.totalorder %s33, 1
      %p187 = por %p185, %p186
      %p189 = scmp.ne.s32.totalorder %s174, %s188
      %p190 = scmp.eq.s32.totalorder %s33, 0
      %p191 = por %p189, %p190
      %s193 = sadd.s32 %s192, 1
      %p196 = scmp.eq.s32.totalorder %s27, 1
      %p197 = scmp.ne.s32.totalorder %s192, %s194
      %p198 = scmp.eq.s32.totalorder %s27, 0
      %p199 = por %p197, %p198
      %p200 = scmp.ne.s32.totalorder %s192, %s194
      %p201 = scmp.eq.s32.totalorder %s32, 1
      %p202 = por %p200, %p201
      %p203 = scmp.ne.s32.totalorder %s194, %s195
      %p204 = scmp.eq.s32.totalorder %s32, 0
      %p205 = por %p203, %p204
      %p206 = scmp.ne.s32.totalorder %s194, %s195
      %p207 = scmp.eq.s32.totalorder %s33, 1
      %p208 = por %p206, %p207
      %p210 = scmp.ne.s32.totalorder %s195, %s209
      %p211 = scmp.eq.s32.totalorder %s33, 0
      %p212 = por %p210, %p211
      %s214 = sadd.s32 %s213, 1
      %p217 = scmp.eq.s32.totalorder %s27, 1
      %p218 = scmp.ne.s32.totalorder %s213, %s215
      %p219 = scmp.eq.s32.totalorder %s27, 0
      %p220 = por %p218, %p219
      %p221 = scmp.ne.s32.totalorder %s213, %s215
      %p222 = scmp.eq.s32.totalorder %s32, 1
      %p223 = por %p221, %p222
      %p224 = scmp.ne.s32.totalorder %s215, %s216
      %p225 = scmp.eq.s32.totalorder %s32, 0
      %p226 = por %p224, %p225
      %p227 = scmp.ne.s32.totalorder %s215, %s216
      %p228 = scmp.eq.s32.totalorder %s33, 1
      %p229 = por %p227, %p228
      %p231 = scmp.ne.s32.totalorder %s216, %s230
      %p232 = scmp.eq.s32.totalorder %s33, 0
      %p233 = por %p231, %p232
      %s235 = sadd.s32 %s234, 1
      %p238 = scmp.eq.s32.totalorder %s27, 1
      %p239 = scmp.ne.s32.totalorder %s234, %s236
      %p240 = scmp.eq.s32.totalorder %s27, 0
      %p241 = por %p239, %p240
      %p242 = scmp.ne.s32.totalorder %s234, %s236
      %p243 = scmp.eq.s32.totalorder %s32, 1
      %p244 = por %p242, %p243
      %p245 = scmp.ne.s32.totalorder %s236, %s237
      %p246 = scmp.eq.s32.totalorder %s32, 0
      %p247 = por %p245, %p246
      %p248 = scmp.ne.s32.totalorder %s236, %s237
      %p249 = scmp.eq.s32.totalorder %s33, 1
      %p250 = por %p248, %p249
      %p252 = scmp.ne.s32.totalorder %s237, %s251
      %p253 = scmp.eq.s32.totalorder %s33, 0
      %p254 = por %p252, %p253
      %s256 = sadd.s32 %s255, 1
      %p259 = scmp.eq.s32.totalorder %s27, 1
      %p260 = scmp.ne.s32.totalorder %s255, %s257
      %p261 = scmp.eq.s32.totalorder %s27, 0
      %p262 = por %p260, %p261
      %p263 = scmp.ne.s32.totalorder %s255, %s257
      %p264 = scmp.eq.s32.totalorder %s32, 1
      %p265 = por %p263, %p264
      %p266 = scmp.ne.s32.totalorder %s257, %s258
      %p267 = scmp.eq.s32.totalorder %s32, 0
      %p268 = por %p266, %p267
      %p269 = scmp.ne.s32.totalorder %s257, %s258
      %p270 = scmp.eq.s32.totalorder %s33, 1
      %p271 = por %p269, %p270
      %p273 = scmp.ne.s32.totalorder %s258, %s272
      %p274 = scmp.eq.s32.totalorder %s33, 0
      %p275 = por %p273, %p274
      %s277 = sadd.s32 %s276, 1
      %p280 = scmp.eq.s32.totalorder %s27, 1
      %p281 = scmp.ne.s32.totalorder %s276, %s278
      %p282 = scmp.eq.s32.totalorder %s27, 0
      %p283 = por %p281, %p282
      %p284 = scmp.ne.s32.totalorder %s276, %s278
      %p285 = scmp.eq.s32.totalorder %s32, 1
      %p286 = por %p284, %p285
      %p287 = scmp.ne.s32.totalorder %s278, %s279
      %p288 = scmp.eq.s32.totalorder %s32, 0
      %p289 = por %p287, %p288
      %p290 = scmp.ne.s32.totalorder %s278, %s279
      %p291 = scmp.eq.s32.totalorder %s33, 1
      %p292 = por %p290, %p291
      %p294 = scmp.ne.s32.totalorder %s279, %s293
      %p295 = scmp.eq.s32.totalorder %s33, 0
      %p296 = por %p294, %p295
      %s298 = sadd.s32 %s297, 1
      %p301 = scmp.eq.s32.totalorder %s27, 1
      %p302 = scmp.ne.s32.totalorder %s297, %s299
      %p303 = scmp.eq.s32.totalorder %s27, 0
      %p304 = por %p302, %p303
      %p305 = scmp.ne.s32.totalorder %s297, %s299
      %p306 = scmp.eq.s32.totalorder %s32, 1
      %p307 = por %p305, %p306
      %p308 = scmp.ne.s32.totalorder %s299, %s300
      %p309 = scmp.eq.s32.totalorder %s32, 0
      %p310 = por %p308, %p309
      %p311 = scmp.ne.s32.totalorder %s299, %s300
      %p312 = scmp.eq.s32.totalorder %s33, 1
      %p313 = por %p311, %p312
      %p315 = scmp.ne.s32.totalorder %s300, %s314
      %p316 = scmp.eq.s32.totalorder %s33, 0
      %p317 = por %p315, %p316
      %s319 = sadd.s32 %s318, 1
      %p322 = scmp.eq.s32.totalorder %s27, 1
      %p323 = scmp.ne.s32.totalorder %s318, %s320
      %p324 = scmp.eq.s32.totalorder %s27, 0
      %p325 = por %p323, %p324
      %p326 = scmp.ne.s32.totalorder %s318, %s320
      %p327 = scmp.eq.s32.totalorder %s32, 1
      %p328 = por %p326, %p327
      %p329 = scmp.ne.s32.totalorder %s320, %s321
      %p330 = scmp.eq.s32.totalorder %s32, 0
      %p331 = por %p329, %p330
      %p332 = scmp.ne.s32.totalorder %s320, %s321
      %p333 = scmp.eq.s32.totalorder %s33, 1
      %p334 = por %p332, %p333
      %p336 = scmp.ne.s32.totalorder %s321, %s335
      %p337 = scmp.eq.s32.totalorder %s33, 0
      %p338 = por %p336, %p337
      %s340 = sadd.s32 %s339, 1
      %p343 = scmp.eq.s32.totalorder %s27, 1
      %p344 = scmp.ne.s32.totalorder %s339, %s341
      %p345 = scmp.eq.s32.totalorder %s27, 0
      %p346 = por %p344, %p345
      %p347 = scmp.ne.s32.totalorder %s339, %s341
      %p348 = scmp.eq.s32.totalorder %s32, 1
      %p349 = por %p347, %p348
      %p350 = scmp.ne.s32.totalorder %s341, %s342
      %p351 = scmp.eq.s32.totalorder %s32, 0
      %p352 = por %p350, %p351
      %p353 = scmp.ne.s32.totalorder %s341, %s342
      %p354 = scmp.eq.s32.totalorder %s33, 1
      %p355 = por %p353, %p354
      %p357 = scmp.ne.s32.totalorder %s342, %s356
      %p358 = scmp.eq.s32.totalorder %s33, 0
      %p359 = por %p357, %p358
      %s361 = sadd.s32 %s360, 1
      %p364 = scmp.eq.s32.totalorder %s27, 1
      %p365 = scmp.ne.s32.totalorder %s360, %s362
      %p366 = scmp.eq.s32.totalorder %s27, 0
      %p367 = por %p365, %p366
      %p368 = scmp.ne.s32.totalorder %s360, %s362
      %p369 = scmp.eq.s32.totalorder %s32, 1
      %p370 = por %p368, %p369
      %p371 = scmp.ne.s32.totalorder %s362, %s363
      %p372 = scmp.eq.s32.totalorder %s32, 0
      %p373 = por %p371, %p372
      %p374 = scmp.ne.s32.totalorder %s362, %s363
      %p375 = scmp.eq.s32.totalorder %s33, 1
      %p376 = por %p374, %p375
      %p378 = scmp.ne.s32.totalorder %s363, %s377
      %p379 = scmp.eq.s32.totalorder %s33, 0
      %p380 = por %p378, %p379
      %s382 = sadd.s32 %s381, 1
      %p385 = scmp.eq.s32.totalorder %s27, 1
      %p386 = scmp.ne.s32.totalorder %s381, %s383
      %p387 = scmp.eq.s32.totalorder %s27, 0
      %p388 = por %p386, %p387
      %p389 = scmp.ne.s32.totalorder %s381, %s383
      %p390 = scmp.eq.s32.totalorder %s32, 1
      %p391 = por %p389, %p390
      %p392 = scmp.ne.s32.totalorder %s383, %s384
      %p393 = scmp.eq.s32.totalorder %s32, 0
      %p394 = por %p392, %p393
      %p395 = scmp.ne.s32.totalorder %s383, %s384
      %p396 = scmp.eq.s32.totalorder %s33, 1
      %p397 = por %p395, %p396
      %p399 = scmp.ne.s32.totalorder %s384, %s398
      %p400 = scmp.eq.s32.totalorder %s33, 0
      %p401 = por %p399, %p400
      %s403 = sadd.s32 %s402, 1
      %p406 = scmp.eq.s32.totalorder %s27, 1
      %p407 = scmp.ne.s32.totalorder %s402, %s404
      %p408 = scmp.eq.s32.totalorder %s27, 0
      %p409 = por %p407, %p408
      %p410 = scmp.ne.s32.totalorder %s402, %s404
      %p411 = scmp.eq.s32.totalorder %s32, 1
      %p412 = por %p410, %p411
      %p413 = scmp.ne.s32.totalorder %s404, %s405
      %p414 = scmp.eq.s32.totalorder %s32, 0
      %p415 = por %p413, %p414
      %p416 = scmp.ne.s32.totalorder %s404, %s405
      %p417 = scmp.eq.s32.totalorder %s33, 1
      %p418 = por %p416, %p417
      %p420 = scmp.ne.s32.totalorder %s405, %s419
      %p421 = scmp.eq.s32.totalorder %s33, 0
      %p422 = por %p420, %p421
      %s423 = ssub.s32 %s27, %s34
      %p424 = scmp.eq.s32.totalorder %s423, 0
      %s426 = sadd.s32 %s425, 1
      %s427 = scalar_select %p424, %s425, %s426
      %p430 = pneg %p424
      %p431 = scmp.eq.s32.totalorder %s27, 1
      %p432 = por %p430, %p431
      %p433 = scmp.ne.s32.totalorder %s425, %s428
      %p434 = scmp.eq.s32.totalorder %s27, 0
      %p435 = por %p433, %p434
      %p436 = scmp.ne.s32.totalorder %s425, %s428
      %p437 = scmp.eq.s32.totalorder %s32, 1
      %p438 = por %p436, %p437
      %p439 = scmp.ne.s32.totalorder %s428, %s429
      %p440 = scmp.eq.s32.totalorder %s32, 0
      %p441 = por %p439, %p440
      %p442 = scmp.ne.s32.totalorder %s428, %s429
      %p443 = scmp.eq.s32.totalorder %s33, 1
      %p444 = por %p442, %p443
      %p446 = scmp.ne.s32.totalorder %s429, %s445
      %p447 = scmp.eq.s32.totalorder %s33, 0
      %p448 = por %p446, %p447
      %p449 = scmp.le.s32.totalorder 1, %s27
      %p450 = scmp.lt.s32.totalorder %s27, 3
      %p451 = pnand %p449, %p450
      %p452 = pneg %p451
      // Predicated region
      $region9: #{simcse_forward.1} parent=5 // pred_check
        _
      $region10: #{simcse_forward.1} parent=5 // pred_check_branch
        %454 = sbr.rel (%p451) target = $region12
      $region11: #{simcse_forward.1} parent=5 // pred_region
        %s455 = ssub.s32 %s27, 1
        // Predicated region
        $region13: #{simcse_forward.1} parent=11 // pred_check
          %p456 = pneg %p100
        $region14: #{simcse_forward.1} parent=11 // pred_check_branch
          %458 = sbr.rel (%p456) target = $region16
        $region15: #{simcse_forward.1} parent=11 // pred_region
          _
        $region16: #{simcse_forward.1} parent=11 // pred_fallthru
          _
        // Predicated region
        $region17: #{simcse_forward.1} parent=11 // pred_check
          %p459 = pneg %p121
        $region18: #{simcse_forward.1} parent=11 // pred_check_branch
          %461 = sbr.rel (%p459) target = $region20
        $region19: #{simcse_forward.1} parent=11 // pred_region
          _
        $region20: #{simcse_forward.1} parent=11 // pred_fallthru
          _
        // Predicated region
        $region21: #{simcse_forward.1} parent=11 // pred_check
          %p462 = pneg %p142
        $region22: #{simcse_forward.1} parent=11 // pred_check_branch
          %464 = sbr.rel (%p462) target = $region24
        $region23: #{simcse_forward.1} parent=11 // pred_region
          _
        $region24: #{simcse_forward.1} parent=11 // pred_fallthru
          _
        // Predicated region
        $region25: #{simcse_forward.1} parent=11 // pred_check
          %p465 = pneg %p163
        $region26: #{simcse_forward.1} parent=11 // pred_check_branch
          %467 = sbr.rel (%p465) target = $region28
        $region27: #{simcse_forward.1} parent=11 // pred_region
          _
        $region28: #{simcse_forward.1} parent=11 // pred_fallthru
          _
        // Predicated region
        $region29: #{simcse_forward.1} parent=11 // pred_check
          %p468 = pneg %p184
        $region30: #{simcse_forward.1} parent=11 // pred_check_branch
          %470 = sbr.rel (%p468) target = $region32
        $region31: #{simcse_forward.1} parent=11 // pred_region
          _
        $region32: #{simcse_forward.1} parent=11 // pred_fallthru
          _
        // Predicated region
        $region33: #{simcse_forward.1} parent=11 // pred_check
          %p471 = pneg %p205
        $region34: #{simcse_forward.1} parent=11 // pred_check_branch
          %473 = sbr.rel (%p471) target = $region36
        $region35: #{simcse_forward.1} parent=11 // pred_region
          _
        $region36: #{simcse_forward.1} parent=11 // pred_fallthru
          _
        // Predicated region
        $region37: #{simcse_forward.1} parent=11 // pred_check
          %p474 = pneg %p226
        $region38: #{simcse_forward.1} parent=11 // pred_check_branch
          %476 = sbr.rel (%p474) target = $region40
        $region39: #{simcse_forward.1} parent=11 // pred_region
          _
        $region40: #{simcse_forward.1} parent=11 // pred_fallthru
          _
        // Predicated region
        $region41: #{simcse_forward.1} parent=11 // pred_check
          %p477 = pneg %p247
        $region42: #{simcse_forward.1} parent=11 // pred_check_branch
          %479 = sbr.rel (%p477) target = $region44
        $region43: #{simcse_forward.1} parent=11 // pred_region
          _
        $region44: #{simcse_forward.1} parent=11 // pred_fallthru
          _
        // Predicated region
        $region45: #{simcse_forward.1} parent=11 // pred_check
          %p480 = pneg %p268
        $region46: #{simcse_forward.1} parent=11 // pred_check_branch
          %482 = sbr.rel (%p480) target = $region48
        $region47: #{simcse_forward.1} parent=11 // pred_region
          _
        $region48: #{simcse_forward.1} parent=11 // pred_fallthru
          _
        // Predicated region
        $region49: #{simcse_forward.1} parent=11 // pred_check
          %p483 = pneg %p289
        $region50: #{simcse_forward.1} parent=11 // pred_check_branch
          %485 = sbr.rel (%p483) target = $region52
        $region51: #{simcse_forward.1} parent=11 // pred_region
          _
        $region52: #{simcse_forward.1} parent=11 // pred_fallthru
          _
        // Predicated region
        $region53: #{simcse_forward.1} parent=11 // pred_check
          %p486 = pneg %p310
        $region54: #{simcse_forward.1} parent=11 // pred_check_branch
          %488 = sbr.rel (%p486) target = $region56
        $region55: #{simcse_forward.1} parent=11 // pred_region
          _
        $region56: #{simcse_forward.1} parent=11 // pred_fallthru
          _
        // Predicated region
        $region57: #{simcse_forward.1} parent=11 // pred_check
          %p489 = pneg %p331
        $region58: #{simcse_forward.1} parent=11 // pred_check_branch
          %491 = sbr.rel (%p489) target = $region60
        $region59: #{simcse_forward.1} parent=11 // pred_region
          _
        $region60: #{simcse_forward.1} parent=11 // pred_fallthru
          _
        // Predicated region
        $region61: #{simcse_forward.1} parent=11 // pred_check
          %p492 = pneg %p352
        $region62: #{simcse_forward.1} parent=11 // pred_check_branch
          %494 = sbr.rel (%p492) target = $region64
        $region63: #{simcse_forward.1} parent=11 // pred_region
          _
        $region64: #{simcse_forward.1} parent=11 // pred_fallthru
          _
        // Predicated region
        $region65: #{simcse_forward.1} parent=11 // pred_check
          %p495 = pneg %p373
        $region66: #{simcse_forward.1} parent=11 // pred_check_branch
          %497 = sbr.rel (%p495) target = $region68
        $region67: #{simcse_forward.1} parent=11 // pred_region
          _
        $region68: #{simcse_forward.1} parent=11 // pred_fallthru
          _
        // Predicated region
        $region69: #{simcse_forward.1} parent=11 // pred_check
          %p498 = pneg %p394
        $region70: #{simcse_forward.1} parent=11 // pred_check_branch
          %500 = sbr.rel (%p498) target = $region72
        $region71: #{simcse_forward.1} parent=11 // pred_region
          _
        $region72: #{simcse_forward.1} parent=11 // pred_fallthru
          _
        // Predicated region
        $region73: #{simcse_forward.1} parent=11 // pred_check
          %p501 = pneg %p415
        $region74: #{simcse_forward.1} parent=11 // pred_check_branch
          %503 = sbr.rel (%p501) target = $region76
        $region75: #{simcse_forward.1} parent=11 // pred_region
          _
        $region76: #{simcse_forward.1} parent=11 // pred_fallthru
          _
      $region12: #{simcse_forward.1} parent=5 // pred_fallthru
        _
      %p504 = scmp.lt.s32.totalorder %s27, 2
      // Predicated region
      $region77: #{simcse_forward.1} parent=5 // pred_check
        %p505 = pneg %p504
      $region78: #{simcse_forward.1} parent=5 // pred_check_branch
        %507 = sbr.rel (%p505) target = $region80
      $region79: #{simcse_forward.1} parent=5 // pred_region
        // Predicated region
        $region81: #{simcse_forward.1} parent=79 // pred_check
          %p508 = pneg %p47
        $region82: #{simcse_forward.1} parent=79 // pred_check_branch
          %510 = sbr.rel (%p508) target = $region84
        $region83: #{simcse_forward.1} parent=79 // pred_region
          %p511 = scmp.lt.s32.totalorder %s27, 1
          %s512 = scalar_select %p511, %s27, 1
          %s513 = smul.addr %s512, 8
          %s514 = scalar_lea.vmem %s0, %s513
        $region84: #{simcse_forward.1} parent=79 // pred_fallthru
          _
        // Predicated region
        $region85: #{simcse_forward.1} parent=79 // pred_check
          %p515 = pneg %p73
        $region86: #{simcse_forward.1} parent=79 // pred_check_branch
          %517 = sbr.rel (%p515) target = $region88
        $region87: #{simcse_forward.1} parent=79 // pred_region
          %p518 = scmp.lt.s32.totalorder %s27, 1
          %s519 = scalar_select %p518, %s27, 1
          %s520 = smul.addr %s519, 8
          %s521 = scalar_lea.vmem %s1, %s520
        $region88: #{simcse_forward.1} parent=79 // pred_fallthru
          _
      $region80: #{simcse_forward.1} parent=5 // pred_fallthru
        _
      %p522 = scmp.le.s32.totalorder 1, %s27
      %p523 = scmp.lt.s32.totalorder %s27, 3
      %p524 = pnand %p522, %p523
      %p525 = pneg %p524
      // Predicated region
      $region89: #{simcse_forward.1} parent=5 // pred_check
        _
      $region90: #{simcse_forward.1} parent=5 // pred_check_branch
        %527 = sbr.rel (%p524) target = $region92
      $region91: #{simcse_forward.1} parent=5 // pred_region
        %s528 = ssub.s32 %s27, 1
        %p529 = scmp.lt.s32.totalorder %s32, 1
        %s530 = scalar_select %p529, %s32, 1
        %s531 = smul.addr %s530, 8
        %s532 = scalar_lea.vmem %s0, %s531
        %p533 = pneg %p53
        %p534 = pneg %p50
        %p535 = scmp.lt.s32.totalorder %s32, 1
        %s536 = scalar_select %p535, %s32, 1
        %s537 = smul.addr %s536, 8
        %s538 = scalar_lea.vmem %s1, %s537
        %p539 = pneg %p79
        %p540 = pneg %p76
        %p541 = pneg %p100
        %p542 = pneg %p97
        %p543 = pneg %p121
        %p544 = pneg %p118
        %p545 = pneg %p142
        %p546 = pneg %p139
        %p547 = pneg %p163
        %p548 = pneg %p160
        %p549 = pneg %p184
        %p550 = pneg %p181
        %p551 = pneg %p205
        %p552 = pneg %p202
        %p553 = pneg %p226
        %p554 = pneg %p223
        %p555 = pneg %p247
        %p556 = pneg %p244
        %p557 = pneg %p268
        %p558 = pneg %p265
        %p559 = pneg %p289
        %p560 = pneg %p286
        %p561 = pneg %p310
        %p562 = pneg %p307
        %p563 = pneg %p331
        %p564 = pneg %p328
        %p565 = pneg %p352
        %p566 = pneg %p349
        %p567 = pneg %p373
        %p568 = pneg %p370
        %p569 = pneg %p394
        %p570 = pneg %p391
        %p571 = pneg %p415
        %p572 = pneg %p412
        %p573 = pneg %p441
        %p574 = pneg %p438
        %s575 = sand.u32 %s428, 1
        %s576 = scalar_lea.sflag [#allocation3], %s575
        %s577 = sand.u32 %s428, 1
        %s578 = scalar_lea.vmem [#allocation2], %s577
        %p579 = scmp.lt.s32.totalorder %s32, 1
        %s580 = scalar_select %p579, %s32, 1
        %s581 = smul.addr %s580, 8
        %s582 = scalar_lea.vmem %s0, %s581
        %p583 = scmp.lt.s32.totalorder %s32, 1
        %s584 = scalar_select %p583, %s32, 1
        %s585 = smul.addr %s584, 8
        %s586 = scalar_lea.vmem %s1, %s585
        %v588 = vld [vmem:[%s582] sm:$0xff]
        %v589 = vld [vmem:[%s2] sm:$0x1]
        %v590 = vld [vmem:[%s3] sm:$0x1]
        %vm591 = vcmask 261120
        %v592 = vsel %vm591, %v588, 0.0
        %593 = vadd.xlane.f32.xlu0 %v592
        %v594 = vpop.xlane.xlu0 %593
        %v595 = vrcp.pop 32.0
        %v596 = vmul.f32 %v594, %v595
        %v597 = vsub.f32 %v588, %v596
        %v598 = vmul.f32 %v597, %v597
        %v599 = vsel %vm591, %v598, 0.0
        %600 = vadd.xlane.f32.xlu0 %v599
        %v601 = vpop.xlane.xlu0 %600
        %v602 = vmul.f32 %v601, %v595
        %v603 = vadd.f32 %v602, 1e-12
        %v604 = vrsqrt.pop %v603
        %v605 = vmul.f32 %v597, %v604
        %v607 = vlaneseq
        %v608 = vshrl.u32 %v607, 7
        %v609 = vsub.s32 0, %v608
        %v610 = vrot.slane %v589, %v609
        %v612 = vmul.f32 %v605, %v610
        %v614 = vlaneseq
        %v615 = vshrl.u32 %v614, 7
        %v616 = vsub.s32 0, %v615
        %v617 = vrot.slane %v590, %v616
        %v619 = vadd.f32 %v612, %v617
        %v620 = vld [vmem:[%s586] sm:$0xff]
        %v621 = vsub.f32 1.0, %v620
        %v622 = vmul.f32 %v621, -10000.0
        %v623 = vld [vmem:[%s4] sm:$0xf]
        %v624 = vld [vmem:[%s4 + $0x4] sm:$0xf]
        %v625 = vld [vmem:[%s4 + $0x8] sm:$0xf]
        %v626 = vld [vmem:[%s4 + $0xc] sm:$0xf]
        %v627 = vpack.c.bf16 %v619, %v619
        %v628 = vld [vmem:[%s5] sm:$0x1]
        %v630 = vlaneseq
        %v631 = vshrl.u32 %v630, 7
        %v632 = vsub.s32 0, %v631
        %v633 = vrot.slane %v628, %v632
        %v639 = vunpack.c.l.b16 %v623
        %v640 = vunpack.c.l.b16 %v624
        %v641 = vunpack.c.l.b16 %v625
        %v642 = vunpack.c.l.b16 %v626
        %v643 = vpack.c.b16 %v640, %v639
        %v644 = vpack.c.b16 %v642, %v641
        %v648 = vsel %vm591, %v627, 0
        %650 = vmatprep.subr.bf16.mxu0 0
        %651 = vmatpush1.bf16.msra.mxu0 %v643
        %652 = vmatprep.subr.bf16.mxu0 0
        %653 = vmatpush1.bf16.msra.mxu0 %v644
        %654 = vmatprep.subr.bf16.mxu0 0
        %655 = vmatpush1.bf16.msra.mxu0 0
        %656 = vmatprep.subr.bf16.mxu0 0
        %657 = vmatpush1.bf16.msra.mxu0 0
        %658 = vmatprep.subr.bf16.mxu0 0
        %659 = vmatpush1.bf16.msra.mxu0 0
        %660 = vmatprep.subr.bf16.mxu0 0
        %661 = vmatpush1.bf16.msra.mxu0 0
        %662 = vmatprep.subr.bf16.mxu0 0
        %663 = vmatpush1.bf16.msra.mxu0 0
        %664 = vmatprep.subr.bf16.mxu0 0
        %665 = vmatpush1.bf16.msra.mxu0 0
        %666 = vmatprep.subr.bf16.mxu0 0
        %667 = vmatpush1.bf16.msra.mxu0 0
        %668 = vmatprep.subr.bf16.mxu0 0
        %669 = vmatpush1.bf16.msra.mxu0 0
        %670 = vmatprep.subr.bf16.mxu0 0
        %671 = vmatpush1.bf16.msra.mxu0 0
        %672 = vmatprep.subr.bf16.mxu0 0
        %673 = vmatpush1.bf16.msra.mxu0 0
        %674 = vmatprep.subr.bf16.mxu0 0
        %675 = vmatpush1.bf16.msra.mxu0 0
        %676 = vmatprep.subr.bf16.mxu0 0
        %677 = vmatpush1.bf16.msra.mxu0 0
        %678 = vmatprep.subr.bf16.mxu0 0
        %679 = vmatpush1.bf16.msra.mxu0 0
        %680 = vmatprep.subr.bf16.mxu0 0
        %681 = vmatpush1.bf16.msra.mxu0 0
        %682 = vmatprep.mubr.bf16.mxu0 0
        %683 = vmatmul.mubr.bf16.gmra.mrb[0].mxu0 %v648
        %v684 = vpop.f32.mrb[0].mxu0
        %v685 = vadd.f32 %v633, %v684
        %v686 = vpop.f32.mrb[0].mxu0
        %v687 = vpop.f32.mrb[0].mxu0
        %v688 = vpop.f32.mrb[0].mxu0
        %689 = vdwg.mxu0
        %691 = vrot.lane.b32.xlu0 %v685, 120
        %v692 = vpop.permute.xlu0 %691
        %694 = vrot.lane.b32.xlu0 %v685, 112
        %v695 = vpop.permute.xlu0 %694
        %697 = vrot.lane.b32.xlu0 %v685, 104
        %v698 = vpop.permute.xlu0 %697
        %700 = vrot.lane.b32.xlu0 %v685, 96
        %v701 = vpop.permute.xlu0 %700
        %703 = vrot.lane.b32.xlu0 %v685, 88
        %v704 = vpop.permute.xlu0 %703
        %706 = vrot.lane.b32.xlu0 %v685, 80
        %v707 = vpop.permute.xlu0 %706
        %709 = vrot.lane.b32.xlu0 %v685, 72
        %v710 = vpop.permute.xlu0 %709
        %712 = vrot.lane.b32.xlu0 %v685, 64
        %v713 = vpop.permute.xlu0 %712
        %715 = vrot.lane.b32.xlu0 %v685, 56
        %v716 = vpop.permute.xlu0 %715
        %718 = vrot.lane.b32.xlu0 %v685, 48
        %v719 = vpop.permute.xlu0 %718
        %721 = vrot.lane.b32.xlu0 %v685, 40
        %v722 = vpop.permute.xlu0 %721
        %v724 = vcombine.low %v685, %v695
        %v725 = vcombine.high %v685, %v695
        %v727 = vunpack.c.l.s4 1983009808
        %v728 = vunpack.c.0.s8 %v727
        %v729 = vlaneseq
        %v730 = vshrl.u32 %v729, 7
        %v731 = vsub.s32 %v728, %v730
        %v732 = vrot.slane %v724, %v731
        %v734 = vunpack.c.l.s4 1983009808
        %v735 = vunpack.c.0.s8 %v734
        %v736 = vlaneseq
        %v737 = vshrl.u32 %v736, 7
        %v738 = vsub.s32 %v735, %v737
        %v739 = vrot.slane %v725, %v738
        %v740 = vcombine.low %v692, %v698
        %v741 = vcombine.high %v692, %v698
        %v743 = vunpack.c.l.s4 1983009808
        %v744 = vunpack.c.0.s8 %v743
        %v745 = vlaneseq
        %v746 = vshrl.u32 %v745, 7
        %v747 = vsub.s32 %v744, %v746
        %v748 = vrot.slane %v740, %v747
        %v750 = vunpack.c.l.s4 1983009808
        %v751 = vunpack.c.0.s8 %v750
        %v752 = vlaneseq
        %v753 = vshrl.u32 %v752, 7
        %v754 = vsub.s32 %v751, %v753
        %v755 = vrot.slane %v741, %v754
        %v756 = vcombine.low %v701, %v707
        %v757 = vcombine.high %v701, %v707
        %v759 = vunpack.c.l.s4 1983009808
        %v760 = vunpack.c.0.s8 %v759
        %v761 = vlaneseq
        %v762 = vshrl.u32 %v761, 7
        %v763 = vsub.s32 %v760, %v762
        %v764 = vrot.slane %v756, %v763
        %v766 = vunpack.c.l.s4 1983009808
        %v767 = vunpack.c.0.s8 %v766
        %v768 = vlaneseq
        %v769 = vshrl.u32 %v768, 7
        %v770 = vsub.s32 %v767, %v769
        %v771 = vrot.slane %v757, %v770
        %v772 = vcombine.low %v704, %v710
        %v773 = vcombine.high %v704, %v710
        %v775 = vunpack.c.l.s4 1983009808
        %v776 = vunpack.c.0.s8 %v775
        %v777 = vlaneseq
        %v778 = vshrl.u32 %v777, 7
        %v779 = vsub.s32 %v776, %v778
        %v780 = vrot.slane %v772, %v779
        %v782 = vunpack.c.l.s4 1983009808
        %v783 = vunpack.c.0.s8 %v782
        %v784 = vlaneseq
        %v785 = vshrl.u32 %v784, 7
        %v786 = vsub.s32 %v783, %v785
        %v787 = vrot.slane %v773, %v786
        %v788 = vcombine.low %v732, %v748
        %v789 = vcombine.high %v732, %v748
        %v791 = vunpack.c.l.s4 1934713408
        %v792 = vunpack.c.0.s8 %v791
        %v793 = vlaneseq
        %v794 = vshrl.u32 %v793, 7
        %v795 = vsub.s32 %v792, %v794
        %v796 = vrot.slane %v788, %v795
        %v798 = vunpack.c.l.s4 1934713408
        %v799 = vunpack.c.0.s8 %v798
        %v800 = vlaneseq
        %v801 = vshrl.u32 %v800, 7
        %v802 = vsub.s32 %v799, %v801
        %v803 = vrot.slane %v789, %v802
        %v804 = vcombine.low %v739, %v755
        %v805 = vcombine.high %v739, %v755
        %v807 = vunpack.c.l.s4 1934713408
        %v808 = vunpack.c.0.s8 %v807
        %v809 = vlaneseq
        %v810 = vshrl.u32 %v809, 7
        %v811 = vsub.s32 %v808, %v810
        %v812 = vrot.slane %v804, %v811
        %v814 = vunpack.c.l.s4 1934713408
        %v815 = vunpack.c.0.s8 %v814
        %v816 = vlaneseq
        %v817 = vshrl.u32 %v816, 7
        %v818 = vsub.s32 %v815, %v817
        %v819 = vrot.slane %v805, %v818
        %v820 = vcombine.low %v764, %v780
        %v821 = vcombine.high %v764, %v780
        %v823 = vunpack.c.l.s4 1934713408
        %v824 = vunpack.c.0.s8 %v823
        %v825 = vlaneseq
        %v826 = vshrl.u32 %v825, 7
        %v827 = vsub.s32 %v824, %v826
        %v828 = vrot.slane %v820, %v827
        %v830 = vunpack.c.l.s4 1934713408
        %v831 = vunpack.c.0.s8 %v830
        %v832 = vlaneseq
        %v833 = vshrl.u32 %v832, 7
        %v834 = vsub.s32 %v831, %v833
        %v835 = vrot.slane %v821, %v834
        %v836 = vcombine.low %v771, %v787
        %v837 = vcombine.high %v771, %v787
        %v839 = vunpack.c.l.s4 1934713408
        %v840 = vunpack.c.0.s8 %v839
        %v841 = vlaneseq
        %v842 = vshrl.u32 %v841, 7
        %v843 = vsub.s32 %v840, %v842
        %v844 = vrot.slane %v836, %v843
        %v846 = vunpack.c.l.s4 1934713408
        %v847 = vunpack.c.0.s8 %v846
        %v848 = vlaneseq
        %v849 = vshrl.u32 %v848, 7
        %v850 = vsub.s32 %v847, %v849
        %v851 = vrot.slane %v837, %v850
        %v852 = vcombine.low %v796, %v828
        %v853 = vcombine.high %v796, %v828
        %v854 = vcombine.low %v803, %v835
        %v855 = vcombine.high %v803, %v835
        %v856 = vcombine.low %v812, %v844
        %v857 = vcombine.high %v812, %v844
        %v858 = vcombine.low %v819, %v851
        %v859 = vcombine.high %v819, %v851
        %v860 = vcombine.low %v713, %v719
        %v861 = vcombine.high %v713, %v719
        %v863 = vunpack.c.l.s4 1983009808
        %v864 = vunpack.c.0.s8 %v863
        %v865 = vlaneseq
        %v866 = vshrl.u32 %v865, 7
        %v867 = vsub.s32 %v864, %v866
        %v868 = vrot.slane %v860, %v867
        %v870 = vunpack.c.l.s4 1983009808
        %v871 = vunpack.c.0.s8 %v870
        %v872 = vlaneseq
        %v873 = vshrl.u32 %v872, 7
        %v874 = vsub.s32 %v871, %v873
        %v875 = vrot.slane %v861, %v874
        %v876 = vcombine.low %v716, %v722
        %v877 = vcombine.high %v716, %v722
        %v879 = vunpack.c.l.s4 1983009808
        %v880 = vunpack.c.0.s8 %v879
        %v881 = vlaneseq
        %v882 = vshrl.u32 %v881, 7
        %v883 = vsub.s32 %v880, %v882
        %v884 = vrot.slane %v876, %v883
        %v886 = vunpack.c.l.s4 1983009808
        %v887 = vunpack.c.0.s8 %v886
        %v888 = vlaneseq
        %v889 = vshrl.u32 %v888, 7
        %v890 = vsub.s32 %v887, %v889
        %v891 = vrot.slane %v877, %v890
        %v892 = vcombine.low %v868, %v884
        %v893 = vcombine.high %v868, %v884
        %v895 = vunpack.c.l.s4 1934713408
        %v896 = vunpack.c.0.s8 %v895
        %v897 = vlaneseq
        %v898 = vshrl.u32 %v897, 7
        %v899 = vsub.s32 %v896, %v898
        %v900 = vrot.slane %v892, %v899
        %v902 = vunpack.c.l.s4 1934713408
        %v903 = vunpack.c.0.s8 %v902
        %v904 = vlaneseq
        %v905 = vshrl.u32 %v904, 7
        %v906 = vsub.s32 %v903, %v905
        %v907 = vrot.slane %v893, %v906
        %v908 = vcombine.low %v875, %v891
        %v909 = vcombine.high %v875, %v891
        %v911 = vunpack.c.l.s4 1934713408
        %v912 = vunpack.c.0.s8 %v911
        %v913 = vlaneseq
        %v914 = vshrl.u32 %v913, 7
        %v915 = vsub.s32 %v912, %v914
        %v916 = vrot.slane %v908, %v915
        %v918 = vunpack.c.l.s4 1934713408
        %v919 = vunpack.c.0.s8 %v918
        %v920 = vlaneseq
        %v921 = vshrl.u32 %v920, 7
        %v922 = vsub.s32 %v919, %v921
        %v923 = vrot.slane %v909, %v922
        %v924 = vcombine.high %v900, 0.0
        %v925 = vcombine.high %v907, 0.0
        %v926 = vcombine.high %v916, 0.0
        %v927 = vcombine.high %v923, 0.0
        %v928 = vcombine.low %v852, %v854
        %v929 = vcombine.high %v852, %v854
        %v931 = vunpack.c.l.s4 1983009808
        %v932 = vunpack.c.0.s8 %v931
        %v933 = vlaneseq
        %v934 = vshrl.u32 %v933, 7
        %v935 = vsub.s32 %v932, %v934
        %v936 = vrot.slane %v928, %v935
        %v938 = vunpack.c.l.s4 1983009808
        %v939 = vunpack.c.0.s8 %v938
        %v940 = vlaneseq
        %v941 = vshrl.u32 %v940, 7
        %v942 = vsub.s32 %v939, %v941
        %v943 = vrot.slane %v929, %v942
        %v944 = vcombine.low %v853, %v855
        %v945 = vcombine.high %v853, %v855
        %v947 = vunpack.c.l.s4 1983009808
        %v948 = vunpack.c.0.s8 %v947
        %v949 = vlaneseq
        %v950 = vshrl.u32 %v949, 7
        %v951 = vsub.s32 %v948, %v950
        %v952 = vrot.slane %v944, %v951
        %v954 = vunpack.c.l.s4 1983009808
        %v955 = vunpack.c.0.s8 %v954
        %v956 = vlaneseq
        %v957 = vshrl.u32 %v956, 7
        %v958 = vsub.s32 %v955, %v957
        %v959 = vrot.slane %v945, %v958
        %v960 = vcombine.low %v856, %v858
        %v961 = vcombine.high %v856, %v858
        %v963 = vunpack.c.l.s4 1983009808
        %v964 = vunpack.c.0.s8 %v963
        %v965 = vlaneseq
        %v966 = vshrl.u32 %v965, 7
        %v967 = vsub.s32 %v964, %v966
        %v968 = vrot.slane %v960, %v967
        %v970 = vunpack.c.l.s4 1983009808
        %v971 = vunpack.c.0.s8 %v970
        %v972 = vlaneseq
        %v973 = vshrl.u32 %v972, 7
        %v974 = vsub.s32 %v971, %v973
        %v975 = vrot.slane %v961, %v974
        %v976 = vcombine.low %v857, %v859
        %v977 = vcombine.high %v857, %v859
        %v979 = vunpack.c.l.s4 1983009808
        %v980 = vunpack.c.0.s8 %v979
        %v981 = vlaneseq
        %v982 = vshrl.u32 %v981, 7
        %v983 = vsub.s32 %v980, %v982
        %v984 = vrot.slane %v976, %v983
        %v986 = vunpack.c.l.s4 1983009808
        %v987 = vunpack.c.0.s8 %v986
        %v988 = vlaneseq
        %v989 = vshrl.u32 %v988, 7
        %v990 = vsub.s32 %v987, %v989
        %v991 = vrot.slane %v977, %v990
        %v992 = vcombine.low %v936, %v952
        %v993 = vcombine.high %v936, %v952
        %v995 = vunpack.c.l.s4 1934713408
        %v996 = vunpack.c.0.s8 %v995
        %v997 = vlaneseq
        %v998 = vshrl.u32 %v997, 7
        %v999 = vsub.s32 %v996, %v998
        %v1000 = vrot.slane %v992, %v999
        %v1002 = vunpack.c.l.s4 1934713408
        %v1003 = vunpack.c.0.s8 %v1002
        %v1004 = vlaneseq
        %v1005 = vshrl.u32 %v1004, 7
        %v1006 = vsub.s32 %v1003, %v1005
        %v1007 = vrot.slane %v993, %v1006
        %v1008 = vcombine.low %v943, %v959
        %v1009 = vcombine.high %v943, %v959
        %v1011 = vunpack.c.l.s4 1934713408
        %v1012 = vunpack.c.0.s8 %v1011
        %v1013 = vlaneseq
        %v1014 = vshrl.u32 %v1013, 7
        %v1015 = vsub.s32 %v1012, %v1014
        %v1016 = vrot.slane %v1008, %v1015
        %v1018 = vunpack.c.l.s4 1934713408
        %v1019 = vunpack.c.0.s8 %v1018
        %v1020 = vlaneseq
        %v1021 = vshrl.u32 %v1020, 7
        %v1022 = vsub.s32 %v1019, %v1021
        %v1023 = vrot.slane %v1009, %v1022
        %v1024 = vcombine.low %v968, %v984
        %v1025 = vcombine.high %v968, %v984
        %v1027 = vunpack.c.l.s4 1934713408
        %v1028 = vunpack.c.0.s8 %v1027
        %v1029 = vlaneseq
        %v1030 = vshrl.u32 %v1029, 7
        %v1031 = vsub.s32 %v1028, %v1030
        %v1032 = vrot.slane %v1024, %v1031
        %v1034 = vunpack.c.l.s4 1934713408
        %v1035 = vunpack.c.0.s8 %v1034
        %v1036 = vlaneseq
        %v1037 = vshrl.u32 %v1036, 7
        %v1038 = vsub.s32 %v1035, %v1037
        %v1039 = vrot.slane %v1025, %v1038
        %v1040 = vcombine.low %v975, %v991
        %v1041 = vcombine.high %v975, %v991
        %v1043 = vunpack.c.l.s4 1934713408
        %v1044 = vunpack.c.0.s8 %v1043
        %v1045 = vlaneseq
        %v1046 = vshrl.u32 %v1045, 7
        %v1047 = vsub.s32 %v1044, %v1046
        %v1048 = vrot.slane %v1040, %v1047
        %v1050 = vunpack.c.l.s4 1934713408
        %v1051 = vunpack.c.0.s8 %v1050
        %v1052 = vlaneseq
        %v1053 = vshrl.u32 %v1052, 7
        %v1054 = vsub.s32 %v1051, %v1053
        %v1055 = vrot.slane %v1041, %v1054
        %v1056 = vcombine.low %v1000, %v1032
        %v1057 = vcombine.high %v1000, %v1032
        %v1058 = vcombine.low %v1007, %v1039
        %v1059 = vcombine.high %v1007, %v1039
        %v1060 = vcombine.low %v1016, %v1048
        %v1061 = vcombine.high %v1016, %v1048
        %v1062 = vcombine.low %v1023, %v1055
        %v1063 = vcombine.high %v1023, %v1055
        %v1064 = vcombine.low %v900, %v907
        %v1066 = vunpack.c.l.s4 1983009808
        %v1067 = vunpack.c.0.s8 %v1066
        %v1068 = vlaneseq
        %v1069 = vshrl.u32 %v1068, 7
        %v1070 = vsub.s32 %v1067, %v1069
        %v1071 = vrot.slane %v1064, %v1070
        %v1072 = vcombine.low %v924, %v925
        %v1074 = vunpack.c.l.s4 1983009808
        %v1075 = vunpack.c.0.s8 %v1074
        %v1076 = vlaneseq
        %v1077 = vshrl.u32 %v1076, 7
        %v1078 = vsub.s32 %v1075, %v1077
        %v1079 = vrot.slane %v1072, %v1078
        %v1080 = vcombine.low %v916, %v923
        %v1082 = vunpack.c.l.s4 1983009808
        %v1083 = vunpack.c.0.s8 %v1082
        %v1084 = vlaneseq
        %v1085 = vshrl.u32 %v1084, 7
        %v1086 = vsub.s32 %v1083, %v1085
        %v1087 = vrot.slane %v1080, %v1086
        %v1088 = vcombine.low %v926, %v927
        %v1090 = vunpack.c.l.s4 1983009808
        %v1091 = vunpack.c.0.s8 %v1090
        %v1092 = vlaneseq
        %v1093 = vshrl.u32 %v1092, 7
        %v1094 = vsub.s32 %v1091, %v1093
        %v1095 = vrot.slane %v1088, %v1094
        %v1096 = vcombine.low %v1071, %v1079
        %v1097 = vcombine.high %v1071, %v1079
        %v1099 = vunpack.c.l.s4 1934713408
        %v1100 = vunpack.c.0.s8 %v1099
        %v1101 = vlaneseq
        %v1102 = vshrl.u32 %v1101, 7
        %v1103 = vsub.s32 %v1100, %v1102
        %v1104 = vrot.slane %v1096, %v1103
        %v1106 = vunpack.c.l.s4 1934713408
        %v1107 = vunpack.c.0.s8 %v1106
        %v1108 = vlaneseq
        %v1109 = vshrl.u32 %v1108, 7
        %v1110 = vsub.s32 %v1107, %v1109
        %v1111 = vrot.slane %v1097, %v1110
        %v1112 = vcombine.low %v1087, %v1095
        %v1113 = vcombine.high %v1087, %v1095
        %v1115 = vunpack.c.l.s4 1934713408
        %v1116 = vunpack.c.0.s8 %v1115
        %v1117 = vlaneseq
        %v1118 = vshrl.u32 %v1117, 7
        %v1119 = vsub.s32 %v1116, %v1118
        %v1120 = vrot.slane %v1112, %v1119
        %v1122 = vunpack.c.l.s4 1934713408
        %v1123 = vunpack.c.0.s8 %v1122
        %v1124 = vlaneseq
        %v1125 = vshrl.u32 %v1124, 7
        %v1126 = vsub.s32 %v1123, %v1125
        %v1127 = vrot.slane %v1113, %v1126
        %v1128 = vcombine.low %v1104, %v1120
        %v1129 = vcombine.high %v1104, %v1120
        %v1130 = vcombine.low %v1111, %v1127
        %v1131 = vcombine.high %v1111, %v1127
        %v1132 = vpack.c.bf16 %v1056, %v1056
        %v1133 = vpack.c.bf16 %v1057, %v1057
        %v1134 = vpack.c.bf16 %v1058, %v1058
        %v1135 = vpack.c.bf16 %v1059, %v1059
        %v1136 = vpack.c.bf16 %v1060, %v1060
        %v1137 = vpack.c.bf16 %v1061, %v1061
        %v1138 = vpack.c.bf16 %v1062, %v1062
        %v1139 = vpack.c.bf16 %v1063, %v1063
        %v1140 = vpack.c.bf16 %v1128, %v1128
        %v1141 = vpack.c.bf16 %v1129, %v1129
        %v1142 = vpack.c.bf16 %v1130, %v1130
        %v1143 = vpack.c.bf16 %v1131, %v1131
        %1145 = vset.pattern.permute.xlu0 0
        %1146 = vperm.xlu0 %1145, %v622
        %v1147 = vpop.permute.xlu0 %1146
        %v1148 = vlaneseq
        %v1149 = vand.u32 %v1148, 127
        %v1150 = vlaneseq
        %v1151 = vshrl.u32 %v1150, 7
        %v1152 = vsub.s32 %v1149, %v1151
        %v1153 = vrot.slane %v1147, %v1152
        %vm1154 = vcmask 1042434
        %v1155 = vsel %vm1154, %v1153, %v1153
        %vm1156 = vcmask 1043459
        %v1157 = vsel %vm1156, %v1153, %v1155
        %vm1158 = vcmask 1044484
        %v1159 = vsel %vm1158, %v1153, %v1157
        %vm1160 = vcmask 1045509
        %v1161 = vsel %vm1160, %v1153, %v1159
        %vm1162 = vcmask 1046534
        %v1163 = vsel %vm1162, %v1153, %v1161
        %vm1164 = vcmask 1047559
        %v1165 = vsel %vm1164, %v1153, %v1163
        %vm1167 = vcmask 64512
        %v1169 = vsel %vm1167, %v1132, 0
        %v1172 = vsel %vm1167, %v1136, 0
        %1174 = vmatprep.subr.bf16.mxu0 0
        %1175 = vmatpush1.bf16.xpose.msra.mxu0 %v1172
        %1176 = vmatprep.subr.bf16.mxu0 0
        %1177 = vmatpush1.bf16.xpose.msra.mxu0 0
        %1178 = vmatprep.subr.bf16.mxu0 0
        %1179 = vmatpush1.bf16.xpose.msra.mxu0 0
        %1180 = vmatprep.subr.bf16.mxu0 0
        %1181 = vmatpush1.bf16.xpose.msra.mxu0 0
        %1182 = vmatprep.subr.bf16.mxu0 0
        %1183 = vmatpush1.bf16.xpose.msra.mxu0 0
        %1184 = vmatprep.subr.bf16.mxu0 0
        %1185 = vmatpush1.bf16.xpose.msra.mxu0 0
        %1186 = vmatprep.subr.bf16.mxu0 0
        %1187 = vmatpush1.bf16.xpose.msra.mxu0 0
        %1188 = vmatprep.subr.bf16.mxu0 0
        %1189 = vmatpush1.bf16.xpose.msra.mxu0 0
        %1190 = vmatprep.subr.bf16.mxu0 0
        %1191 = vmatpush1.bf16.xpose.msra.mxu0 0
        %1192 = vmatprep.subr.bf16.mxu0 0
        %1193 = vmatpush1.bf16.xpose.msra.mxu0 0
        %1194 = vmatprep.subr.bf16.mxu0 0
        %1195 = vmatpush1.bf16.xpose.msra.mxu0 0
        %1196 = vmatprep.subr.bf16.mxu0 0
        %1197 = vmatpush1.bf16.xpose.msra.mxu0 0
        %1198 = vmatprep.subr.bf16.mxu0 0
        %1199 = vmatpush1.bf16.xpose.msra.mxu0 0
        %1200 = vmatprep.subr.bf16.mxu0 0
        %1201 = vmatpush1.bf16.xpose.msra.mxu0 0
        %1202 = vmatprep.subr.bf16.mxu0 0
        %1203 = vmatpush1.bf16.xpose.msra.mxu0 0
        %1204 = vmatprep.subr.bf16.mxu0 0
        %1205 = vmatpush1.bf16.xpose.msra.mxu0 0
        %1206 = vmatprep.mubr.bf16.mxu0 0
        %1207 = vmatmul.mubr.bf16.gmra.mrb[0].mxu0 %v1169
        %v1208 = vpop.f32.mrb[0].mxu0
        %v1209 = vadd.f32 %v1165, %v1208
        %v1210 = vpop.f32.mrb[0].mxu0
        %v1211 = vpop.f32.mrb[0].mxu0
        %v1212 = vpop.f32.mrb[0].mxu0
        %1213 = vdwg.mxu0
        %v1215 = vsel %vm1167, %v1133, 0
        %v1218 = vsel %vm1167, %v1137, 0
        %1220 = vmatprep.subr.bf16.mxu0 0
        %1221 = vmatpush1.bf16.xpose.msra.mxu0 %v1218
        %1222 = vmatprep.subr.bf16.mxu0 0
        %1223 = vmatpush1.bf16.xpose.msra.mxu0 0
        %1224 = vmatprep.subr.bf16.mxu0 0
        %1225 = vmatpush1.bf16.xpose.msra.mxu0 0
        %1226 = vmatprep.subr.bf16.mxu0 0
        %1227 = vmatpush1.bf16.xpose.msra.mxu0 0
        %1228 = vmatprep.subr.bf16.mxu0 0
        %1229 = vmatpush1.bf16.xpose.msra.mxu0 0
        %1230 = vmatprep.subr.bf16.mxu0 0
        %1231 = vmatpush1.bf16.xpose.msra.mxu0 0
        %1232 = vmatprep.subr.bf16.mxu0 0
        %1233 = vmatpush1.bf16.xpose.msra.mxu0 0
        %1234 = vmatprep.subr.bf16.mxu0 0
        %1235 = vmatpush1.bf16.xpose.msra.mxu0 0
        %1236 = vmatprep.subr.bf16.mxu0 0
        %1237 = vmatpush1.bf16.xpose.msra.mxu0 0
        %1238 = vmatprep.subr.bf16.mxu0 0
        %1239 = vmatpush1.bf16.xpose.msra.mxu0 0
        %1240 = vmatprep.subr.bf16.mxu0 0
        %1241 = vmatpush1.bf16.xpose.msra.mxu0 0
        %1242 = vmatprep.subr.bf16.mxu0 0
        %1243 = vmatpush1.bf16.xpose.msra.mxu0 0
        %1244 = vmatprep.subr.bf16.mxu0 0
        %1245 = vmatpush1.bf16.xpose.msra.mxu0 0
        %1246 = vmatprep.subr.bf16.mxu0 0
        %1247 = vmatpush1.bf16.xpose.msra.mxu0 0
        %1248 = vmatprep.subr.bf16.mxu0 0
        %1249 = vmatpush1.bf16.xpose.msra.mxu0 0
        %1250 = vmatprep.subr.bf16.mxu0 0
        %1251 = vmatpush1.bf16.xpose.msra.mxu0 0
        %1252 = vmatprep.mubr.bf16.mxu0 0
        %1253 = vmatmul.mubr.bf16.gmra.mrb[0].mxu0 %v1215
        %v1254 = vpop.f32.mrb[0].mxu0
        %v1255 = vadd.f32 %v1165, %v1254
        %v1256 = vpop.f32.mrb[0].mxu0
        %v1257 = vpop.f32.mrb[0].mxu0
        %v1258 = vpop.f32.mrb[0].mxu0
        %1259 = vdwg.mxu0
        %v1261 = vsel %vm1167, %v1134, 0
        %v1264 = vsel %vm1167, %v1138, 0
        %1266 = vmatprep.subr.bf16.mxu0 0
        %1267 = vmatpush1.bf16.xpose.msra.mxu0 %v1264
        %1268 = vmatprep.subr.bf16.mxu0 0
        %1269 = vmatpush1.bf16.xpose.msra.mxu0 0
        %1270 = vmatprep.subr.bf16.mxu0 0
        %1271 = vmatpush1.bf16.xpose.msra.mxu0 0
        %1272 = vmatprep.subr.bf16.mxu0 0
        %1273 = vmatpush1.bf16.xpose.msra.mxu0 0
        %1274 = vmatprep.subr.bf16.mxu0 0
        %1275 = vmatpush1.bf16.xpose.msra.mxu0 0
        %1276 = vmatprep.subr.bf16.mxu0 0
        %1277 = vmatpush1.bf16.xpose.msra.mxu0 0
        %1278 = vmatprep.subr.bf16.mxu0 0
        %1279 = vmatpush1.bf16.xpose.msra.mxu0 0
        %1280 = vmatprep.subr.bf16.mxu0 0
        %1281 = vmatpush1.bf16.xpose.msra.mxu0 0
        %1282 = vmatprep.subr.bf16.mxu0 0
        %1283 = vmatpush1.bf16.xpose.msra.mxu0 0
        %1284 = vmatprep.subr.bf16.mxu0 0
        %1285 = vmatpush1.bf16.xpose.msra.mxu0 0
        %1286 = vmatprep.subr.bf16.mxu0 0
        %1287 = vmatpush1.bf16.xpose.msra.mxu0 0
        %1288 = vmatprep.subr.bf16.mxu0 0
        %1289 = vmatpush1.bf16.xpose.msra.mxu0 0
        %1290 = vmatprep.subr.bf16.mxu0 0
        %1291 = vmatpush1.bf16.xpose.msra.mxu0 0
        %1292 = vmatprep.subr.bf16.mxu0 0
        %1293 = vmatpush1.bf16.xpose.msra.mxu0 0
        %1294 = vmatprep.subr.bf16.mxu0 0
        %1295 = vmatpush1.bf16.xpose.msra.mxu0 0
        %1296 = vmatprep.subr.bf16.mxu0 0
        %1297 = vmatpush1.bf16.xpose.msra.mxu0 0
        %1298 = vmatprep.mubr.bf16.mxu0 0
        %1299 = vmatmul.mubr.bf16.gmra.mrb[0].mxu0 %v1261
        %v1300 = vpop.f32.mrb[0].mxu0
        %v1301 = vadd.f32 %v1165, %v1300
        %v1302 = vpop.f32.mrb[0].mxu0
        %v1303 = vpop.f32.mrb[0].mxu0
        %v1304 = vpop.f32.mrb[0].mxu0
        %1305 = vdwg.mxu0
        %v1307 = vsel %vm1167, %v1135, 0
        %v1310 = vsel %vm1167, %v1139, 0
        %1312 = vmatprep.subr.bf16.mxu0 0
        %1313 = vmatpush1.bf16.xpose.msra.mxu0 %v1310
        %1314 = vmatprep.subr.bf16.mxu0 0
        %1315 = vmatpush1.bf16.xpose.msra.mxu0 0
        %1316 = vmatprep.subr.bf16.mxu0 0
        %1317 = vmatpush1.bf16.xpose.msra.mxu0 0
        %1318 = vmatprep.subr.bf16.mxu0 0
        %1319 = vmatpush1.bf16.xpose.msra.mxu0 0
        %1320 = vmatprep.subr.bf16.mxu0 0
        %1321 = vmatpush1.bf16.xpose.msra.mxu0 0
        %1322 = vmatprep.subr.bf16.mxu0 0
        %1323 = vmatpush1.bf16.xpose.msra.mxu0 0
        %1324 = vmatprep.subr.bf16.mxu0 0
        %1325 = vmatpush1.bf16.xpose.msra.mxu0 0
        %1326 = vmatprep.subr.bf16.mxu0 0
        %1327 = vmatpush1.bf16.xpose.msra.mxu0 0
        %1328 = vmatprep.subr.bf16.mxu0 0
        %1329 = vmatpush1.bf16.xpose.msra.mxu0 0
        %1330 = vmatprep.subr.bf16.mxu0 0
        %1331 = vmatpush1.bf16.xpose.msra.mxu0 0
        %1332 = vmatprep.subr.bf16.mxu0 0
        %1333 = vmatpush1.bf16.xpose.msra.mxu0 0
        %1334 = vmatprep.subr.bf16.mxu0 0
        %1335 = vmatpush1.bf16.xpose.msra.mxu0 0
        %1336 = vmatprep.subr.bf16.mxu0 0
        %1337 = vmatpush1.bf16.xpose.msra.mxu0 0
        %1338 = vmatprep.subr.bf16.mxu0 0
        %1339 = vmatpush1.bf16.xpose.msra.mxu0 0
        %1340 = vmatprep.subr.bf16.mxu0 0
        %1341 = vmatpush1.bf16.xpose.msra.mxu0 0
        %1342 = vmatprep.subr.bf16.mxu0 0
        %1343 = vmatpush1.bf16.xpose.msra.mxu0 0
        %1344 = vmatprep.mubr.bf16.mxu0 0
        %1345 = vmatmul.mubr.bf16.gmra.mrb[0].mxu0 %v1307
        %v1346 = vpop.f32.mrb[0].mxu0
        %v1347 = vadd.f32 %v1165, %v1346
        %v1348 = vpop.f32.mrb[0].mxu0
        %v1349 = vpop.f32.mrb[0].mxu0
        %v1350 = vpop.f32.mrb[0].mxu0
        %1351 = vdwg.mxu0
        %v1352 = vsel %vm1167, %v1209, -inf
        %1353 = vmax.xlane.f32.xlu0 %v1352
        %v1354 = vpop.xlane.xlu0 %1353
        %v1355 = vsel %vm1167, %v1255, -inf
        %1356 = vmax.xlane.f32.xlu0 %v1355
        %v1357 = vpop.xlane.xlu0 %1356
        %v1358 = vsel %vm1167, %v1301, -inf
        %1359 = vmax.xlane.f32.xlu0 %v1358
        %v1360 = vpop.xlane.xlu0 %1359
        %v1361 = vsel %vm1167, %v1347, -inf
        %1362 = vmax.xlane.f32.xlu0 %v1361
        %v1363 = vpop.xlane.xlu0 %1362
        %v1364 = vsub.f32 %v1209, %v1354
        %v1365 = vsub.f32 %v1255, %v1357
        %v1366 = vsub.f32 %v1301, %v1360
        %v1367 = vsub.f32 %v1347, %v1363
        %v1368 = vmul.f32 %v1364, 1.442695
        %v1369 = vpow.pop %v1368
        %v1370 = vmul.f32 %v1365, 1.442695
        %v1371 = vpow.pop %v1370
        %v1372 = vmul.f32 %v1366, 1.442695
        %v1373 = vpow.pop %v1372
        %v1374 = vmul.f32 %v1367, 1.442695
        %v1375 = vpow.pop %v1374
        %v1376 = vsel %vm1167, %v1369, 0.0
        %1377 = vadd.xlane.f32.xlu0 %v1376
        %v1378 = vpop.xlane.xlu0 %1377
        %v1379 = vsel %vm1167, %v1371, 0.0
        %1380 = vadd.xlane.f32.xlu0 %v1379
        %v1381 = vpop.xlane.xlu0 %1380
        %v1382 = vsel %vm1167, %v1373, 0.0
        %1383 = vadd.xlane.f32.xlu0 %v1382
        %v1384 = vpop.xlane.xlu0 %1383
        %v1385 = vsel %vm1167, %v1375, 0.0
        %1386 = vadd.xlane.f32.xlu0 %v1385
        %v1387 = vpop.xlane.xlu0 %1386
        %v1388 = vrcp.pop %v1378
        %v1389 = vrcp.pop %v1381
        %v1390 = vrcp.pop %v1384
        %v1391 = vrcp.pop %v1387
        %v1392 = vmul.f32 %v1369, %v1388
        %v1393 = vmul.f32 %v1371, %v1389
        %v1394 = vmul.f32 %v1373, %v1390
        %v1395 = vmul.f32 %v1375, %v1391
        %v1396 = vpack.c.bf16 %v1392, %v1392
        %v1397 = vpack.c.bf16 %v1393, %v1393
        %v1398 = vpack.c.bf16 %v1394, %v1394
        %v1399 = vpack.c.bf16 %v1395, %v1395
        %v1401 = vsel %vm1167, %v1396, 0
        %vm1403 = vcmask 1043456
        %v1405 = vsel %vm1403, %v1140, 0
        %1407 = vmatprep.subr.bf16.mxu0 0
        %1408 = vmatpush1.bf16.msra.mxu0 %v1405
        %1409 = vmatprep.subr.bf16.mxu0 0
        %1410 = vmatpush1.bf16.msra.mxu0 0
        %1411 = vmatprep.subr.bf16.mxu0 0
        %1412 = vmatpush1.bf16.msra.mxu0 0
        %1413 = vmatprep.subr.bf16.mxu0 0
        %1414 = vmatpush1.bf16.msra.mxu0 0
        %1415 = vmatprep.subr.bf16.mxu0 0
        %1416 = vmatpush1.bf16.msra.mxu0 0
        %1417 = vmatprep.subr.bf16.mxu0 0
        %1418 = vmatpush1.bf16.msra.mxu0 0
        %1419 = vmatprep.subr.bf16.mxu0 0
        %1420 = vmatpush1.bf16.msra.mxu0 0
        %1421 = vmatprep.subr.bf16.mxu0 0
        %1422 = vmatpush1.bf16.msra.mxu0 0
        %1423 = vmatprep.subr.bf16.mxu0 0
        %1424 = vmatpush1.bf16.msra.mxu0 0
        %1425 = vmatprep.subr.bf16.mxu0 0
        %1426 = vmatpush1.bf16.msra.mxu0 0
        %1427 = vmatprep.subr.bf16.mxu0 0
        %1428 = vmatpush1.bf16.msra.mxu0 0
        %1429 = vmatprep.subr.bf16.mxu0 0
        %1430 = vmatpush1.bf16.msra.mxu0 0
        %1431 = vmatprep.subr.bf16.mxu0 0
        %1432 = vmatpush1.bf16.msra.mxu0 0
        %1433 = vmatprep.subr.bf16.mxu0 0
        %1434 = vmatpush1.bf16.msra.mxu0 0
        %1435 = vmatprep.subr.bf16.mxu0 0
        %1436 = vmatpush1.bf16.msra.mxu0 0
        %1437 = vmatprep.subr.bf16.mxu0 0
        %1438 = vmatpush1.bf16.msra.mxu0 0
        %1439 = vmatprep.mubr.bf16.mxu0 0
        %1440 = vmatmul.mubr.bf16.gmra.mrb[0].mxu0 %v1401
        %v1441 = vpop.f32.mrb[0].mxu0
        %v1442 = vadd.f32 0.0, %v1441
        %v1443 = vpop.f32.mrb[0].mxu0
        %v1444 = vpop.f32.mrb[0].mxu0
        %v1445 = vpop.f32.mrb[0].mxu0
        %1446 = vdwg.mxu0
        %v1448 = vsel %vm1167, %v1397, 0
        %v1451 = vsel %vm1403, %v1141, 0
        %1453 = vmatprep.subr.bf16.mxu0 0
        %1454 = vmatpush1.bf16.msra.mxu0 %v1451
        %1455 = vmatprep.subr.bf16.mxu0 0
        %1456 = vmatpush1.bf16.msra.mxu0 0
        %1457 = vmatprep.subr.bf16.mxu0 0
        %1458 = vmatpush1.bf16.msra.mxu0 0
        %1459 = vmatprep.subr.bf16.mxu0 0
        %1460 = vmatpush1.bf16.msra.mxu0 0
        %1461 = vmatprep.subr.bf16.mxu0 0
        %1462 = vmatpush1.bf16.msra.mxu0 0
        %1463 = vmatprep.subr.bf16.mxu0 0
        %1464 = vmatpush1.bf16.msra.mxu0 0
        %1465 = vmatprep.subr.bf16.mxu0 0
        %1466 = vmatpush1.bf16.msra.mxu0 0
        %1467 = vmatprep.subr.bf16.mxu0 0
        %1468 = vmatpush1.bf16.msra.mxu0 0
        %1469 = vmatprep.subr.bf16.mxu0 0
        %1470 = vmatpush1.bf16.msra.mxu0 0
        %1471 = vmatprep.subr.bf16.mxu0 0
        %1472 = vmatpush1.bf16.msra.mxu0 0
        %1473 = vmatprep.subr.bf16.mxu0 0
        %1474 = vmatpush1.bf16.msra.mxu0 0
        %1475 = vmatprep.subr.bf16.mxu0 0
        %1476 = vmatpush1.bf16.msra.mxu0 0
        %1477 = vmatprep.subr.bf16.mxu0 0
        %1478 = vmatpush1.bf16.msra.mxu0 0
        %1479 = vmatprep.subr.bf16.mxu0 0
        %1480 = vmatpush1.bf16.msra.mxu0 0
        %1481 = vmatprep.subr.bf16.mxu0 0
        %1482 = vmatpush1.bf16.msra.mxu0 0
        %1483 = vmatprep.subr.bf16.mxu0 0
        %1484 = vmatpush1.bf16.msra.mxu0 0
        %1485 = vmatprep.mubr.bf16.mxu0 0
        %1486 = vmatmul.mubr.bf16.gmra.mrb[0].mxu0 %v1448
        %v1487 = vpop.f32.mrb[0].mxu0
        %v1488 = vadd.f32 0.0, %v1487
        %v1489 = vpop.f32.mrb[0].mxu0
        %v1490 = vpop.f32.mrb[0].mxu0
        %v1491 = vpop.f32.mrb[0].mxu0
        %1492 = vdwg.mxu0
        %v1494 = vsel %vm1167, %v1398, 0
        %v1497 = vsel %vm1403, %v1142, 0
        %1499 = vmatprep.subr.bf16.mxu0 0
        %1500 = vmatpush1.bf16.msra.mxu0 %v1497
        %1501 = vmatprep.subr.bf16.mxu0 0
        %1502 = vmatpush1.bf16.msra.mxu0 0
        %1503 = vmatprep.subr.bf16.mxu0 0
        %1504 = vmatpush1.bf16.msra.mxu0 0
        %1505 = vmatprep.subr.bf16.mxu0 0
        %1506 = vmatpush1.bf16.msra.mxu0 0
        %1507 = vmatprep.subr.bf16.mxu0 0
        %1508 = vmatpush1.bf16.msra.mxu0 0
        %1509 = vmatprep.subr.bf16.mxu0 0
        %1510 = vmatpush1.bf16.msra.mxu0 0
        %1511 = vmatprep.subr.bf16.mxu0 0
        %1512 = vmatpush1.bf16.msra.mxu0 0
        %1513 = vmatprep.subr.bf16.mxu0 0
        %1514 = vmatpush1.bf16.msra.mxu0 0
        %1515 = vmatprep.subr.bf16.mxu0 0
        %1516 = vmatpush1.bf16.msra.mxu0 0
        %1517 = vmatprep.subr.bf16.mxu0 0
        %1518 = vmatpush1.bf16.msra.mxu0 0
        %1519 = vmatprep.subr.bf16.mxu0 0
        %1520 = vmatpush1.bf16.msra.mxu0 0
        %1521 = vmatprep.subr.bf16.mxu0 0
        %1522 = vmatpush1.bf16.msra.mxu0 0
        %1523 = vmatprep.subr.bf16.mxu0 0
        %1524 = vmatpush1.bf16.msra.mxu0 0
        %1525 = vmatprep.subr.bf16.mxu0 0
        %1526 = vmatpush1.bf16.msra.mxu0 0
        %1527 = vmatprep.subr.bf16.mxu0 0
        %1528 = vmatpush1.bf16.msra.mxu0 0
        %1529 = vmatprep.subr.bf16.mxu0 0
        %1530 = vmatpush1.bf16.msra.mxu0 0
        %1531 = vmatprep.mubr.bf16.mxu0 0
        %1532 = vmatmul.mubr.bf16.gmra.mrb[0].mxu0 %v1494
        %v1533 = vpop.f32.mrb[0].mxu0
        %v1534 = vadd.f32 0.0, %v1533
        %v1535 = vpop.f32.mrb[0].mxu0
        %v1536 = vpop.f32.mrb[0].mxu0
        %v1537 = vpop.f32.mrb[0].mxu0
        %1538 = vdwg.mxu0
        %v1540 = vsel %vm1167, %v1399, 0
        %v1543 = vsel %vm1403, %v1143, 0
        %1545 = vmatprep.subr.bf16.mxu0 0
        %1546 = vmatpush1.bf16.msra.mxu0 %v1543
        %1547 = vmatprep.subr.bf16.mxu0 0
        %1548 = vmatpush1.bf16.msra.mxu0 0
        %1549 = vmatprep.subr.bf16.mxu0 0
        %1550 = vmatpush1.bf16.msra.mxu0 0
        %1551 = vmatprep.subr.bf16.mxu0 0
        %1552 = vmatpush1.bf16.msra.mxu0 0
        %1553 = vmatprep.subr.bf16.mxu0 0
        %1554 = vmatpush1.bf16.msra.mxu0 0
        %1555 = vmatprep.subr.bf16.mxu0 0
        %1556 = vmatpush1.bf16.msra.mxu0 0
        %1557 = vmatprep.subr.bf16.mxu0 0
        %1558 = vmatpush1.bf16.msra.mxu0 0
        %1559 = vmatprep.subr.bf16.mxu0 0
        %1560 = vmatpush1.bf16.msra.mxu0 0
        %1561 = vmatprep.subr.bf16.mxu0 0
        %1562 = vmatpush1.bf16.msra.mxu0 0
        %1563 = vmatprep.subr.bf16.mxu0 0
        %1564 = vmatpush1.bf16.msra.mxu0 0
        %1565 = vmatprep.subr.bf16.mxu0 0
        %1566 = vmatpush1.bf16.msra.mxu0 0
        %1567 = vmatprep.subr.bf16.mxu0 0
        %1568 = vmatpush1.bf16.msra.mxu0 0
        %1569 = vmatprep.subr.bf16.mxu0 0
        %1570 = vmatpush1.bf16.msra.mxu0 0
        %1571 = vmatprep.subr.bf16.mxu0 0
        %1572 = vmatpush1.bf16.msra.mxu0 0
        %1573 = vmatprep.subr.bf16.mxu0 0
        %1574 = vmatpush1.bf16.msra.mxu0 0
        %1575 = vmatprep.subr.bf16.mxu0 0
        %1576 = vmatpush1.bf16.msra.mxu0 0
        %1577 = vmatprep.mubr.bf16.mxu0 0
        %1578 = vmatmul.mubr.bf16.gmra.mrb[0].mxu0 %v1540
        %v1579 = vpop.f32.mrb[0].mxu0
        %v1580 = vadd.f32 0.0, %v1579
        %v1581 = vpop.f32.mrb[0].mxu0
        %v1582 = vpop.f32.mrb[0].mxu0
        %v1583 = vpop.f32.mrb[0].mxu0
        %1584 = vdwg.mxu0
        %v1585 = vcombine.low %v1442, %v1534
        %v1586 = vcombine.high %v1442, %v1534
        %v1588 = vunpack.c.l.s4 1983009808
        %v1589 = vunpack.c.0.s8 %v1588
        %v1590 = vlaneseq
        %v1591 = vshrl.u32 %v1590, 7
        %v1592 = vsub.s32 %v1589, %v1591
        %v1593 = vrot.slane %v1585, %v1592
        %v1595 = vunpack.c.l.s4 1983009808
        %v1596 = vunpack.c.0.s8 %v1595
        %v1597 = vlaneseq
        %v1598 = vshrl.u32 %v1597, 7
        %v1599 = vsub.s32 %v1596, %v1598
        %v1600 = vrot.slane %v1586, %v1599
        %v1601 = vcombine.low %v1488, %v1580
        %v1602 = vcombine.high %v1488, %v1580
        %v1604 = vunpack.c.l.s4 1983009808
        %v1605 = vunpack.c.0.s8 %v1604
        %v1606 = vlaneseq
        %v1607 = vshrl.u32 %v1606, 7
        %v1608 = vsub.s32 %v1605, %v1607
        %v1609 = vrot.slane %v1601, %v1608
        %v1611 = vunpack.c.l.s4 1983009808
        %v1612 = vunpack.c.0.s8 %v1611
        %v1613 = vlaneseq
        %v1614 = vshrl.u32 %v1613, 7
        %v1615 = vsub.s32 %v1612, %v1614
        %v1616 = vrot.slane %v1602, %v1615
        %v1617 = vcombine.low %v1593, %v1609
        %v1618 = vcombine.high %v1593, %v1609
        %v1620 = vunpack.c.l.s4 1934713408
        %v1621 = vunpack.c.0.s8 %v1620
        %v1622 = vlaneseq
        %v1623 = vshrl.u32 %v1622, 7
        %v1624 = vsub.s32 %v1621, %v1623
        %v1625 = vrot.slane %v1617, %v1624
        %v1627 = vunpack.c.l.s4 1934713408
        %v1628 = vunpack.c.0.s8 %v1627
        %v1629 = vlaneseq
        %v1630 = vshrl.u32 %v1629, 7
        %v1631 = vsub.s32 %v1628, %v1630
        %v1632 = vrot.slane %v1618, %v1631
        %v1633 = vcombine.low %v1600, %v1616
        %v1634 = vcombine.high %v1600, %v1616
        %v1636 = vunpack.c.l.s4 1934713408
        %v1637 = vunpack.c.0.s8 %v1636
        %v1638 = vlaneseq
        %v1639 = vshrl.u32 %v1638, 7
        %v1640 = vsub.s32 %v1637, %v1639
        %v1641 = vrot.slane %v1633, %v1640
        %v1643 = vunpack.c.l.s4 1934713408
        %v1644 = vunpack.c.0.s8 %v1643
        %v1645 = vlaneseq
        %v1646 = vshrl.u32 %v1645, 7
        %v1647 = vsub.s32 %v1644, %v1646
        %v1648 = vrot.slane %v1634, %v1647
        %v1649 = vcombine.high %v1625, 0.0
        %v1650 = vcombine.high %v1632, 0.0
        %v1651 = vcombine.high %v1641, 0.0
        %v1652 = vcombine.high %v1648, 0.0
        %v1653 = vcombine.low %v1625, %v1632
        %v1655 = vunpack.c.l.s4 1983009808
        %v1656 = vunpack.c.0.s8 %v1655
        %v1657 = vlaneseq
        %v1658 = vshrl.u32 %v1657, 7
        %v1659 = vsub.s32 %v1656, %v1658
        %v1660 = vrot.slane %v1653, %v1659
        %v1661 = vcombine.low %v1649, %v1650
        %v1663 = vunpack.c.l.s4 1983009808
        %v1664 = vunpack.c.0.s8 %v1663
        %v1665 = vlaneseq
        %v1666 = vshrl.u32 %v1665, 7
        %v1667 = vsub.s32 %v1664, %v1666
        %v1668 = vrot.slane %v1661, %v1667
        %v1669 = vcombine.low %v1641, %v1648
        %v1671 = vunpack.c.l.s4 1983009808
        %v1672 = vunpack.c.0.s8 %v1671
        %v1673 = vlaneseq
        %v1674 = vshrl.u32 %v1673, 7
        %v1675 = vsub.s32 %v1672, %v1674
        %v1676 = vrot.slane %v1669, %v1675
        %v1677 = vcombine.low %v1651, %v1652
        %v1679 = vunpack.c.l.s4 1983009808
        %v1680 = vunpack.c.0.s8 %v1679
        %v1681 = vlaneseq
        %v1682 = vshrl.u32 %v1681, 7
        %v1683 = vsub.s32 %v1680, %v1682
        %v1684 = vrot.slane %v1677, %v1683
        %v1685 = vcombine.low %v1660, %v1668
        %v1686 = vcombine.high %v1660, %v1668
        %v1688 = vunpack.c.l.s4 1934713408
        %v1689 = vunpack.c.0.s8 %v1688
        %v1690 = vlaneseq
        %v1691 = vshrl.u32 %v1690, 7
        %v1692 = vsub.s32 %v1689, %v1691
        %v1693 = vrot.slane %v1685, %v1692
        %v1695 = vunpack.c.l.s4 1934713408
        %v1696 = vunpack.c.0.s8 %v1695
        %v1697 = vlaneseq
        %v1698 = vshrl.u32 %v1697, 7
        %v1699 = vsub.s32 %v1696, %v1698
        %v1700 = vrot.slane %v1686, %v1699
        %v1701 = vcombine.low %v1676, %v1684
        %v1702 = vcombine.high %v1676, %v1684
        %v1704 = vunpack.c.l.s4 1934713408
        %v1705 = vunpack.c.0.s8 %v1704
        %v1706 = vlaneseq
        %v1707 = vshrl.u32 %v1706, 7
        %v1708 = vsub.s32 %v1705, %v1707
        %v1709 = vrot.slane %v1701, %v1708
        %v1711 = vunpack.c.l.s4 1934713408
        %v1712 = vunpack.c.0.s8 %v1711
        %v1713 = vlaneseq
        %v1714 = vshrl.u32 %v1713, 7
        %v1715 = vsub.s32 %v1712, %v1714
        %v1716 = vrot.slane %v1702, %v1715
        %v1717 = vcombine.low %v1693, %v1709
        %v1718 = vcombine.high %v1693, %v1709
        %v1719 = vcombine.low %v1700, %v1716
        %v1720 = vcombine.high %v1700, %v1716
        %1722 = vrot.lane.b32.xlu0 %v1718, 8
        %v1723 = vpop.permute.xlu0 %1722
        %1726 = vrot.lane.b32.xlu0 %v1719, 16
        %v1727 = vpop.permute.xlu0 %1726
        %1730 = vrot.lane.b32.xlu0 %v1720, 24
        %v1731 = vpop.permute.xlu0 %1730
        %v1733 = vsel %vm1167, %v1717, %v1723
        %vm1734 = vcmask 130048
        %v1735 = vsel %vm1734, %v1733, %v1727
        %vm1736 = vcmask 195584
        %v1737 = vsel %vm1736, %v1735, %v1731
        %v1738 = vld [vmem:[%s6] sm:$0xf]
        %v1739 = vld [vmem:[%s6 + $0x4] sm:$0xf]
        %v1740 = vld [vmem:[%s6 + $0x8] sm:$0xf]
        %v1741 = vld [vmem:[%s6 + $0xc] sm:$0xf]
        %v1742 = vpack.c.bf16 %v1737, %v1737
        %v1743 = vld [vmem:[%s7] sm:$0x1]
        %v1745 = vlaneseq
        %v1746 = vshrl.u32 %v1745, 7
        %v1747 = vsub.s32 0, %v1746
        %v1748 = vrot.slane %v1743, %v1747
        %v1754 = vunpack.c.l.b16 %v1738
        %v1755 = vunpack.c.l.b16 %v1739
        %v1756 = vunpack.c.l.b16 %v1740
        %v1757 = vunpack.c.l.b16 %v1741
        %v1758 = vpack.c.b16 %v1755, %v1754
        %v1759 = vpack.c.b16 %v1757, %v1756
        %v1763 = vsel %vm591, %v1742, 0
        %1765 = vmatprep.subr.bf16.mxu0 0
        %1766 = vmatpush1.bf16.msra.mxu0 %v1758
        %1767 = vmatprep.subr.bf16.mxu0 0
        %1768 = vmatpush1.bf16.msra.mxu0 %v1759
        %1769 = vmatprep.subr.bf16.mxu0 0
        %1770 = vmatpush1.bf16.msra.mxu0 0
        %1771 = vmatprep.subr.bf16.mxu0 0
        %1772 = vmatpush1.bf16.msra.mxu0 0
        %1773 = vmatprep.subr.bf16.mxu0 0
        %1774 = vmatpush1.bf16.msra.mxu0 0
        %1775 = vmatprep.subr.bf16.mxu0 0
        %1776 = vmatpush1.bf16.msra.mxu0 0
        %1777 = vmatprep.subr.bf16.mxu0 0
        %1778 = vmatpush1.bf16.msra.mxu0 0
        %1779 = vmatprep.subr.bf16.mxu0 0
        %1780 = vmatpush1.bf16.msra.mxu0 0
        %1781 = vmatprep.subr.bf16.mxu0 0
        %1782 = vmatpush1.bf16.msra.mxu0 0
        %1783 = vmatprep.subr.bf16.mxu0 0
        %1784 = vmatpush1.bf16.msra.mxu0 0
        %1785 = vmatprep.subr.bf16.mxu0 0
        %1786 = vmatpush1.bf16.msra.mxu0 0
        %1787 = vmatprep.subr.bf16.mxu0 0
        %1788 = vmatpush1.bf16.msra.mxu0 0
        %1789 = vmatprep.subr.bf16.mxu0 0
        %1790 = vmatpush1.bf16.msra.mxu0 0
        %1791 = vmatprep.subr.bf16.mxu0 0
        %1792 = vmatpush1.bf16.msra.mxu0 0
        %1793 = vmatprep.subr.bf16.mxu0 0
        %1794 = vmatpush1.bf16.msra.mxu0 0
        %1795 = vmatprep.subr.bf16.mxu0 0
        %1796 = vmatpush1.bf16.msra.mxu0 0
        %1797 = vmatprep.mubr.bf16.mxu0 0
        %1798 = vmatmul.mubr.bf16.gmra.mrb[0].mxu0 %v1763
        %v1799 = vpop.f32.mrb[0].mxu0
        %v1800 = vadd.f32 %v1748, %v1799
        %v1801 = vpop.f32.mrb[0].mxu0
        %v1802 = vpop.f32.mrb[0].mxu0
        %v1803 = vpop.f32.mrb[0].mxu0
        %1804 = vdwg.mxu0
        %v1805 = vadd.f32 %v1800, %v619
        %v1806 = vld [vmem:[%s8] sm:$0x1]
        %v1807 = vld [vmem:[%s9] sm:$0x1]
        %v1808 = vsel %vm591, %v1805, 0.0
        %1809 = vadd.xlane.f32.xlu0 %v1808
        %v1810 = vpop.xlane.xlu0 %1809
        %v1811 = vmul.f32 %v1810, %v595
        %v1812 = vsub.f32 %v1805, %v1811
        %v1813 = vmul.f32 %v1812, %v1812
        %v1814 = vsel %vm591, %v1813, 0.0
        %1815 = vadd.xlane.f32.xlu0 %v1814
        %v1816 = vpop.xlane.xlu0 %1815
        %v1817 = vmul.f32 %v1816, %v595
        %v1818 = vadd.f32 %v1817, 1e-12
        %v1819 = vrsqrt.pop %v1818
        %v1820 = vmul.f32 %v1812, %v1819
        %v1822 = vlaneseq
        %v1823 = vshrl.u32 %v1822, 7
        %v1824 = vsub.s32 0, %v1823
        %v1825 = vrot.slane %v1806, %v1824
        %v1827 = vmul.f32 %v1820, %v1825
        %v1829 = vlaneseq
        %v1830 = vshrl.u32 %v1829, 7
        %v1831 = vsub.s32 0, %v1830
        %v1832 = vrot.slane %v1807, %v1831
        %v1834 = vadd.f32 %v1827, %v1832
        %v1835 = vld [vmem:[%s10] sm:$0xf]
        %v1836 = vld [vmem:[%s10 + $0x4] sm:$0xf]
        %v1837 = vld [vmem:[%s10 + $0x8] sm:$0xf]
        %v1838 = vld [vmem:[%s10 + $0xc] sm:$0xf]
        %v1839 = vpack.c.bf16 %v1834, %v1834
        %v1840 = vld [vmem:[%s11] sm:$0x1]
        %v1842 = vlaneseq
        %v1843 = vshrl.u32 %v1842, 7
        %v1844 = vsub.s32 0, %v1843
        %v1845 = vrot.slane %v1840, %v1844
        %v1851 = vunpack.c.l.b16 %v1835
        %v1852 = vunpack.c.l.b16 %v1836
        %v1853 = vunpack.c.l.b16 %v1837
        %v1854 = vunpack.c.l.b16 %v1838
        %v1855 = vpack.c.b16 %v1852, %v1851
        %v1856 = vpack.c.b16 %v1854, %v1853
        %v1860 = vsel %vm591, %v1839, 0
        %1862 = vmatprep.subr.bf16.mxu0 0
        %1863 = vmatpush1.bf16.msra.mxu0 %v1855
        %1864 = vmatprep.subr.bf16.mxu0 0
        %1865 = vmatpush1.bf16.msra.mxu0 %v1856
        %1866 = vmatprep.subr.bf16.mxu0 0
        %1867 = vmatpush1.bf16.msra.mxu0 0
        %1868 = vmatprep.subr.bf16.mxu0 0
        %1869 = vmatpush1.bf16.msra.mxu0 0
        %1870 = vmatprep.subr.bf16.mxu0 0
        %1871 = vmatpush1.bf16.msra.mxu0 0
        %1872 = vmatprep.subr.bf16.mxu0 0
        %1873 = vmatpush1.bf16.msra.mxu0 0
        %1874 = vmatprep.subr.bf16.mxu0 0
        %1875 = vmatpush1.bf16.msra.mxu0 0
        %1876 = vmatprep.subr.bf16.mxu0 0
        %1877 = vmatpush1.bf16.msra.mxu0 0
        %1878 = vmatprep.subr.bf16.mxu0 0
        %1879 = vmatpush1.bf16.msra.mxu0 0
        %1880 = vmatprep.subr.bf16.mxu0 0
        %1881 = vmatpush1.bf16.msra.mxu0 0
        %1882 = vmatprep.subr.bf16.mxu0 0
        %1883 = vmatpush1.bf16.msra.mxu0 0
        %1884 = vmatprep.subr.bf16.mxu0 0
        %1885 = vmatpush1.bf16.msra.mxu0 0
        %1886 = vmatprep.subr.bf16.mxu0 0
        %1887 = vmatpush1.bf16.msra.mxu0 0
        %1888 = vmatprep.subr.bf16.mxu0 0
        %1889 = vmatpush1.bf16.msra.mxu0 0
        %1890 = vmatprep.subr.bf16.mxu0 0
        %1891 = vmatpush1.bf16.msra.mxu0 0
        %1892 = vmatprep.subr.bf16.mxu0 0
        %1893 = vmatpush1.bf16.msra.mxu0 0
        %1894 = vmatprep.mubr.bf16.mxu0 0
        %1895 = vmatmul.mubr.bf16.gmra.mrb[0].mxu0 %v1860
        %v1896 = vpop.f32.mrb[0].mxu0
        %v1897 = vadd.f32 %v1845, %v1896
        %v1898 = vpop.f32.mrb[0].mxu0
        %v1899 = vpop.f32.mrb[0].mxu0
        %v1900 = vpop.f32.mrb[0].mxu0
        %1901 = vdwg.mxu0
        %v1902 = vmul.f32 %v1897, %v1897
        %v1903 = vmul.f32 %v1897, %v1902
        %v1904 = vmul.f32 %v1903, 0.044715
        %v1905 = vadd.f32 %v1897, %v1904
        %v1906 = vmul.f32 %v1905, 0.7978846
        %v1907 = vtanh.pop %v1906
        %v1908 = vadd.f32 %v1907, 1.0
        %v1909 = vmul.f32 %v1908, 0.5
        %v1910 = vmul.f32 %v1897, %v1909
        %v1911 = vld [vmem:[%s12] sm:$0xf]
        %v1912 = vld [vmem:[%s12 + $0x4] sm:$0xf]
        %v1913 = vld [vmem:[%s12 + $0x8] sm:$0xf]
        %v1914 = vld [vmem:[%s12 + $0xc] sm:$0xf]
        %v1915 = vld [vmem:[%s12 + $0x10] sm:$0xf]
        %v1916 = vld [vmem:[%s12 + $0x14] sm:$0xf]
        %v1917 = vld [vmem:[%s12 + $0x18] sm:$0xf]
        %v1918 = vld [vmem:[%s12 + $0x1c] sm:$0xf]
        %v1919 = vpack.c.bf16 %v1910, %v1910
        %v1920 = vld [vmem:[%s13] sm:$0x1]
        %v1922 = vlaneseq
        %v1923 = vshrl.u32 %v1922, 7
        %v1924 = vsub.s32 0, %v1923
        %v1925 = vrot.slane %v1920, %v1924
        %v1935 = vunpack.c.l.b16 %v1911
        %v1936 = vunpack.c.l.b16 %v1912
        %v1937 = vunpack.c.l.b16 %v1913
        %v1938 = vunpack.c.l.b16 %v1914
        %v1939 = vunpack.c.l.b16 %v1915
        %v1940 = vunpack.c.l.b16 %v1916
        %v1941 = vunpack.c.l.b16 %v1917
        %v1942 = vunpack.c.l.b16 %v1918
        %v1943 = vpack.c.b16 %v1936, %v1935
        %v1944 = vpack.c.b16 %v1938, %v1937
        %v1945 = vpack.c.b16 %v1940, %v1939
        %v1946 = vpack.c.b16 %v1942, %v1941
        %vm1951 = vcmask 523264
        %v1953 = vsel %vm1951, %v1919, 0
        %1955 = vmatprep.subr.bf16.mxu0 0
        %1956 = vmatpush1.bf16.msra.mxu0 %v1943
        %1957 = vmatprep.subr.bf16.mxu0 0
        %1958 = vmatpush1.bf16.msra.mxu0 %v1944
        %1959 = vmatprep.subr.bf16.mxu0 0
        %1960 = vmatpush1.bf16.msra.mxu0 %v1945
        %1961 = vmatprep.subr.bf16.mxu0 0
        %1962 = vmatpush1.bf16.msra.mxu0 %v1946
        %1963 = vmatprep.subr.bf16.mxu0 0
        %1964 = vmatpush1.bf16.msra.mxu0 0
        %1965 = vmatprep.subr.bf16.mxu0 0
        %1966 = vmatpush1.bf16.msra.mxu0 0
        %1967 = vmatprep.subr.bf16.mxu0 0
        %1968 = vmatpush1.bf16.msra.mxu0 0
        %1969 = vmatprep.subr.bf16.mxu0 0
        %1970 = vmatpush1.bf16.msra.mxu0 0
        %1971 = vmatprep.subr.bf16.mxu0 0
        %1972 = vmatpush1.bf16.msra.mxu0 0
        %1973 = vmatprep.subr.bf16.mxu0 0
        %1974 = vmatpush1.bf16.msra.mxu0 0
        %1975 = vmatprep.subr.bf16.mxu0 0
        %1976 = vmatpush1.bf16.msra.mxu0 0
        %1977 = vmatprep.subr.bf16.mxu0 0
        %1978 = vmatpush1.bf16.msra.mxu0 0
        %1979 = vmatprep.subr.bf16.mxu0 0
        %1980 = vmatpush1.bf16.msra.mxu0 0
        %1981 = vmatprep.subr.bf16.mxu0 0
        %1982 = vmatpush1.bf16.msra.mxu0 0
        %1983 = vmatprep.subr.bf16.mxu0 0
        %1984 = vmatpush1.bf16.msra.mxu0 0
        %1985 = vmatprep.subr.bf16.mxu0 0
        %1986 = vmatpush1.bf16.msra.mxu0 0
        %1987 = vmatprep.mubr.bf16.mxu0 0
        %1988 = vmatmul.mubr.bf16.gmra.mrb[0].mxu0 %v1953
        %v1989 = vpop.f32.mrb[0].mxu0
        %v1990 = vadd.f32 %v1925, %v1989
        %v1991 = vpop.f32.mrb[0].mxu0
        %v1992 = vpop.f32.mrb[0].mxu0
        %v1993 = vpop.f32.mrb[0].mxu0
        %1994 = vdwg.mxu0
        %v1995 = vadd.f32 %v1990, %v1834
        %v1996 = vld [vmem:[%s14] sm:$0x1]
        %v1997 = vld [vmem:[%s15] sm:$0x1]
        %v1998 = vsel %vm591, %v1995, 0.0
        %1999 = vadd.xlane.f32.xlu0 %v1998
        %v2000 = vpop.xlane.xlu0 %1999
        %v2001 = vmul.f32 %v2000, %v595
        %v2002 = vsub.f32 %v1995, %v2001
        %v2003 = vmul.f32 %v2002, %v2002
        %v2004 = vsel %vm591, %v2003, 0.0
        %2005 = vadd.xlane.f32.xlu0 %v2004
        %v2006 = vpop.xlane.xlu0 %2005
        %v2007 = vmul.f32 %v2006, %v595
        %v2008 = vadd.f32 %v2007, 1e-12
        %v2009 = vrsqrt.pop %v2008
        %v2010 = vmul.f32 %v2002, %v2009
        %v2012 = vlaneseq
        %v2013 = vshrl.u32 %v2012, 7
        %v2014 = vsub.s32 0, %v2013
        %v2015 = vrot.slane %v1996, %v2014
        %v2017 = vmul.f32 %v2010, %v2015
        %v2019 = vlaneseq
        %v2020 = vshrl.u32 %v2019, 7
        %v2021 = vsub.s32 0, %v2020
        %v2022 = vrot.slane %v1997, %v2021
        %v2024 = vadd.f32 %v2017, %v2022
        %s2025 = scalar_lea.vmem %s4, 16
        %v2026 = vld [vmem:[%s2025] sm:$0xf]
        %v2027 = vld [vmem:[%s2025 + $0x4] sm:$0xf]
        %v2028 = vld [vmem:[%s2025 + $0x8] sm:$0xf]
        %v2029 = vld [vmem:[%s2025 + $0xc] sm:$0xf]
        %v2030 = vpack.c.bf16 %v2024, %v2024
        %s2031 = scalar_lea.vmem %s5, 1
        %v2032 = vld [vmem:[%s2031] sm:$0x1]
        %v2034 = vlaneseq
        %v2035 = vshrl.u32 %v2034, 7
        %v2036 = vsub.s32 0, %v2035
        %v2037 = vrot.slane %v2032, %v2036
        %v2043 = vunpack.c.l.b16 %v2026
        %v2044 = vunpack.c.l.b16 %v2027
        %v2045 = vunpack.c.l.b16 %v2028
        %v2046 = vunpack.c.l.b16 %v2029
        %v2047 = vpack.c.b16 %v2044, %v2043
        %v2048 = vpack.c.b16 %v2046, %v2045
        %v2052 = vsel %vm591, %v2030, 0
        %2054 = vmatprep.subr.bf16.mxu0 0
        %2055 = vmatpush1.bf16.msra.mxu0 %v2047
        %2056 = vmatprep.subr.bf16.mxu0 0
        %2057 = vmatpush1.bf16.msra.mxu0 %v2048
        %2058 = vmatprep.subr.bf16.mxu0 0
        %2059 = vmatpush1.bf16.msra.mxu0 0
        %2060 = vmatprep.subr.bf16.mxu0 0
        %2061 = vmatpush1.bf16.msra.mxu0 0
        %2062 = vmatprep.subr.bf16.mxu0 0
        %2063 = vmatpush1.bf16.msra.mxu0 0
        %2064 = vmatprep.subr.bf16.mxu0 0
        %2065 = vmatpush1.bf16.msra.mxu0 0
        %2066 = vmatprep.subr.bf16.mxu0 0
        %2067 = vmatpush1.bf16.msra.mxu0 0
        %2068 = vmatprep.subr.bf16.mxu0 0
        %2069 = vmatpush1.bf16.msra.mxu0 0
        %2070 = vmatprep.subr.bf16.mxu0 0
        %2071 = vmatpush1.bf16.msra.mxu0 0
        %2072 = vmatprep.subr.bf16.mxu0 0
        %2073 = vmatpush1.bf16.msra.mxu0 0
        %2074 = vmatprep.subr.bf16.mxu0 0
        %2075 = vmatpush1.bf16.msra.mxu0 0
        %2076 = vmatprep.subr.bf16.mxu0 0
        %2077 = vmatpush1.bf16.msra.mxu0 0
        %2078 = vmatprep.subr.bf16.mxu0 0
        %2079 = vmatpush1.bf16.msra.mxu0 0
        %2080 = vmatprep.subr.bf16.mxu0 0
        %2081 = vmatpush1.bf16.msra.mxu0 0
        %2082 = vmatprep.subr.bf16.mxu0 0
        %2083 = vmatpush1.bf16.msra.mxu0 0
        %2084 = vmatprep.subr.bf16.mxu0 0
        %2085 = vmatpush1.bf16.msra.mxu0 0
        %2086 = vmatprep.mubr.bf16.mxu0 0
        %2087 = vmatmul.mubr.bf16.gmra.mrb[0].mxu0 %v2052
        %v2088 = vpop.f32.mrb[0].mxu0
        %v2089 = vadd.f32 %v2037, %v2088
        %v2090 = vpop.f32.mrb[0].mxu0
        %v2091 = vpop.f32.mrb[0].mxu0
        %v2092 = vpop.f32.mrb[0].mxu0
        %2093 = vdwg.mxu0
        %2095 = vrot.lane.b32.xlu0 %v2089, 120
        %v2096 = vpop.permute.xlu0 %2095
        %2098 = vrot.lane.b32.xlu0 %v2089, 112
        %v2099 = vpop.permute.xlu0 %2098
        %2101 = vrot.lane.b32.xlu0 %v2089, 104
        %v2102 = vpop.permute.xlu0 %2101
        %2104 = vrot.lane.b32.xlu0 %v2089, 96
        %v2105 = vpop.permute.xlu0 %2104
        %2107 = vrot.lane.b32.xlu0 %v2089, 88
        %v2108 = vpop.permute.xlu0 %2107
        %2110 = vrot.lane.b32.xlu0 %v2089, 80
        %v2111 = vpop.permute.xlu0 %2110
        %2113 = vrot.lane.b32.xlu0 %v2089, 72
        %v2114 = vpop.permute.xlu0 %2113
        %2116 = vrot.lane.b32.xlu0 %v2089, 64
        %v2117 = vpop.permute.xlu0 %2116
        %2119 = vrot.lane.b32.xlu0 %v2089, 56
        %v2120 = vpop.permute.xlu0 %2119
        %2122 = vrot.lane.b32.xlu0 %v2089, 48
        %v2123 = vpop.permute.xlu0 %2122
        %2125 = vrot.lane.b32.xlu0 %v2089, 40
        %v2126 = vpop.permute.xlu0 %2125
        %v2128 = vcombine.low %v2089, %v2099
        %v2129 = vcombine.high %v2089, %v2099
        %v2131 = vunpack.c.l.s4 1983009808
        %v2132 = vunpack.c.0.s8 %v2131
        %v2133 = vlaneseq
        %v2134 = vshrl.u32 %v2133, 7
        %v2135 = vsub.s32 %v2132, %v2134
        %v2136 = vrot.slane %v2128, %v2135
        %v2138 = vunpack.c.l.s4 1983009808
        %v2139 = vunpack.c.0.s8 %v2138
        %v2140 = vlaneseq
        %v2141 = vshrl.u32 %v2140, 7
        %v2142 = vsub.s32 %v2139, %v2141
        %v2143 = vrot.slane %v2129, %v2142
        %v2144 = vcombine.low %v2096, %v2102
        %v2145 = vcombine.high %v2096, %v2102
        %v2147 = vunpack.c.l.s4 1983009808
        %v2148 = vunpack.c.0.s8 %v2147
        %v2149 = vlaneseq
        %v2150 = vshrl.u32 %v2149, 7
        %v2151 = vsub.s32 %v2148, %v2150
        %v2152 = vrot.slane %v2144, %v2151
        %v2154 = vunpack.c.l.s4 1983009808
        %v2155 = vunpack.c.0.s8 %v2154
        %v2156 = vlaneseq
        %v2157 = vshrl.u32 %v2156, 7
        %v2158 = vsub.s32 %v2155, %v2157
        %v2159 = vrot.slane %v2145, %v2158
        %v2160 = vcombine.low %v2105, %v2111
        %v2161 = vcombine.high %v2105, %v2111
        %v2163 = vunpack.c.l.s4 1983009808
        %v2164 = vunpack.c.0.s8 %v2163
        %v2165 = vlaneseq
        %v2166 = vshrl.u32 %v2165, 7
        %v2167 = vsub.s32 %v2164, %v2166
        %v2168 = vrot.slane %v2160, %v2167
        %v2170 = vunpack.c.l.s4 1983009808
        %v2171 = vunpack.c.0.s8 %v2170
        %v2172 = vlaneseq
        %v2173 = vshrl.u32 %v2172, 7
        %v2174 = vsub.s32 %v2171, %v2173
        %v2175 = vrot.slane %v2161, %v2174
        %v2176 = vcombine.low %v2108, %v2114
        %v2177 = vcombine.high %v2108, %v2114
        %v2179 = vunpack.c.l.s4 1983009808
        %v2180 = vunpack.c.0.s8 %v2179
        %v2181 = vlaneseq
        %v2182 = vshrl.u32 %v2181, 7
        %v2183 = vsub.s32 %v2180, %v2182
        %v2184 = vrot.slane %v2176, %v2183
        %v2186 = vunpack.c.l.s4 1983009808
        %v2187 = vunpack.c.0.s8 %v2186
        %v2188 = vlaneseq
        %v2189 = vshrl.u32 %v2188, 7
        %v2190 = vsub.s32 %v2187, %v2189
        %v2191 = vrot.slane %v2177, %v2190
        %v2192 = vcombine.low %v2136, %v2152
        %v2193 = vcombine.high %v2136, %v2152
        %v2195 = vunpack.c.l.s4 1934713408
        %v2196 = vunpack.c.0.s8 %v2195
        %v2197 = vlaneseq
        %v2198 = vshrl.u32 %v2197, 7
        %v2199 = vsub.s32 %v2196, %v2198
        %v2200 = vrot.slane %v2192, %v2199
        %v2202 = vunpack.c.l.s4 1934713408
        %v2203 = vunpack.c.0.s8 %v2202
        %v2204 = vlaneseq
        %v2205 = vshrl.u32 %v2204, 7
        %v2206 = vsub.s32 %v2203, %v2205
        %v2207 = vrot.slane %v2193, %v2206
        %v2208 = vcombine.low %v2143, %v2159
        %v2209 = vcombine.high %v2143, %v2159
        %v2211 = vunpack.c.l.s4 1934713408
        %v2212 = vunpack.c.0.s8 %v2211
        %v2213 = vlaneseq
        %v2214 = vshrl.u32 %v2213, 7
        %v2215 = vsub.s32 %v2212, %v2214
        %v2216 = vrot.slane %v2208, %v2215
        %v2218 = vunpack.c.l.s4 1934713408
        %v2219 = vunpack.c.0.s8 %v2218
        %v2220 = vlaneseq
        %v2221 = vshrl.u32 %v2220, 7
        %v2222 = vsub.s32 %v2219, %v2221
        %v2223 = vrot.slane %v2209, %v2222
        %v2224 = vcombine.low %v2168, %v2184
        %v2225 = vcombine.high %v2168, %v2184
        %v2227 = vunpack.c.l.s4 1934713408
        %v2228 = vunpack.c.0.s8 %v2227
        %v2229 = vlaneseq
        %v2230 = vshrl.u32 %v2229, 7
        %v2231 = vsub.s32 %v2228, %v2230
        %v2232 = vrot.slane %v2224, %v2231
        %v2234 = vunpack.c.l.s4 1934713408
        %v2235 = vunpack.c.0.s8 %v2234
        %v2236 = vlaneseq
        %v2237 = vshrl.u32 %v2236, 7
        %v2238 = vsub.s32 %v2235, %v2237
        %v2239 = vrot.slane %v2225, %v2238
        %v2240 = vcombine.low %v2175, %v2191
        %v2241 = vcombine.high %v2175, %v2191
        %v2243 = vunpack.c.l.s4 1934713408
        %v2244 = vunpack.c.0.s8 %v2243
        %v2245 = vlaneseq
        %v2246 = vshrl.u32 %v2245, 7
        %v2247 = vsub.s32 %v2244, %v2246
        %v2248 = vrot.slane %v2240, %v2247
        %v2250 = vunpack.c.l.s4 1934713408
        %v2251 = vunpack.c.0.s8 %v2250
        %v2252 = vlaneseq
        %v2253 = vshrl.u32 %v2252, 7
        %v2254 = vsub.s32 %v2251, %v2253
        %v2255 = vrot.slane %v2241, %v2254
        %v2256 = vcombine.low %v2200, %v2232
        %v2257 = vcombine.high %v2200, %v2232
        %v2258 = vcombine.low %v2207, %v2239
        %v2259 = vcombine.high %v2207, %v2239
        %v2260 = vcombine.low %v2216, %v2248
        %v2261 = vcombine.high %v2216, %v2248
        %v2262 = vcombine.low %v2223, %v2255
        %v2263 = vcombine.high %v2223, %v2255
        %v2264 = vcombine.low %v2117, %v2123
        %v2265 = vcombine.high %v2117, %v2123
        %v2267 = vunpack.c.l.s4 1983009808
        %v2268 = vunpack.c.0.s8 %v2267
        %v2269 = vlaneseq
        %v2270 = vshrl.u32 %v2269, 7
        %v2271 = vsub.s32 %v2268, %v2270
        %v2272 = vrot.slane %v2264, %v2271
        %v2274 = vunpack.c.l.s4 1983009808
        %v2275 = vunpack.c.0.s8 %v2274
        %v2276 = vlaneseq
        %v2277 = vshrl.u32 %v2276, 7
        %v2278 = vsub.s32 %v2275, %v2277
        %v2279 = vrot.slane %v2265, %v2278
        %v2280 = vcombine.low %v2120, %v2126
        %v2281 = vcombine.high %v2120, %v2126
        %v2283 = vunpack.c.l.s4 1983009808
        %v2284 = vunpack.c.0.s8 %v2283
        %v2285 = vlaneseq
        %v2286 = vshrl.u32 %v2285, 7
        %v2287 = vsub.s32 %v2284, %v2286
        %v2288 = vrot.slane %v2280, %v2287
        %v2290 = vunpack.c.l.s4 1983009808
        %v2291 = vunpack.c.0.s8 %v2290
        %v2292 = vlaneseq
        %v2293 = vshrl.u32 %v2292, 7
        %v2294 = vsub.s32 %v2291, %v2293
        %v2295 = vrot.slane %v2281, %v2294
        %v2296 = vcombine.low %v2272, %v2288
        %v2297 = vcombine.high %v2272, %v2288
        %v2299 = vunpack.c.l.s4 1934713408
        %v2300 = vunpack.c.0.s8 %v2299
        %v2301 = vlaneseq
        %v2302 = vshrl.u32 %v2301, 7
        %v2303 = vsub.s32 %v2300, %v2302
        %v2304 = vrot.slane %v2296, %v2303
        %v2306 = vunpack.c.l.s4 1934713408
        %v2307 = vunpack.c.0.s8 %v2306
        %v2308 = vlaneseq
        %v2309 = vshrl.u32 %v2308, 7
        %v2310 = vsub.s32 %v2307, %v2309
        %v2311 = vrot.slane %v2297, %v2310
        %v2312 = vcombine.low %v2279, %v2295
        %v2313 = vcombine.high %v2279, %v2295
        %v2315 = vunpack.c.l.s4 1934713408
        %v2316 = vunpack.c.0.s8 %v2315
        %v2317 = vlaneseq
        %v2318 = vshrl.u32 %v2317, 7
        %v2319 = vsub.s32 %v2316, %v2318
        %v2320 = vrot.slane %v2312, %v2319
        %v2322 = vunpack.c.l.s4 1934713408
        %v2323 = vunpack.c.0.s8 %v2322
        %v2324 = vlaneseq
        %v2325 = vshrl.u32 %v2324, 7
        %v2326 = vsub.s32 %v2323, %v2325
        %v2327 = vrot.slane %v2313, %v2326
        %v2328 = vcombine.high %v2304, 0.0
        %v2329 = vcombine.high %v2311, 0.0
        %v2330 = vcombine.high %v2320, 0.0
        %v2331 = vcombine.high %v2327, 0.0
        %v2332 = vcombine.low %v2256, %v2258
        %v2333 = vcombine.high %v2256, %v2258
        %v2335 = vunpack.c.l.s4 1983009808
        %v2336 = vunpack.c.0.s8 %v2335
        %v2337 = vlaneseq
        %v2338 = vshrl.u32 %v2337, 7
        %v2339 = vsub.s32 %v2336, %v2338
        %v2340 = vrot.slane %v2332, %v2339
        %v2342 = vunpack.c.l.s4 1983009808
        %v2343 = vunpack.c.0.s8 %v2342
        %v2344 = vlaneseq
        %v2345 = vshrl.u32 %v2344, 7
        %v2346 = vsub.s32 %v2343, %v2345
        %v2347 = vrot.slane %v2333, %v2346
        %v2348 = vcombine.low %v2257, %v2259
        %v2349 = vcombine.high %v2257, %v2259
        %v2351 = vunpack.c.l.s4 1983009808
        %v2352 = vunpack.c.0.s8 %v2351
        %v2353 = vlaneseq
        %v2354 = vshrl.u32 %v2353, 7
        %v2355 = vsub.s32 %v2352, %v2354
        %v2356 = vrot.slane %v2348, %v2355
        %v2358 = vunpack.c.l.s4 1983009808
        %v2359 = vunpack.c.0.s8 %v2358
        %v2360 = vlaneseq
        %v2361 = vshrl.u32 %v2360, 7
        %v2362 = vsub.s32 %v2359, %v2361
        %v2363 = vrot.slane %v2349, %v2362
        %v2364 = vcombine.low %v2260, %v2262
        %v2365 = vcombine.high %v2260, %v2262
        %v2367 = vunpack.c.l.s4 1983009808
        %v2368 = vunpack.c.0.s8 %v2367
        %v2369 = vlaneseq
        %v2370 = vshrl.u32 %v2369, 7
        %v2371 = vsub.s32 %v2368, %v2370
        %v2372 = vrot.slane %v2364, %v2371
        %v2374 = vunpack.c.l.s4 1983009808
        %v2375 = vunpack.c.0.s8 %v2374
        %v2376 = vlaneseq
        %v2377 = vshrl.u32 %v2376, 7
        %v2378 = vsub.s32 %v2375, %v2377
        %v2379 = vrot.slane %v2365, %v2378
        %v2380 = vcombine.low %v2261, %v2263
        %v2381 = vcombine.high %v2261, %v2263
        %v2383 = vunpack.c.l.s4 1983009808
        %v2384 = vunpack.c.0.s8 %v2383
        %v2385 = vlaneseq
        %v2386 = vshrl.u32 %v2385, 7
        %v2387 = vsub.s32 %v2384, %v2386
        %v2388 = vrot.slane %v2380, %v2387
        %v2390 = vunpack.c.l.s4 1983009808
        %v2391 = vunpack.c.0.s8 %v2390
        %v2392 = vlaneseq
        %v2393 = vshrl.u32 %v2392, 7
        %v2394 = vsub.s32 %v2391, %v2393
        %v2395 = vrot.slane %v2381, %v2394
        %v2396 = vcombine.low %v2340, %v2356
        %v2397 = vcombine.high %v2340, %v2356
        %v2399 = vunpack.c.l.s4 1934713408
        %v2400 = vunpack.c.0.s8 %v2399
        %v2401 = vlaneseq
        %v2402 = vshrl.u32 %v2401, 7
        %v2403 = vsub.s32 %v2400, %v2402
        %v2404 = vrot.slane %v2396, %v2403
        %v2406 = vunpack.c.l.s4 1934713408
        %v2407 = vunpack.c.0.s8 %v2406
        %v2408 = vlaneseq
        %v2409 = vshrl.u32 %v2408, 7
        %v2410 = vsub.s32 %v2407, %v2409
        %v2411 = vrot.slane %v2397, %v2410
        %v2412 = vcombine.low %v2347, %v2363
        %v2413 = vcombine.high %v2347, %v2363
        %v2415 = vunpack.c.l.s4 1934713408
        %v2416 = vunpack.c.0.s8 %v2415
        %v2417 = vlaneseq
        %v2418 = vshrl.u32 %v2417, 7
        %v2419 = vsub.s32 %v2416, %v2418
        %v2420 = vrot.slane %v2412, %v2419
        %v2422 = vunpack.c.l.s4 1934713408
        %v2423 = vunpack.c.0.s8 %v2422
        %v2424 = vlaneseq
        %v2425 = vshrl.u32 %v2424, 7
        %v2426 = vsub.s32 %v2423, %v2425
        %v2427 = vrot.slane %v2413, %v2426
        %v2428 = vcombine.low %v2372, %v2388
        %v2429 = vcombine.high %v2372, %v2388
        %v2431 = vunpack.c.l.s4 1934713408
        %v2432 = vunpack.c.0.s8 %v2431
        %v2433 = vlaneseq
        %v2434 = vshrl.u32 %v2433, 7
        %v2435 = vsub.s32 %v2432, %v2434
        %v2436 = vrot.slane %v2428, %v2435
        %v2438 = vunpack.c.l.s4 1934713408
        %v2439 = vunpack.c.0.s8 %v2438
        %v2440 = vlaneseq
        %v2441 = vshrl.u32 %v2440, 7
        %v2442 = vsub.s32 %v2439, %v2441
        %v2443 = vrot.slane %v2429, %v2442
        %v2444 = vcombine.low %v2379, %v2395
        %v2445 = vcombine.high %v2379, %v2395
        %v2447 = vunpack.c.l.s4 1934713408
        %v2448 = vunpack.c.0.s8 %v2447
        %v2449 = vlaneseq
        %v2450 = vshrl.u32 %v2449, 7
        %v2451 = vsub.s32 %v2448, %v2450
        %v2452 = vrot.slane %v2444, %v2451
        %v2454 = vunpack.c.l.s4 1934713408
        %v2455 = vunpack.c.0.s8 %v2454
        %v2456 = vlaneseq
        %v2457 = vshrl.u32 %v2456, 7
        %v2458 = vsub.s32 %v2455, %v2457
        %v2459 = vrot.slane %v2445, %v2458
        %v2460 = vcombine.low %v2404, %v2436
        %v2461 = vcombine.high %v2404, %v2436
        %v2462 = vcombine.low %v2411, %v2443
        %v2463 = vcombine.high %v2411, %v2443
        %v2464 = vcombine.low %v2420, %v2452
        %v2465 = vcombine.high %v2420, %v2452
        %v2466 = vcombine.low %v2427, %v2459
        %v2467 = vcombine.high %v2427, %v2459
        %v2468 = vcombine.low %v2304, %v2311
        %v2470 = vunpack.c.l.s4 1983009808
        %v2471 = vunpack.c.0.s8 %v2470
        %v2472 = vlaneseq
        %v2473 = vshrl.u32 %v2472, 7
        %v2474 = vsub.s32 %v2471, %v2473
        %v2475 = vrot.slane %v2468, %v2474
        %v2476 = vcombine.low %v2328, %v2329
        %v2478 = vunpack.c.l.s4 1983009808
        %v2479 = vunpack.c.0.s8 %v2478
        %v2480 = vlaneseq
        %v2481 = vshrl.u32 %v2480, 7
        %v2482 = vsub.s32 %v2479, %v2481
        %v2483 = vrot.slane %v2476, %v2482
        %v2484 = vcombine.low %v2320, %v2327
        %v2486 = vunpack.c.l.s4 1983009808
        %v2487 = vunpack.c.0.s8 %v2486
        %v2488 = vlaneseq
        %v2489 = vshrl.u32 %v2488, 7
        %v2490 = vsub.s32 %v2487, %v2489
        %v2491 = vrot.slane %v2484, %v2490
        %v2492 = vcombine.low %v2330, %v2331
        %v2494 = vunpack.c.l.s4 1983009808
        %v2495 = vunpack.c.0.s8 %v2494
        %v2496 = vlaneseq
        %v2497 = vshrl.u32 %v2496, 7
        %v2498 = vsub.s32 %v2495, %v2497
        %v2499 = vrot.slane %v2492, %v2498
        %v2500 = vcombine.low %v2475, %v2483
        %v2501 = vcombine.high %v2475, %v2483
        %v2503 = vunpack.c.l.s4 1934713408
        %v2504 = vunpack.c.0.s8 %v2503
        %v2505 = vlaneseq
        %v2506 = vshrl.u32 %v2505, 7
        %v2507 = vsub.s32 %v2504, %v2506
        %v2508 = vrot.slane %v2500, %v2507
        %v2510 = vunpack.c.l.s4 1934713408
        %v2511 = vunpack.c.0.s8 %v2510
        %v2512 = vlaneseq
        %v2513 = vshrl.u32 %v2512, 7
        %v2514 = vsub.s32 %v2511, %v2513
        %v2515 = vrot.slane %v2501, %v2514
        %v2516 = vcombine.low %v2491, %v2499
        %v2517 = vcombine.high %v2491, %v2499
        %v2519 = vunpack.c.l.s4 1934713408
        %v2520 = vunpack.c.0.s8 %v2519
        %v2521 = vlaneseq
        %v2522 = vshrl.u32 %v2521, 7
        %v2523 = vsub.s32 %v2520, %v2522
        %v2524 = vrot.slane %v2516, %v2523
        %v2526 = vunpack.c.l.s4 1934713408
        %v2527 = vunpack.c.0.s8 %v2526
        %v2528 = vlaneseq
        %v2529 = vshrl.u32 %v2528, 7
        %v2530 = vsub.s32 %v2527, %v2529
        %v2531 = vrot.slane %v2517, %v2530
        %v2532 = vcombine.low %v2508, %v2524
        %v2533 = vcombine.high %v2508, %v2524
        %v2534 = vcombine.low %v2515, %v2531
        %v2535 = vcombine.high %v2515, %v2531
        %v2536 = vpack.c.bf16 %v2460, %v2460
        %v2537 = vpack.c.bf16 %v2461, %v2461
        %v2538 = vpack.c.bf16 %v2462, %v2462
        %v2539 = vpack.c.bf16 %v2463, %v2463
        %v2540 = vpack.c.bf16 %v2464, %v2464
        %v2541 = vpack.c.bf16 %v2465, %v2465
        %v2542 = vpack.c.bf16 %v2466, %v2466
        %v2543 = vpack.c.bf16 %v2467, %v2467
        %v2544 = vpack.c.bf16 %v2532, %v2532
        %v2545 = vpack.c.bf16 %v2533, %v2533
        %v2546 = vpack.c.bf16 %v2534, %v2534
        %v2547 = vpack.c.bf16 %v2535, %v2535
        %v2549 = vsel %vm1167, %v2536, 0
        %v2552 = vsel %vm1167, %v2540, 0
        %2554 = vmatprep.subr.bf16.mxu0 0
        %2555 = vmatpush1.bf16.xpose.msra.mxu0 %v2552
        %2556 = vmatprep.subr.bf16.mxu0 0
        %2557 = vmatpush1.bf16.xpose.msra.mxu0 0
        %2558 = vmatprep.subr.bf16.mxu0 0
        %2559 = vmatpush1.bf16.xpose.msra.mxu0 0
        %2560 = vmatprep.subr.bf16.mxu0 0
        %2561 = vmatpush1.bf16.xpose.msra.mxu0 0
        %2562 = vmatprep.subr.bf16.mxu0 0
        %2563 = vmatpush1.bf16.xpose.msra.mxu0 0
        %2564 = vmatprep.subr.bf16.mxu0 0
        %2565 = vmatpush1.bf16.xpose.msra.mxu0 0
        %2566 = vmatprep.subr.bf16.mxu0 0
        %2567 = vmatpush1.bf16.xpose.msra.mxu0 0
        %2568 = vmatprep.subr.bf16.mxu0 0
        %2569 = vmatpush1.bf16.xpose.msra.mxu0 0
        %2570 = vmatprep.subr.bf16.mxu0 0
        %2571 = vmatpush1.bf16.xpose.msra.mxu0 0
        %2572 = vmatprep.subr.bf16.mxu0 0
        %2573 = vmatpush1.bf16.xpose.msra.mxu0 0
        %2574 = vmatprep.subr.bf16.mxu0 0
        %2575 = vmatpush1.bf16.xpose.msra.mxu0 0
        %2576 = vmatprep.subr.bf16.mxu0 0
        %2577 = vmatpush1.bf16.xpose.msra.mxu0 0
        %2578 = vmatprep.subr.bf16.mxu0 0
        %2579 = vmatpush1.bf16.xpose.msra.mxu0 0
        %2580 = vmatprep.subr.bf16.mxu0 0
        %2581 = vmatpush1.bf16.xpose.msra.mxu0 0
        %2582 = vmatprep.subr.bf16.mxu0 0
        %2583 = vmatpush1.bf16.xpose.msra.mxu0 0
        %2584 = vmatprep.subr.bf16.mxu0 0
        %2585 = vmatpush1.bf16.xpose.msra.mxu0 0
        %2586 = vmatprep.mubr.bf16.mxu0 0
        %2587 = vmatmul.mubr.bf16.gmra.mrb[0].mxu0 %v2549
        %v2588 = vpop.f32.mrb[0].mxu0
        %v2589 = vadd.f32 %v1165, %v2588
        %v2590 = vpop.f32.mrb[0].mxu0
        %v2591 = vpop.f32.mrb[0].mxu0
        %v2592 = vpop.f32.mrb[0].mxu0
        %2593 = vdwg.mxu0
        %v2595 = vsel %vm1167, %v2537, 0
        %v2598 = vsel %vm1167, %v2541, 0
        %2600 = vmatprep.subr.bf16.mxu0 0
        %2601 = vmatpush1.bf16.xpose.msra.mxu0 %v2598
        %2602 = vmatprep.subr.bf16.mxu0 0
        %2603 = vmatpush1.bf16.xpose.msra.mxu0 0
        %2604 = vmatprep.subr.bf16.mxu0 0
        %2605 = vmatpush1.bf16.xpose.msra.mxu0 0
        %2606 = vmatprep.subr.bf16.mxu0 0
        %2607 = vmatpush1.bf16.xpose.msra.mxu0 0
        %2608 = vmatprep.subr.bf16.mxu0 0
        %2609 = vmatpush1.bf16.xpose.msra.mxu0 0
        %2610 = vmatprep.subr.bf16.mxu0 0
        %2611 = vmatpush1.bf16.xpose.msra.mxu0 0
        %2612 = vmatprep.subr.bf16.mxu0 0
        %2613 = vmatpush1.bf16.xpose.msra.mxu0 0
        %2614 = vmatprep.subr.bf16.mxu0 0
        %2615 = vmatpush1.bf16.xpose.msra.mxu0 0
        %2616 = vmatprep.subr.bf16.mxu0 0
        %2617 = vmatpush1.bf16.xpose.msra.mxu0 0
        %2618 = vmatprep.subr.bf16.mxu0 0
        %2619 = vmatpush1.bf16.xpose.msra.mxu0 0
        %2620 = vmatprep.subr.bf16.mxu0 0
        %2621 = vmatpush1.bf16.xpose.msra.mxu0 0
        %2622 = vmatprep.subr.bf16.mxu0 0
        %2623 = vmatpush1.bf16.xpose.msra.mxu0 0
        %2624 = vmatprep.subr.bf16.mxu0 0
        %2625 = vmatpush1.bf16.xpose.msra.mxu0 0
        %2626 = vmatprep.subr.bf16.mxu0 0
        %2627 = vmatpush1.bf16.xpose.msra.mxu0 0
        %2628 = vmatprep.subr.bf16.mxu0 0
        %2629 = vmatpush1.bf16.xpose.msra.mxu0 0
        %2630 = vmatprep.subr.bf16.mxu0 0
        %2631 = vmatpush1.bf16.xpose.msra.mxu0 0
        %2632 = vmatprep.mubr.bf16.mxu0 0
        %2633 = vmatmul.mubr.bf16.gmra.mrb[0].mxu0 %v2595
        %v2634 = vpop.f32.mrb[0].mxu0
        %v2635 = vadd.f32 %v1165, %v2634
        %v2636 = vpop.f32.mrb[0].mxu0
        %v2637 = vpop.f32.mrb[0].mxu0
        %v2638 = vpop.f32.mrb[0].mxu0
        %2639 = vdwg.mxu0
        %v2641 = vsel %vm1167, %v2538, 0
        %v2644 = vsel %vm1167, %v2542, 0
        %2646 = vmatprep.subr.bf16.mxu0 0
        %2647 = vmatpush1.bf16.xpose.msra.mxu0 %v2644
        %2648 = vmatprep.subr.bf16.mxu0 0
        %2649 = vmatpush1.bf16.xpose.msra.mxu0 0
        %2650 = vmatprep.subr.bf16.mxu0 0
        %2651 = vmatpush1.bf16.xpose.msra.mxu0 0
        %2652 = vmatprep.subr.bf16.mxu0 0
        %2653 = vmatpush1.bf16.xpose.msra.mxu0 0
        %2654 = vmatprep.subr.bf16.mxu0 0
        %2655 = vmatpush1.bf16.xpose.msra.mxu0 0
        %2656 = vmatprep.subr.bf16.mxu0 0
        %2657 = vmatpush1.bf16.xpose.msra.mxu0 0
        %2658 = vmatprep.subr.bf16.mxu0 0
        %2659 = vmatpush1.bf16.xpose.msra.mxu0 0
        %2660 = vmatprep.subr.bf16.mxu0 0
        %2661 = vmatpush1.bf16.xpose.msra.mxu0 0
        %2662 = vmatprep.subr.bf16.mxu0 0
        %2663 = vmatpush1.bf16.xpose.msra.mxu0 0
        %2664 = vmatprep.subr.bf16.mxu0 0
        %2665 = vmatpush1.bf16.xpose.msra.mxu0 0
        %2666 = vmatprep.subr.bf16.mxu0 0
        %2667 = vmatpush1.bf16.xpose.msra.mxu0 0
        %2668 = vmatprep.subr.bf16.mxu0 0
        %2669 = vmatpush1.bf16.xpose.msra.mxu0 0
        %2670 = vmatprep.subr.bf16.mxu0 0
        %2671 = vmatpush1.bf16.xpose.msra.mxu0 0
        %2672 = vmatprep.subr.bf16.mxu0 0
        %2673 = vmatpush1.bf16.xpose.msra.mxu0 0
        %2674 = vmatprep.subr.bf16.mxu0 0
        %2675 = vmatpush1.bf16.xpose.msra.mxu0 0
        %2676 = vmatprep.subr.bf16.mxu0 0
        %2677 = vmatpush1.bf16.xpose.msra.mxu0 0
        %2678 = vmatprep.mubr.bf16.mxu0 0
        %2679 = vmatmul.mubr.bf16.gmra.mrb[0].mxu0 %v2641
        %v2680 = vpop.f32.mrb[0].mxu0
        %v2681 = vadd.f32 %v1165, %v2680
        %v2682 = vpop.f32.mrb[0].mxu0
        %v2683 = vpop.f32.mrb[0].mxu0
        %v2684 = vpop.f32.mrb[0].mxu0
        %2685 = vdwg.mxu0
        %v2687 = vsel %vm1167, %v2539, 0
        %v2690 = vsel %vm1167, %v2543, 0
        %2692 = vmatprep.subr.bf16.mxu0 0
        %2693 = vmatpush1.bf16.xpose.msra.mxu0 %v2690
        %2694 = vmatprep.subr.bf16.mxu0 0
        %2695 = vmatpush1.bf16.xpose.msra.mxu0 0
        %2696 = vmatprep.subr.bf16.mxu0 0
        %2697 = vmatpush1.bf16.xpose.msra.mxu0 0
        %2698 = vmatprep.subr.bf16.mxu0 0
        %2699 = vmatpush1.bf16.xpose.msra.mxu0 0
        %2700 = vmatprep.subr.bf16.mxu0 0
        %2701 = vmatpush1.bf16.xpose.msra.mxu0 0
        %2702 = vmatprep.subr.bf16.mxu0 0
        %2703 = vmatpush1.bf16.xpose.msra.mxu0 0
        %2704 = vmatprep.subr.bf16.mxu0 0
        %2705 = vmatpush1.bf16.xpose.msra.mxu0 0
        %2706 = vmatprep.subr.bf16.mxu0 0
        %2707 = vmatpush1.bf16.xpose.msra.mxu0 0
        %2708 = vmatprep.subr.bf16.mxu0 0
        %2709 = vmatpush1.bf16.xpose.msra.mxu0 0
        %2710 = vmatprep.subr.bf16.mxu0 0
        %2711 = vmatpush1.bf16.xpose.msra.mxu0 0
        %2712 = vmatprep.subr.bf16.mxu0 0
        %2713 = vmatpush1.bf16.xpose.msra.mxu0 0
        %2714 = vmatprep.subr.bf16.mxu0 0
        %2715 = vmatpush1.bf16.xpose.msra.mxu0 0
        %2716 = vmatprep.subr.bf16.mxu0 0
        %2717 = vmatpush1.bf16.xpose.msra.mxu0 0
        %2718 = vmatprep.subr.bf16.mxu0 0
        %2719 = vmatpush1.bf16.xpose.msra.mxu0 0
        %2720 = vmatprep.subr.bf16.mxu0 0
        %2721 = vmatpush1.bf16.xpose.msra.mxu0 0
        %2722 = vmatprep.subr.bf16.mxu0 0
        %2723 = vmatpush1.bf16.xpose.msra.mxu0 0
        %2724 = vmatprep.mubr.bf16.mxu0 0
        %2725 = vmatmul.mubr.bf16.gmra.mrb[0].mxu0 %v2687
        %v2726 = vpop.f32.mrb[0].mxu0
        %v2727 = vadd.f32 %v1165, %v2726
        %v2728 = vpop.f32.mrb[0].mxu0
        %v2729 = vpop.f32.mrb[0].mxu0
        %v2730 = vpop.f32.mrb[0].mxu0
        %2731 = vdwg.mxu0
        %v2732 = vsel %vm1167, %v2589, -inf
        %2733 = vmax.xlane.f32.xlu0 %v2732
        %v2734 = vpop.xlane.xlu0 %2733
        %v2735 = vsel %vm1167, %v2635, -inf
        %2736 = vmax.xlane.f32.xlu0 %v2735
        %v2737 = vpop.xlane.xlu0 %2736
        %v2738 = vsel %vm1167, %v2681, -inf
        %2739 = vmax.xlane.f32.xlu0 %v2738
        %v2740 = vpop.xlane.xlu0 %2739
        %v2741 = vsel %vm1167, %v2727, -inf
        %2742 = vmax.xlane.f32.xlu0 %v2741
        %v2743 = vpop.xlane.xlu0 %2742
        %v2744 = vsub.f32 %v2589, %v2734
        %v2745 = vsub.f32 %v2635, %v2737
        %v2746 = vsub.f32 %v2681, %v2740
        %v2747 = vsub.f32 %v2727, %v2743
        %v2748 = vmul.f32 %v2744, 1.442695
        %v2749 = vpow.pop %v2748
        %v2750 = vmul.f32 %v2745, 1.442695
        %v2751 = vpow.pop %v2750
        %v2752 = vmul.f32 %v2746, 1.442695
        %v2753 = vpow.pop %v2752
        %v2754 = vmul.f32 %v2747, 1.442695
        %v2755 = vpow.pop %v2754
        %v2756 = vsel %vm1167, %v2749, 0.0
        %2757 = vadd.xlane.f32.xlu0 %v2756
        %v2758 = vpop.xlane.xlu0 %2757
        %v2759 = vsel %vm1167, %v2751, 0.0
        %2760 = vadd.xlane.f32.xlu0 %v2759
        %v2761 = vpop.xlane.xlu0 %2760
        %v2762 = vsel %vm1167, %v2753, 0.0
        %2763 = vadd.xlane.f32.xlu0 %v2762
        %v2764 = vpop.xlane.xlu0 %2763
        %v2765 = vsel %vm1167, %v2755, 0.0
        %2766 = vadd.xlane.f32.xlu0 %v2765
        %v2767 = vpop.xlane.xlu0 %2766
        %v2768 = vrcp.pop %v2758
        %v2769 = vrcp.pop %v2761
        %v2770 = vrcp.pop %v2764
        %v2771 = vrcp.pop %v2767
        %v2772 = vmul.f32 %v2749, %v2768
        %v2773 = vmul.f32 %v2751, %v2769
        %v2774 = vmul.f32 %v2753, %v2770
        %v2775 = vmul.f32 %v2755, %v2771
        %v2776 = vpack.c.bf16 %v2772, %v2772
        %v2777 = vpack.c.bf16 %v2773, %v2773
        %v2778 = vpack.c.bf16 %v2774, %v2774
        %v2779 = vpack.c.bf16 %v2775, %v2775
        %v2781 = vsel %vm1167, %v2776, 0
        %v2784 = vsel %vm1403, %v2544, 0
        %2786 = vmatprep.subr.bf16.mxu0 0
        %2787 = vmatpush1.bf16.msra.mxu0 %v2784
        %2788 = vmatprep.subr.bf16.mxu0 0
        %2789 = vmatpush1.bf16.msra.mxu0 0
        %2790 = vmatprep.subr.bf16.mxu0 0
        %2791 = vmatpush1.bf16.msra.mxu0 0
        %2792 = vmatprep.subr.bf16.mxu0 0
        %2793 = vmatpush1.bf16.msra.mxu0 0
        %2794 = vmatprep.subr.bf16.mxu0 0
        %2795 = vmatpush1.bf16.msra.mxu0 0
        %2796 = vmatprep.subr.bf16.mxu0 0
        %2797 = vmatpush1.bf16.msra.mxu0 0
        %2798 = vmatprep.subr.bf16.mxu0 0
        %2799 = vmatpush1.bf16.msra.mxu0 0
        %2800 = vmatprep.subr.bf16.mxu0 0
        %2801 = vmatpush1.bf16.msra.mxu0 0
        %2802 = vmatprep.subr.bf16.mxu0 0
        %2803 = vmatpush1.bf16.msra.mxu0 0
        %2804 = vmatprep.subr.bf16.mxu0 0
        %2805 = vmatpush1.bf16.msra.mxu0 0
        %2806 = vmatprep.subr.bf16.mxu0 0
        %2807 = vmatpush1.bf16.msra.mxu0 0
        %2808 = vmatprep.subr.bf16.mxu0 0
        %2809 = vmatpush1.bf16.msra.mxu0 0
        %2810 = vmatprep.subr.bf16.mxu0 0
        %2811 = vmatpush1.bf16.msra.mxu0 0
        %2812 = vmatprep.subr.bf16.mxu0 0
        %2813 = vmatpush1.bf16.msra.mxu0 0
        %2814 = vmatprep.subr.bf16.mxu0 0
        %2815 = vmatpush1.bf16.msra.mxu0 0
        %2816 = vmatprep.subr.bf16.mxu0 0
        %2817 = vmatpush1.bf16.msra.mxu0 0
        %2818 = vmatprep.mubr.bf16.mxu0 0
        %2819 = vmatmul.mubr.bf16.gmra.mrb[0].mxu0 %v2781
        %v2820 = vpop.f32.mrb[0].mxu0
        %v2821 = vadd.f32 0.0, %v2820
        %v2822 = vpop.f32.mrb[0].mxu0
        %v2823 = vpop.f32.mrb[0].mxu0
        %v2824 = vpop.f32.mrb[0].mxu0
        %2825 = vdwg.mxu0
        %v2827 = vsel %vm1167, %v2777, 0
        %v2830 = vsel %vm1403, %v2545, 0
        %2832 = vmatprep.subr.bf16.mxu0 0
        %2833 = vmatpush1.bf16.msra.mxu0 %v2830
        %2834 = vmatprep.subr.bf16.mxu0 0
        %2835 = vmatpush1.bf16.msra.mxu0 0
        %2836 = vmatprep.subr.bf16.mxu0 0
        %2837 = vmatpush1.bf16.msra.mxu0 0
        %2838 = vmatprep.subr.bf16.mxu0 0
        %2839 = vmatpush1.bf16.msra.mxu0 0
        %2840 = vmatprep.subr.bf16.mxu0 0
        %2841 = vmatpush1.bf16.msra.mxu0 0
        %2842 = vmatprep.subr.bf16.mxu0 0
        %2843 = vmatpush1.bf16.msra.mxu0 0
        %2844 = vmatprep.subr.bf16.mxu0 0
        %2845 = vmatpush1.bf16.msra.mxu0 0
        %2846 = vmatprep.subr.bf16.mxu0 0
        %2847 = vmatpush1.bf16.msra.mxu0 0
        %2848 = vmatprep.subr.bf16.mxu0 0
        %2849 = vmatpush1.bf16.msra.mxu0 0
        %2850 = vmatprep.subr.bf16.mxu0 0
        %2851 = vmatpush1.bf16.msra.mxu0 0
        %2852 = vmatprep.subr.bf16.mxu0 0
        %2853 = vmatpush1.bf16.msra.mxu0 0
        %2854 = vmatprep.subr.bf16.mxu0 0
        %2855 = vmatpush1.bf16.msra.mxu0 0
        %2856 = vmatprep.subr.bf16.mxu0 0
        %2857 = vmatpush1.bf16.msra.mxu0 0
        %2858 = vmatprep.subr.bf16.mxu0 0
        %2859 = vmatpush1.bf16.msra.mxu0 0
        %2860 = vmatprep.subr.bf16.mxu0 0
        %2861 = vmatpush1.bf16.msra.mxu0 0
        %2862 = vmatprep.subr.bf16.mxu0 0
        %2863 = vmatpush1.bf16.msra.mxu0 0
        %2864 = vmatprep.mubr.bf16.mxu0 0
        %2865 = vmatmul.mubr.bf16.gmra.mrb[0].mxu0 %v2827
        %v2866 = vpop.f32.mrb[0].mxu0
        %v2867 = vadd.f32 0.0, %v2866
        %v2868 = vpop.f32.mrb[0].mxu0
        %v2869 = vpop.f32.mrb[0].mxu0
        %v2870 = vpop.f32.mrb[0].mxu0
        %2871 = vdwg.mxu0
        %v2873 = vsel %vm1167, %v2778, 0
        %v2876 = vsel %vm1403, %v2546, 0
        %2878 = vmatprep.subr.bf16.mxu0 0
        %2879 = vmatpush1.bf16.msra.mxu0 %v2876
        %2880 = vmatprep.subr.bf16.mxu0 0
        %2881 = vmatpush1.bf16.msra.mxu0 0
        %2882 = vmatprep.subr.bf16.mxu0 0
        %2883 = vmatpush1.bf16.msra.mxu0 0
        %2884 = vmatprep.subr.bf16.mxu0 0
        %2885 = vmatpush1.bf16.msra.mxu0 0
        %2886 = vmatprep.subr.bf16.mxu0 0
        %2887 = vmatpush1.bf16.msra.mxu0 0
        %2888 = vmatprep.subr.bf16.mxu0 0
        %2889 = vmatpush1.bf16.msra.mxu0 0
        %2890 = vmatprep.subr.bf16.mxu0 0
        %2891 = vmatpush1.bf16.msra.mxu0 0
        %2892 = vmatprep.subr.bf16.mxu0 0
        %2893 = vmatpush1.bf16.msra.mxu0 0
        %2894 = vmatprep.subr.bf16.mxu0 0
        %2895 = vmatpush1.bf16.msra.mxu0 0
        %2896 = vmatprep.subr.bf16.mxu0 0
        %2897 = vmatpush1.bf16.msra.mxu0 0
        %2898 = vmatprep.subr.bf16.mxu0 0
        %2899 = vmatpush1.bf16.msra.mxu0 0
        %2900 = vmatprep.subr.bf16.mxu0 0
        %2901 = vmatpush1.bf16.msra.mxu0 0
        %2902 = vmatprep.subr.bf16.mxu0 0
        %2903 = vmatpush1.bf16.msra.mxu0 0
        %2904 = vmatprep.subr.bf16.mxu0 0
        %2905 = vmatpush1.bf16.msra.mxu0 0
        %2906 = vmatprep.subr.bf16.mxu0 0
        %2907 = vmatpush1.bf16.msra.mxu0 0
        %2908 = vmatprep.subr.bf16.mxu0 0
        %2909 = vmatpush1.bf16.msra.mxu0 0
        %2910 = vmatprep.mubr.bf16.mxu0 0
        %2911 = vmatmul.mubr.bf16.gmra.mrb[0].mxu0 %v2873
        %v2912 = vpop.f32.mrb[0].mxu0
        %v2913 = vadd.f32 0.0, %v2912
        %v2914 = vpop.f32.mrb[0].mxu0
        %v2915 = vpop.f32.mrb[0].mxu0
        %v2916 = vpop.f32.mrb[0].mxu0
        %2917 = vdwg.mxu0
        %v2919 = vsel %vm1167, %v2779, 0
        %v2922 = vsel %vm1403, %v2547, 0
        %2924 = vmatprep.subr.bf16.mxu0 0
        %2925 = vmatpush1.bf16.msra.mxu0 %v2922
        %2926 = vmatprep.subr.bf16.mxu0 0
        %2927 = vmatpush1.bf16.msra.mxu0 0
        %2928 = vmatprep.subr.bf16.mxu0 0
        %2929 = vmatpush1.bf16.msra.mxu0 0
        %2930 = vmatprep.subr.bf16.mxu0 0
        %2931 = vmatpush1.bf16.msra.mxu0 0
        %2932 = vmatprep.subr.bf16.mxu0 0
        %2933 = vmatpush1.bf16.msra.mxu0 0
        %2934 = vmatprep.subr.bf16.mxu0 0
        %2935 = vmatpush1.bf16.msra.mxu0 0
        %2936 = vmatprep.subr.bf16.mxu0 0
        %2937 = vmatpush1.bf16.msra.mxu0 0
        %2938 = vmatprep.subr.bf16.mxu0 0
        %2939 = vmatpush1.bf16.msra.mxu0 0
        %2940 = vmatprep.subr.bf16.mxu0 0
        %2941 = vmatpush1.bf16.msra.mxu0 0
        %2942 = vmatprep.subr.bf16.mxu0 0
        %2943 = vmatpush1.bf16.msra.mxu0 0
        %2944 = vmatprep.subr.bf16.mxu0 0
        %2945 = vmatpush1.bf16.msra.mxu0 0
        %2946 = vmatprep.subr.bf16.mxu0 0
        %2947 = vmatpush1.bf16.msra.mxu0 0
        %2948 = vmatprep.subr.bf16.mxu0 0
        %2949 = vmatpush1.bf16.msra.mxu0 0
        %2950 = vmatprep.subr.bf16.mxu0 0
        %2951 = vmatpush1.bf16.msra.mxu0 0
        %2952 = vmatprep.subr.bf16.mxu0 0
        %2953 = vmatpush1.bf16.msra.mxu0 0
        %2954 = vmatprep.subr.bf16.mxu0 0
        %2955 = vmatpush1.bf16.msra.mxu0 0
        %2956 = vmatprep.mubr.bf16.mxu0 0
        %2957 = vmatmul.mubr.bf16.gmra.mrb[0].mxu0 %v2919
        %v2958 = vpop.f32.mrb[0].mxu0
        %v2959 = vadd.f32 0.0, %v2958
        %v2960 = vpop.f32.mrb[0].mxu0
        %v2961 = vpop.f32.mrb[0].mxu0
        %v2962 = vpop.f32.mrb[0].mxu0
        %2963 = vdwg.mxu0
        %v2964 = vcombine.low %v2821, %v2913
        %v2965 = vcombine.high %v2821, %v2913
        %v2967 = vunpack.c.l.s4 1983009808
        %v2968 = vunpack.c.0.s8 %v2967
        %v2969 = vlaneseq
        %v2970 = vshrl.u32 %v2969, 7
        %v2971 = vsub.s32 %v2968, %v2970
        %v2972 = vrot.slane %v2964, %v2971
        %v2974 = vunpack.c.l.s4 1983009808
        %v2975 = vunpack.c.0.s8 %v2974
        %v2976 = vlaneseq
        %v2977 = vshrl.u32 %v2976, 7
        %v2978 = vsub.s32 %v2975, %v2977
        %v2979 = vrot.slane %v2965, %v2978
        %v2980 = vcombine.low %v2867, %v2959
        %v2981 = vcombine.high %v2867, %v2959
        %v2983 = vunpack.c.l.s4 1983009808
        %v2984 = vunpack.c.0.s8 %v2983
        %v2985 = vlaneseq
        %v2986 = vshrl.u32 %v2985, 7
        %v2987 = vsub.s32 %v2984, %v2986
        %v2988 = vrot.slane %v2980, %v2987
        %v2990 = vunpack.c.l.s4 1983009808
        %v2991 = vunpack.c.0.s8 %v2990
        %v2992 = vlaneseq
        %v2993 = vshrl.u32 %v2992, 7
        %v2994 = vsub.s32 %v2991, %v2993
        %v2995 = vrot.slane %v2981, %v2994
        %v2996 = vcombine.low %v2972, %v2988
        %v2997 = vcombine.high %v2972, %v2988
        %v2999 = vunpack.c.l.s4 1934713408
        %v3000 = vunpack.c.0.s8 %v2999
        %v3001 = vlaneseq
        %v3002 = vshrl.u32 %v3001, 7
        %v3003 = vsub.s32 %v3000, %v3002
        %v3004 = vrot.slane %v2996, %v3003
        %v3006 = vunpack.c.l.s4 1934713408
        %v3007 = vunpack.c.0.s8 %v3006
        %v3008 = vlaneseq
        %v3009 = vshrl.u32 %v3008, 7
        %v3010 = vsub.s32 %v3007, %v3009
        %v3011 = vrot.slane %v2997, %v3010
        %v3012 = vcombine.low %v2979, %v2995
        %v3013 = vcombine.high %v2979, %v2995
        %v3015 = vunpack.c.l.s4 1934713408
        %v3016 = vunpack.c.0.s8 %v3015
        %v3017 = vlaneseq
        %v3018 = vshrl.u32 %v3017, 7
        %v3019 = vsub.s32 %v3016, %v3018
        %v3020 = vrot.slane %v3012, %v3019
        %v3022 = vunpack.c.l.s4 1934713408
        %v3023 = vunpack.c.0.s8 %v3022
        %v3024 = vlaneseq
        %v3025 = vshrl.u32 %v3024, 7
        %v3026 = vsub.s32 %v3023, %v3025
        %v3027 = vrot.slane %v3013, %v3026
        %v3028 = vcombine.high %v3004, 0.0
        %v3029 = vcombine.high %v3011, 0.0
        %v3030 = vcombine.high %v3020, 0.0
        %v3031 = vcombine.high %v3027, 0.0
        %v3032 = vcombine.low %v3004, %v3011
        %v3034 = vunpack.c.l.s4 1983009808
        %v3035 = vunpack.c.0.s8 %v3034
        %v3036 = vlaneseq
        %v3037 = vshrl.u32 %v3036, 7
        %v3038 = vsub.s32 %v3035, %v3037
        %v3039 = vrot.slane %v3032, %v3038
        %v3040 = vcombine.low %v3028, %v3029
        %v3042 = vunpack.c.l.s4 1983009808
        %v3043 = vunpack.c.0.s8 %v3042
        %v3044 = vlaneseq
        %v3045 = vshrl.u32 %v3044, 7
        %v3046 = vsub.s32 %v3043, %v3045
        %v3047 = vrot.slane %v3040, %v3046
        %v3048 = vcombine.low %v3020, %v3027
        %v3050 = vunpack.c.l.s4 1983009808
        %v3051 = vunpack.c.0.s8 %v3050
        %v3052 = vlaneseq
        %v3053 = vshrl.u32 %v3052, 7
        %v3054 = vsub.s32 %v3051, %v3053
        %v3055 = vrot.slane %v3048, %v3054
        %v3056 = vcombine.low %v3030, %v3031
        %v3058 = vunpack.c.l.s4 1983009808
        %v3059 = vunpack.c.0.s8 %v3058
        %v3060 = vlaneseq
        %v3061 = vshrl.u32 %v3060, 7
        %v3062 = vsub.s32 %v3059, %v3061
        %v3063 = vrot.slane %v3056, %v3062
        %v3064 = vcombine.low %v3039, %v3047
        %v3065 = vcombine.high %v3039, %v3047
        %v3067 = vunpack.c.l.s4 1934713408
        %v3068 = vunpack.c.0.s8 %v3067
        %v3069 = vlaneseq
        %v3070 = vshrl.u32 %v3069, 7
        %v3071 = vsub.s32 %v3068, %v3070
        %v3072 = vrot.slane %v3064, %v3071
        %v3074 = vunpack.c.l.s4 1934713408
        %v3075 = vunpack.c.0.s8 %v3074
        %v3076 = vlaneseq
        %v3077 = vshrl.u32 %v3076, 7
        %v3078 = vsub.s32 %v3075, %v3077
        %v3079 = vrot.slane %v3065, %v3078
        %v3080 = vcombine.low %v3055, %v3063
        %v3081 = vcombine.high %v3055, %v3063
        %v3083 = vunpack.c.l.s4 1934713408
        %v3084 = vunpack.c.0.s8 %v3083
        %v3085 = vlaneseq
        %v3086 = vshrl.u32 %v3085, 7
        %v3087 = vsub.s32 %v3084, %v3086
        %v3088 = vrot.slane %v3080, %v3087
        %v3090 = vunpack.c.l.s4 1934713408
        %v3091 = vunpack.c.0.s8 %v3090
        %v3092 = vlaneseq
        %v3093 = vshrl.u32 %v3092, 7
        %v3094 = vsub.s32 %v3091, %v3093
        %v3095 = vrot.slane %v3081, %v3094
        %v3096 = vcombine.low %v3072, %v3088
        %v3097 = vcombine.high %v3072, %v3088
        %v3098 = vcombine.low %v3079, %v3095
        %v3099 = vcombine.high %v3079, %v3095
        %3101 = vrot.lane.b32.xlu0 %v3097, 8
        %v3102 = vpop.permute.xlu0 %3101
        %3105 = vrot.lane.b32.xlu0 %v3098, 16
        %v3106 = vpop.permute.xlu0 %3105
        %3109 = vrot.lane.b32.xlu0 %v3099, 24
        %v3110 = vpop.permute.xlu0 %3109
        %v3112 = vsel %vm1167, %v3096, %v3102
        %v3113 = vsel %vm1734, %v3112, %v3106
        %v3114 = vsel %vm1736, %v3113, %v3110
        %s3115 = scalar_lea.vmem %s6, 16
        %v3116 = vld [vmem:[%s3115] sm:$0xf]
        %v3117 = vld [vmem:[%s3115 + $0x4] sm:$0xf]
        %v3118 = vld [vmem:[%s3115 + $0x8] sm:$0xf]
        %v3119 = vld [vmem:[%s3115 + $0xc] sm:$0xf]
        %v3120 = vpack.c.bf16 %v3114, %v3114
        %s3121 = scalar_lea.vmem %s7, 1
        %v3122 = vld [vmem:[%s3121] sm:$0x1]
        %v3124 = vlaneseq
        %v3125 = vshrl.u32 %v3124, 7
        %v3126 = vsub.s32 0, %v3125
        %v3127 = vrot.slane %v3122, %v3126
        %v3133 = vunpack.c.l.b16 %v3116
        %v3134 = vunpack.c.l.b16 %v3117
        %v3135 = vunpack.c.l.b16 %v3118
        %v3136 = vunpack.c.l.b16 %v3119
        %v3137 = vpack.c.b16 %v3134, %v3133
        %v3138 = vpack.c.b16 %v3136, %v3135
        %v3142 = vsel %vm591, %v3120, 0
        %3144 = vmatprep.subr.bf16.mxu0 0
        %3145 = vmatpush1.bf16.msra.mxu0 %v3137
        %3146 = vmatprep.subr.bf16.mxu0 0
        %3147 = vmatpush1.bf16.msra.mxu0 %v3138
        %3148 = vmatprep.subr.bf16.mxu0 0
        %3149 = vmatpush1.bf16.msra.mxu0 0
        %3150 = vmatprep.subr.bf16.mxu0 0
        %3151 = vmatpush1.bf16.msra.mxu0 0
        %3152 = vmatprep.subr.bf16.mxu0 0
        %3153 = vmatpush1.bf16.msra.mxu0 0
        %3154 = vmatprep.subr.bf16.mxu0 0
        %3155 = vmatpush1.bf16.msra.mxu0 0
        %3156 = vmatprep.subr.bf16.mxu0 0
        %3157 = vmatpush1.bf16.msra.mxu0 0
        %3158 = vmatprep.subr.bf16.mxu0 0
        %3159 = vmatpush1.bf16.msra.mxu0 0
        %3160 = vmatprep.subr.bf16.mxu0 0
        %3161 = vmatpush1.bf16.msra.mxu0 0
        %3162 = vmatprep.subr.bf16.mxu0 0
        %3163 = vmatpush1.bf16.msra.mxu0 0
        %3164 = vmatprep.subr.bf16.mxu0 0
        %3165 = vmatpush1.bf16.msra.mxu0 0
        %3166 = vmatprep.subr.bf16.mxu0 0
        %3167 = vmatpush1.bf16.msra.mxu0 0
        %3168 = vmatprep.subr.bf16.mxu0 0
        %3169 = vmatpush1.bf16.msra.mxu0 0
        %3170 = vmatprep.subr.bf16.mxu0 0
        %3171 = vmatpush1.bf16.msra.mxu0 0
        %3172 = vmatprep.subr.bf16.mxu0 0
        %3173 = vmatpush1.bf16.msra.mxu0 0
        %3174 = vmatprep.subr.bf16.mxu0 0
        %3175 = vmatpush1.bf16.msra.mxu0 0
        %3176 = vmatprep.mubr.bf16.mxu0 0
        %3177 = vmatmul.mubr.bf16.gmra.mrb[0].mxu0 %v3142
        %v3178 = vpop.f32.mrb[0].mxu0
        %v3179 = vadd.f32 %v3127, %v3178
        %v3180 = vpop.f32.mrb[0].mxu0
        %v3181 = vpop.f32.mrb[0].mxu0
        %v3182 = vpop.f32.mrb[0].mxu0
        %3183 = vdwg.mxu0
        %v3184 = vadd.f32 %v3179, %v2024
        %s3185 = scalar_lea.vmem %s8, 1
        %v3186 = vld [vmem:[%s3185] sm:$0x1]
        %s3187 = scalar_lea.vmem %s9, 1
        %v3188 = vld [vmem:[%s3187] sm:$0x1]
        %v3189 = vsel %vm591, %v3184, 0.0
        %3190 = vadd.xlane.f32.xlu0 %v3189
        %v3191 = vpop.xlane.xlu0 %3190
        %v3192 = vmul.f32 %v3191, %v595
        %v3193 = vsub.f32 %v3184, %v3192
        %v3194 = vmul.f32 %v3193, %v3193
        %v3195 = vsel %vm591, %v3194, 0.0
        %3196 = vadd.xlane.f32.xlu0 %v3195
        %v3197 = vpop.xlane.xlu0 %3196
        %v3198 = vmul.f32 %v3197, %v595
        %v3199 = vadd.f32 %v3198, 1e-12
        %v3200 = vrsqrt.pop %v3199
        %v3201 = vmul.f32 %v3193, %v3200
        %v3203 = vlaneseq
        %v3204 = vshrl.u32 %v3203, 7
        %v3205 = vsub.s32 0, %v3204
        %v3206 = vrot.slane %v3186, %v3205
        %v3208 = vmul.f32 %v3201, %v3206
        %v3210 = vlaneseq
        %v3211 = vshrl.u32 %v3210, 7
        %v3212 = vsub.s32 0, %v3211
        %v3213 = vrot.slane %v3188, %v3212
        %v3215 = vadd.f32 %v3208, %v3213
        %s3216 = scalar_lea.vmem %s10, 16
        %v3217 = vld [vmem:[%s3216] sm:$0xf]
        %v3218 = vld [vmem:[%s3216 + $0x4] sm:$0xf]
        %v3219 = vld [vmem:[%s3216 + $0x8] sm:$0xf]
        %v3220 = vld [vmem:[%s3216 + $0xc] sm:$0xf]
        %v3221 = vpack.c.bf16 %v3215, %v3215
        %s3222 = scalar_lea.vmem %s11, 1
        %v3223 = vld [vmem:[%s3222] sm:$0x1]
        %v3225 = vlaneseq
        %v3226 = vshrl.u32 %v3225, 7
        %v3227 = vsub.s32 0, %v3226
        %v3228 = vrot.slane %v3223, %v3227
        %v3234 = vunpack.c.l.b16 %v3217
        %v3235 = vunpack.c.l.b16 %v3218
        %v3236 = vunpack.c.l.b16 %v3219
        %v3237 = vunpack.c.l.b16 %v3220
        %v3238 = vpack.c.b16 %v3235, %v3234
        %v3239 = vpack.c.b16 %v3237, %v3236
        %v3243 = vsel %vm591, %v3221, 0
        %3245 = vmatprep.subr.bf16.mxu0 0
        %3246 = vmatpush1.bf16.msra.mxu0 %v3238
        %3247 = vmatprep.subr.bf16.mxu0 0
        %3248 = vmatpush1.bf16.msra.mxu0 %v3239
        %3249 = vmatprep.subr.bf16.mxu0 0
        %3250 = vmatpush1.bf16.msra.mxu0 0
        %3251 = vmatprep.subr.bf16.mxu0 0
        %3252 = vmatpush1.bf16.msra.mxu0 0
        %3253 = vmatprep.subr.bf16.mxu0 0
        %3254 = vmatpush1.bf16.msra.mxu0 0
        %3255 = vmatprep.subr.bf16.mxu0 0
        %3256 = vmatpush1.bf16.msra.mxu0 0
        %3257 = vmatprep.subr.bf16.mxu0 0
        %3258 = vmatpush1.bf16.msra.mxu0 0
        %3259 = vmatprep.subr.bf16.mxu0 0
        %3260 = vmatpush1.bf16.msra.mxu0 0
        %3261 = vmatprep.subr.bf16.mxu0 0
        %3262 = vmatpush1.bf16.msra.mxu0 0
        %3263 = vmatprep.subr.bf16.mxu0 0
        %3264 = vmatpush1.bf16.msra.mxu0 0
        %3265 = vmatprep.subr.bf16.mxu0 0
        %3266 = vmatpush1.bf16.msra.mxu0 0
        %3267 = vmatprep.subr.bf16.mxu0 0
        %3268 = vmatpush1.bf16.msra.mxu0 0
        %3269 = vmatprep.subr.bf16.mxu0 0
        %3270 = vmatpush1.bf16.msra.mxu0 0
        %3271 = vmatprep.subr.bf16.mxu0 0
        %3272 = vmatpush1.bf16.msra.mxu0 0
        %3273 = vmatprep.subr.bf16.mxu0 0
        %3274 = vmatpush1.bf16.msra.mxu0 0
        %3275 = vmatprep.subr.bf16.mxu0 0
        %3276 = vmatpush1.bf16.msra.mxu0 0
        %3277 = vmatprep.mubr.bf16.mxu0 0
        %3278 = vmatmul.mubr.bf16.gmra.mrb[0].mxu0 %v3243
        %v3279 = vpop.f32.mrb[0].mxu0
        %v3280 = vadd.f32 %v3228, %v3279
        %v3281 = vpop.f32.mrb[0].mxu0
        %v3282 = vpop.f32.mrb[0].mxu0
        %v3283 = vpop.f32.mrb[0].mxu0
        %3284 = vdwg.mxu0
        %v3285 = vmul.f32 %v3280, %v3280
        %v3286 = vmul.f32 %v3280, %v3285
        %v3287 = vmul.f32 %v3286, 0.044715
        %v3288 = vadd.f32 %v3280, %v3287
        %v3289 = vmul.f32 %v3288, 0.7978846
        %v3290 = vtanh.pop %v3289
        %v3291 = vadd.f32 %v3290, 1.0
        %v3292 = vmul.f32 %v3291, 0.5
        %v3293 = vmul.f32 %v3280, %v3292
        %s3294 = scalar_lea.vmem %s12, 32
        %v3295 = vld [vmem:[%s3294] sm:$0xf]
        %v3296 = vld [vmem:[%s3294 + $0x4] sm:$0xf]
        %v3297 = vld [vmem:[%s3294 + $0x8] sm:$0xf]
        %v3298 = vld [vmem:[%s3294 + $0xc] sm:$0xf]
        %v3299 = vld [vmem:[%s3294 + $0x10] sm:$0xf]
        %v3300 = vld [vmem:[%s3294 + $0x14] sm:$0xf]
        %v3301 = vld [vmem:[%s3294 + $0x18] sm:$0xf]
        %v3302 = vld [vmem:[%s3294 + $0x1c] sm:$0xf]
        %v3303 = vpack.c.bf16 %v3293, %v3293
        %s3304 = scalar_lea.vmem %s13, 1
        %v3305 = vld [vmem:[%s3304] sm:$0x1]
        %v3307 = vlaneseq
        %v3308 = vshrl.u32 %v3307, 7
        %v3309 = vsub.s32 0, %v3308
        %v3310 = vrot.slane %v3305, %v3309
        %v3320 = vunpack.c.l.b16 %v3295
        %v3321 = vunpack.c.l.b16 %v3296
        %v3322 = vunpack.c.l.b16 %v3297
        %v3323 = vunpack.c.l.b16 %v3298
        %v3324 = vunpack.c.l.b16 %v3299
        %v3325 = vunpack.c.l.b16 %v3300
        %v3326 = vunpack.c.l.b16 %v3301
        %v3327 = vunpack.c.l.b16 %v3302
        %v3328 = vpack.c.b16 %v3321, %v3320
        %v3329 = vpack.c.b16 %v3323, %v3322
        %v3330 = vpack.c.b16 %v3325, %v3324
        %v3331 = vpack.c.b16 %v3327, %v3326
        %v3337 = vsel %vm1951, %v3303, 0
        %3339 = vmatprep.subr.bf16.mxu0 0
        %3340 = vmatpush1.bf16.msra.mxu0 %v3328
        %3341 = vmatprep.subr.bf16.mxu0 0
        %3342 = vmatpush1.bf16.msra.mxu0 %v3329
        %3343 = vmatprep.subr.bf16.mxu0 0
        %3344 = vmatpush1.bf16.msra.mxu0 %v3330
        %3345 = vmatprep.subr.bf16.mxu0 0
        %3346 = vmatpush1.bf16.msra.mxu0 %v3331
        %3347 = vmatprep.subr.bf16.mxu0 0
        %3348 = vmatpush1.bf16.msra.mxu0 0
        %3349 = vmatprep.subr.bf16.mxu0 0
        %3350 = vmatpush1.bf16.msra.mxu0 0
        %3351 = vmatprep.subr.bf16.mxu0 0
        %3352 = vmatpush1.bf16.msra.mxu0 0
        %3353 = vmatprep.subr.bf16.mxu0 0
        %3354 = vmatpush1.bf16.msra.mxu0 0
        %3355 = vmatprep.subr.bf16.mxu0 0
        %3356 = vmatpush1.bf16.msra.mxu0 0
        %3357 = vmatprep.subr.bf16.mxu0 0
        %3358 = vmatpush1.bf16.msra.mxu0 0
        %3359 = vmatprep.subr.bf16.mxu0 0
        %3360 = vmatpush1.bf16.msra.mxu0 0
        %3361 = vmatprep.subr.bf16.mxu0 0
        %3362 = vmatpush1.bf16.msra.mxu0 0
        %3363 = vmatprep.subr.bf16.mxu0 0
        %3364 = vmatpush1.bf16.msra.mxu0 0
        %3365 = vmatprep.subr.bf16.mxu0 0
        %3366 = vmatpush1.bf16.msra.mxu0 0
        %3367 = vmatprep.subr.bf16.mxu0 0
        %3368 = vmatpush1.bf16.msra.mxu0 0
        %3369 = vmatprep.subr.bf16.mxu0 0
        %3370 = vmatpush1.bf16.msra.mxu0 0
        %3371 = vmatprep.mubr.bf16.mxu0 0
        %3372 = vmatmul.mubr.bf16.gmra.mrb[0].mxu0 %v3337
        %v3373 = vpop.f32.mrb[0].mxu0
        %v3374 = vadd.f32 %v3310, %v3373
        %v3375 = vpop.f32.mrb[0].mxu0
        %v3376 = vpop.f32.mrb[0].mxu0
        %v3377 = vpop.f32.mrb[0].mxu0
        %3378 = vdwg.mxu0
        %v3379 = vadd.f32 %v3374, %v3215
        %s3380 = scalar_lea.vmem %s14, 1
        %v3381 = vld [vmem:[%s3380] sm:$0x1]
        %s3382 = scalar_lea.vmem %s15, 1
        %v3383 = vld [vmem:[%s3382] sm:$0x1]
        %v3384 = vsel %vm591, %v3379, 0.0
        %3385 = vadd.xlane.f32.xlu0 %v3384
        %v3386 = vpop.xlane.xlu0 %3385
        %v3387 = vmul.f32 %v3386, %v595
        %v3388 = vsub.f32 %v3379, %v3387
        %v3389 = vmul.f32 %v3388, %v3388
        %v3390 = vsel %vm591, %v3389, 0.0
        %3391 = vadd.xlane.f32.xlu0 %v3390
        %v3392 = vpop.xlane.xlu0 %3391
        %v3393 = vmul.f32 %v3392, %v595
        %v3394 = vadd.f32 %v3393, 1e-12
        %v3395 = vrsqrt.pop %v3394
        %v3396 = vmul.f32 %v3388, %v3395
        %v3398 = vlaneseq
        %v3399 = vshrl.u32 %v3398, 7
        %v3400 = vsub.s32 0, %v3399
        %v3401 = vrot.slane %v3381, %v3400
        %v3403 = vmul.f32 %v3396, %v3401
        %v3405 = vlaneseq
        %v3406 = vshrl.u32 %v3405, 7
        %v3407 = vsub.s32 0, %v3406
        %v3408 = vrot.slane %v3383, %v3407
        %v3410 = vadd.f32 %v3403, %v3408
        %vm3411 = vcmask 253952
        %3412 = vst.msk [vmem:[%s578] sm:$0x1] %vm3411, %v3410
        %s3413 = sand.u32 %s428, 1
        %s3414 = scalar_lea.sflag [#allocation3], %s3413
        %s3415 = sand.u32 %s428, 1
        %s3416 = scalar_lea.vmem [#allocation2], %s3415
        // Predicated region
        $region93: #{simcse_forward.1} parent=91 // pred_check
          %p3417 = pneg %p438
        $region94: #{simcse_forward.1} parent=91 // pred_check_branch
          %3419 = sbr.rel (%p3417) target = $region96
        $region95: #{simcse_forward.1} parent=91 // pred_region
          %s3421 = ssub.s32 16, 16
          %3422 = vsyncadd %s3414, %s3421
          %s3423 = smul.addr %s32, 16
          %s3424 = scalar_lea.hbm %s18, %s3423
          %s3426 = sshll.u32 %s3416, 4
          %s3427 = int_to_ptr.vmem [resolvable:$true] %s3426
          %3429 = dma.vmem_to_hbm [thread:$0]  %s3427, 16, %s3424, %s3414
        $region96: #{simcse_forward.1} parent=91 // pred_fallthru
          _
      $region92: #{simcse_forward.1} parent=5 // pred_fallthru
        _
      %p3430 = scmp.le.s32.totalorder 2, %s27
      // Predicated region
      $region97: #{simcse_forward.1} parent=5 // pred_check
        %p3431 = pneg %p3430
      $region98: #{simcse_forward.1} parent=5 // pred_check_branch
        %3433 = sbr.rel (%p3431) target = $region100
      $region99: #{simcse_forward.1} parent=5 // pred_region
        %s3434 = ssub.s32 %s27, 2
        // Predicated region
        $region101: #{simcse_forward.1} parent=99 // pred_check
          %p3435 = pneg %p444
        $region102: #{simcse_forward.1} parent=99 // pred_check_branch
          %3437 = sbr.rel (%p3435) target = $region104
        $region103: #{simcse_forward.1} parent=99 // pred_region
          %s3438 = sand.u32 %s429, 1
          %s3439 = scalar_lea.sflag [#allocation3], %s3438
          %s3440 = sand.u32 %s429, 1
          %s3441 = scalar_lea.vmem [#allocation2], %s3440
          %3442 = dma.done %s3439, 16
        $region104: #{simcse_forward.1} parent=99 // pred_fallthru
          _
      $region100: #{simcse_forward.1} parent=5 // pred_fallthru
        _
    $region6: #{simcse_forward.1} parent=1 // loop_footer
      %s31 = sadd.s32 1, %s27
    $region7: #{simcse_forward.1} parent=1 // loop_footer_branch
      %26 = sbr.rel target = $region3
    $region8: #{simcse_forward.1} parent=1 // loop_exit
      _
    %3443 = vsyncpa [#allocation3], 1
    %s3444 = scalar_lea.sflag [#allocation3], 1
    %3445 = vsyncpa %s3444, 1

</llo_original>
